<compile_context>
chip_gen: v5e
topology: v5e:2x2
jax: 0.10.0
libtpu: 0.0.40
codegen_flags: <defaults>
</compile_context>

<pallas_src>
import numpy as np
import jax
import jax.numpy as jnp
from jax import lax
from jax.experimental import pallas as pl
from jax.experimental.pallas import tpu as pltpu


_LANE = 128  # TPU lane width; channel dims are padded to a multiple of this.


def _round_up(x, m):
    return (x + m - 1) // m * m


def _pick_strip_height(H, strip_h):
    """Largest strip height <= strip_h that divides H (keeps the grid exact)."""
    if strip_h is None:
        strip_h = 16
    strip_h = max(1, min(strip_h, H))
    while H % strip_h:
        strip_h -= 1
    return strip_h


def _default_vmem_limit():
    try:
        cap = int(pltpu.get_tpu_info().vmem_capacity_bytes)
    except Exception:
        cap = 64 * 1024 * 1024  # conservative (v7x physical VMEM)
    return max(32 * 1024 * 1024, min(96 * 1024 * 1024, (cap * 3) // 4))


def basic_block_pallas(x_nhwc, params, *, eps=1e-5, compute_dtype=jnp.float32,
                       strip_h=None, vmem_limit_bytes=None):
    """DarkNet BasicBlock forward (inference-mode BN), NHWC.

    x_nhwc: (N, H, W, Cin).  Returns (N, H, W, Cp2) with Cp2 = round_up(Cin, 128):
    the channel axis stays lane-padded so the next block consumes it directly.
    compute_dtype=jnp.bfloat16 halves activation/weight HBM bytes and feeds bf16
    MXU operands (f32 accumulation) -- recommended on v5e, v6e and v7x.
    W should preferably be a multiple of 8 (sublane tiling); other W still work.
    """
    N, H, W, Cin = x_nhwc.shape
    w1 = params['w1']                       # (C1, Cin, 1, 1)  torch OIHW
    w2 = params['w2']                       # (C2, C1, 3, 3)   torch OIHW
    C1, C2 = w1.shape[0], w2.shape[0]
    assert w1.shape[1] == Cin and w2.shape[1] == C1
    assert C2 == Cin, "residual add requires planes[1] == inplanes"

    TH = _pick_strip_height(H, strip_h)
    n_strips = H // TH

    # ---- fold BatchNorm (running stats) into per-channel scale/bias; fold the
    # scale into the conv weights so only a bias add remains in-kernel. ----
    s1 = params['g1'] / jnp.sqrt(params['v1'] + eps)            # (C1,)
    b1 = params['be1'] - params['m1'] * s1
    s2 = params['g2'] / jnp.sqrt(params['v2'] + eps)            # (C2,)
    b2 = params['be2'] - params['m2'] * s2

    w1_k = jnp.transpose(w1[:, :, 0, 0], (1, 0)) * s1[None, :]               # (Cin, C1)
    w2_k = jnp.transpose(w2, (2, 3, 1, 0)) * s2[None, None, None, :]         # (ky,kx,Ci,Co)

    # ---- lane-dense channel padding ----
    Cpi = _round_up(Cin, _LANE)
    Cp1 = _round_up(C1, _LANE)
    Cp2 = _round_up(C2, _LANE)

    # One fused pad: +1 halo row top/bottom (for the 3x3 conv's H padding) and
    # channel lane-padding.  TODO(synk): a fused producer could emit x already
    # H-padded to avoid this extra HBM pass.
    x_p = jnp.pad(x_nhwc, ((0, 0), (1, 1), (0, 0), (0, Cpi - Cin))).astype(compute_dtype)
    w1_p = jnp.pad(w1_k, ((0, Cpi - Cin), (0, Cp1 - C1))).astype(compute_dtype)
    w2_p = jnp.pad(w2_k, ((0, 0), (0, 0), (0, Cp1 - C1), (0, Cp2 - C2)))
    w2_p = w2_p.reshape(3, 3 * Cp1, Cp2).astype(compute_dtype)  # per-dy K = (dx, ci)
    b1_p = jnp.pad(b1, (0, Cp1 - C1)).astype(jnp.float32).reshape(1, Cp1)
    b2_p = jnp.pad(b2, (0, Cp2 - C2)).astype(jnp.float32).reshape(1, Cp2)

    M_in = (TH + 2) * W      # conv1 rows (strip + 1-row halo on each side)
    M_out = TH * W           # conv2 / output rows

    def kernel(x_hbm, w1_ref, b1_ref, w2_ref, b2_ref, o_ref, x_buf, dma_sem):
        n = pl.program_id(0)
        s = pl.program_id(1)
        row0 = s * TH                      # strip's first row in the H-padded input
        if TH % 8 == 0:
            row0 = pl.multiple_of(row0, 8)

        # --- halo DMA: TH+2 rows of the H-padded input for this strip ---
        cp = pltpu.make_async_copy(x_hbm.at[n, pl.ds(row0, TH + 2)], x_buf, dma_sem)
        cp.start()
        cp.wait()

        x2 = x_buf[...].reshape(M_in, Cpi)                       # (M_in, Cpi)

        # --- conv1 (1x1) + folded BN1 bias + LeakyReLU(0.1), f32 accumulate ---
        h1 = jnp.dot(x2, w1_ref[...], preferred_element_type=jnp.float32)
        h1 = h1 + b1_ref[...]
        h1 = jnp.where(h1 > 0, h1, 0.1 * h1)

        # conv2's padding=1 needs ZERO h1 rows outside the image; the boundary
        # halo rows were conv1-of-zero-x (nonzero after bias+LeakyReLU), so mask
        # them back to zero.  Masks come from iotas -> VPU selects only.
        grow = lax.broadcasted_iota(jnp.int32, (TH + 2, W, 1), 0).reshape(M_in, 1)
        grow = grow + (row0 - 1)                                  # global h1 row id
        col = lax.broadcasted_iota(jnp.int32, (TH + 2, W, 1), 1).reshape(M_in, 1)
        h1 = jnp.where((grow >= 0) & (grow < H), h1, 0.0)

        # dx = -1 / 0 / +1 shifts via XLU rolls + edge masks (no W+2 pad, no
        # sublane-misaligned slices).  The row-crossing wrap values of the 2-D
        # roll land exactly on the masked columns, so they never leak.
        h_xm1 = jnp.where(col > 0, pltpu.roll(h1, 1, 0), 0.0)            # h1[y, x-1]
        h_xp1 = jnp.where(col < W - 1, pltpu.roll(h1, M_in - 1, 0), 0.0)  # h1[y, x+1]

        h1c = h1.astype(compute_dtype)
        h_xm1 = h_xm1.astype(compute_dtype)
        h_xp1 = h_xp1.astype(compute_dtype)

        # --- conv2 (3x3): lane-axis concat over dx (K = 3*Cp1), 3 MXU matmuls
        # accumulated over dy; no 9x im2col intermediate. ---
        hcat = jnp.concatenate([h_xm1, h1c, h_xp1], axis=-1)     # (M_in, 3*Cp1)
        acc = None
        for dy in range(3):                                      # static unroll
            a = hcat[dy * W:dy * W + M_out]                      # rows j+dy, 8-aligned
            d = jnp.dot(a, w2_ref[dy], preferred_element_type=jnp.float32)
            acc = d if acc is None else acc + d

        out = acc + b2_ref[...]
        out = jnp.where(out > 0, out, 0.1 * out)

        # --- residual add (interior rows of the halo buffer) and store ---
        out = out + x2[W:W + M_out].astype(jnp.float32)
        o_ref[0] = out.reshape(TH, W, Cp2).astype(o_ref.dtype)

    if vmem_limit_bytes is None:
        vmem_limit_bytes = _default_vmem_limit()

    out_shape = jax.ShapeDtypeStruct((N, H, W, Cp2), compute_dtype)

    def build_and_call(weight_mode):
        def wspec(shape):
            return pl.BlockSpec(shape, lambda n, s: (0,) * len(shape),
                                pipeline_mode=weight_mode)

        grid_spec = pltpu.PrefetchScalarGridSpec(
            num_scalar_prefetch=0,
            grid=(N, n_strips),
            in_specs=[
                pl.BlockSpec(memory_space=pl.ANY),       # x (HBM; manual halo DMA)
                wspec((Cpi, Cp1)),                       # w1 (BN1 scale folded in)
                wspec((1, Cp1)),                         # folded BN1 bias
                wspec((3, 3 * Cp1, Cp2)),                # w2 (BN2 scale folded in)
                wspec((1, Cp2)),                         # folded BN2 bias
            ],
            out_specs=pl.BlockSpec((1, TH, W, Cp2), lambda n, s: (n, s, 0, 0)),
            scratch_shapes=[
                pltpu.VMEM((TH + 2, W, Cpi), compute_dtype),   # input strip + halo
                pltpu.SemaphoreType.DMA,
            ],
        )
        return pl.pallas_call(
            kernel,
            out_shape=out_shape,
            grid_spec=grid_spec,
            compiler_params=pltpu.CompilerParams(
                dimension_semantics=("parallel", "parallel"),
                vmem_limit_bytes=int(vmem_limit_bytes)),
        )(x_p, w1_p, b1_p, w2_p, b2_p)

    try:
        # Weights never change across the grid: single-buffer them to halve
        # their resident VMEM (largest payoff on v7x's 64 MiB VMEM).
        return build_and_call(pl.Buffered(1))
    except Exception:
        # TODO(synk): some JAX versions reject single-buffered blocks; fall back
        #             to default double buffering.
        return build_and_call(None)


def basic_block_reference(x_nhwc, params, eps=1e-5):
    """Pure-JAX NHWC reference (inference-mode BN), for verification."""
    def bn(y, g, b, m, v):
        inv = 1.0 / jnp.sqrt(v + eps)
        return (y - m) * inv * g + b

    def leaky(y):
        return jnp.where(y > 0, y, 0.1 * y)

    w1 = jnp.transpose(params['w1'], (2, 3, 1, 0))   # OIHW -> HWIO
    w2 = jnp.transpose(params['w2'], (2, 3, 1, 0))

    out = lax.conv_general_dilated(
        x_nhwc, w1, window_strides=(1, 1), padding='VALID',
        dimension_numbers=('NHWC', 'HWIO', 'NHWC'))
    out = leaky(bn(out, params['g1'], params['be1'], params['m1'], params['v1']))
    out = lax.conv_general_dilated(
        out, w2, window_strides=(1, 1), padding=((1, 1), (1, 1)),
        dimension_numbers=('NHWC', 'HWIO', 'NHWC'))
    out = leaky(bn(out, params['g2'], params['be2'], params['m2'], params['v2']))
    return out + x_nhwc


def make_params(key, inplanes, planes):
    c1, c2 = planes
    ks = jax.random.split(key, 10)
    return {
        'w1': 0.1 * jax.random.normal(ks[0], (c1, inplanes, 1, 1), jnp.float32),
        'g1': jax.random.uniform(ks[1], (c1,), jnp.float32, 0.5, 1.5),
        'be1': 0.1 * jax.random.normal(ks[2], (c1,), jnp.float32),
        'm1': 0.1 * jax.random.normal(ks[3], (c1,), jnp.float32),
        'v1': jax.random.uniform(ks[4], (c1,), jnp.float32, 0.5, 1.5),
        'w2': 0.1 * jax.random.normal(ks[5], (c2, c1, 3, 3), jnp.float32),
        'g2': jax.random.uniform(ks[6], (c2,), jnp.float32, 0.5, 1.5),
        'be2': 0.1 * jax.random.normal(ks[7], (c2,), jnp.float32),
        'm2': 0.1 * jax.random.normal(ks[8], (c2,), jnp.float32),
        'v2': jax.random.uniform(ks[9], (c2,), jnp.float32, 0.5, 1.5),
    }


if __name__ == "__main__":
    # DarkNet53 BasicBlock: planes = (inplanes // 2, inplanes)
    N, Cin, H, W = 2, 8, 16, 16
    planes = (Cin // 2, Cin)

    key = jax.random.PRNGKey(0)
    kx, kp = jax.random.split(key)
    x = jax.random.normal(kx, (N, H, W, Cin), jnp.float32)   # NHWC
    params = make_params(kp, Cin, planes)

    ref = basic_block_reference(x, params)

    # f32 path with 8-row strips: exercises the halo handling across >1 strip.
    out_f32 = jax.block_until_ready(basic_block_pallas(x, params, strip_h=8))
    np.testing.assert_allclose(np.asarray(out_f32[..., :Cin]), np.asarray(ref),
                               rtol=1e-3, atol=1e-3)
    # Padded channels must stay exactly zero (lane-padded layout is returned).
    assert float(jnp.max(jnp.abs(out_f32[..., Cin:]))) == 0.0

    # bf16 compute path (f32 accumulation + f32 elementwise), default strip.
    out_bf16 = jax.block_until_ready(
        basic_block_pallas(x, params, compute_dtype=jnp.bfloat16))
    np.testing.assert_allclose(
        np.asarray(out_bf16[..., :Cin].astype(jnp.float32)),
        np.asarray(ref), rtol=5e-2, atol=5e-2)

    print("KERNEL_OK")
</pallas_src>

<mosaic_0001>
module attributes {stable_mosaic.version = 11 : i64} {
  func.func @kernel(%arg0: i32, %arg1: i32, %arg2: memref<2x18x16x128xf32, #tpu.memory_space<any>>, %arg3: memref<128x128xf32, #tpu.memory_space<vmem>>, %arg4: memref<1x128xf32, #tpu.memory_space<vmem>>, %arg5: memref<3x384x128xf32, #tpu.memory_space<vmem>>, %arg6: memref<1x128xf32, #tpu.memory_space<vmem>>, %arg7: memref<1x8x16x128xf32, #tpu.memory_space<vmem>>, %arg8: memref<10x16x128xf32, #tpu.memory_space<vmem>>, %arg9: memref<!tpu.dma_semaphore, #tpu.memory_space<semaphore_mem>>) attributes {dimension_semantics = [#tpu.dimension_semantics<parallel>, #tpu.dimension_semantics<parallel>], iteration_bounds = array<i64: 2, 2>, scalar_prefetch = 0 : i64, scratch_operands = 2 : i64, tpu.core_type = #tpu.core_type<tc>, window_params = [{}, {pipeline_mode = #tpu.pipeline_mode<synchronous>, transform_indices = @transform_1, window_bounds = array<i64: 128, 128>}, {pipeline_mode = #tpu.pipeline_mode<synchronous>, transform_indices = @transform_2, window_bounds = array<i64: 1, 128>}, {pipeline_mode = #tpu.pipeline_mode<synchronous>, transform_indices = @transform_3, window_bounds = array<i64: 3, 384, 128>}, {pipeline_mode = #tpu.pipeline_mode<synchronous>, transform_indices = @transform_4, window_bounds = array<i64: 1, 128>}, {transform_indices = @transform_5, window_bounds = array<i64: 1, 8, 16, 128>}]} {
    %c8_i32 = arith.constant 8 : i32
    %0 = arith.muli %arg1, %c8_i32 : i32
    %1 = tpu.assume_multiple %0, 8 : i32
    %c0_i32 = arith.constant 0 : i32
    %c0_i32_0 = arith.constant 0 : i32
    %2 = tpu.memref_slice %arg2[%arg0, %1, %c0_i32, %c0_i32_0] : memref<2x18x16x128xf32, #tpu.memory_space<any>> -> memref<1x10x16x128xf32, #tpu.memory_space<any>>
    %3 = tpu.memref_squeeze %2 : memref<1x10x16x128xf32, #tpu.memory_space<any>> -> memref<10x16x128xf32, #tpu.memory_space<any>>
    tpu.enqueue_dma source(%3 : memref<10x16x128xf32, #tpu.memory_space<any>>) target(%arg8 : memref<10x16x128xf32, #tpu.memory_space<vmem>>) target_semaphore(%arg9 : memref<!tpu.dma_semaphore, #tpu.memory_space<semaphore_mem>>)
    %c0_i32_1 = arith.constant 0 : i32
    %c0_i32_2 = arith.constant 0 : i32
    %4 = tpu.memref_slice %arg2[%arg0, %1, %c0_i32_1, %c0_i32_2] : memref<2x18x16x128xf32, #tpu.memory_space<any>> -> memref<1x10x16x128xf32, #tpu.memory_space<any>>
    %5 = tpu.memref_squeeze %4 : memref<1x10x16x128xf32, #tpu.memory_space<any>> -> memref<10x16x128xf32, #tpu.memory_space<any>>
    tpu.wait_dma2 semaphore(%arg9 : memref<!tpu.dma_semaphore, #tpu.memory_space<semaphore_mem>>) src(%5 : memref<10x16x128xf32, #tpu.memory_space<any>>) dst(%arg8 : memref<10x16x128xf32, #tpu.memory_space<vmem>>)
    %c0 = arith.constant 0 : index
    %c0_3 = arith.constant 0 : index
    %c0_4 = arith.constant 0 : index
    %6 = vector.load %arg8[%c0, %c0_3, %c0_4] : memref<10x16x128xf32, #tpu.memory_space<vmem>>, vector<10x16x128xf32>
    %7 = vector.shape_cast %6 : vector<10x16x128xf32> to vector<160x128xf32>
    %c0_5 = arith.constant 0 : index
    %c0_6 = arith.constant 0 : index
    %8 = vector.load %arg3[%c0_5, %c0_6] : memref<128x128xf32, #tpu.memory_space<vmem>>, vector<128x128xf32>
    %cst = arith.constant dense<0.000000e+00> : vector<160x128xf32>
    %9 = tpu.matmul %7, %8, %cst {dimension_numbers = #tpu.dot_dimension_numbers<[1], [0], [0], [1], [0, 0, 1, 1], [], []>} : vector<160x128xf32>, vector<128x128xf32>, vector<160x128xf32> -> vector<160x128xf32>
    %c0_7 = arith.constant 0 : index
    %c0_8 = arith.constant 0 : index
    %10 = vector.load %arg4[%c0_7, %c0_8] : memref<1x128xf32, #tpu.memory_space<vmem>>, vector<1x128xf32>
    %11 = vector.broadcast %10 : vector<1x128xf32> to vector<160x128xf32>
    %12 = arith.addf %9, %11 : vector<160x128xf32>
    %cst_9 = arith.constant 0.000000e+00 : f32
    %13 = vector.broadcast %cst_9 : f32 to vector<160x128xf32>
    %14 = arith.cmpf ogt, %12, %13 : vector<160x128xf32>
    %cst_10 = arith.constant 1.000000e-01 : f32
    %15 = vector.broadcast %cst_10 : f32 to vector<160x128xf32>
    %16 = arith.mulf %15, %12 : vector<160x128xf32>
    %17 = arith.select %14, %12, %16 : vector<160x128xi1>, vector<160x128xf32>
    %18 = tpu.iota {dimensions = array<i32: 0>} : vector<10x16x1xi32>
    %19 = vector.shape_cast %18 : vector<10x16x1xi32> to vector<160x1xi32>
    %c1_i32 = arith.constant 1 : i32
    %20 = arith.subi %1, %c1_i32 : i32
    %21 = vector.broadcast %20 : i32 to vector<160x1xi32>
    %22 = arith.addi %19, %21 : vector<160x1xi32>
    %23 = tpu.iota {dimensions = array<i32: 1>} : vector<10x16x1xi32>
    %24 = vector.shape_cast %23 : vector<10x16x1xi32> to vector<160x1xi32>
    %c0_i32_11 = arith.constant 0 : i32
    %25 = vector.broadcast %c0_i32_11 : i32 to vector<160x1xi32>
    %26 = arith.cmpi sge, %22, %25 : vector<160x1xi32>
    %c16_i32 = arith.constant 16 : i32
    %27 = vector.broadcast %c16_i32 : i32 to vector<160x1xi32>
    %28 = arith.cmpi slt, %22, %27 : vector<160x1xi32>
    %29 = arith.andi %26, %28 : vector<160x1xi1>
    %cst_12 = arith.constant 0.000000e+00 : f32
    %30 = vector.shape_cast %29 : vector<160x1xi1> to vector<160x1xi1>
    %31 = vector.broadcast %30 : vector<160x1xi1> to vector<160x128xi1>
    %32 = vector.broadcast %cst_12 : f32 to vector<160x128xf32>
    %33 = arith.select %31, %17, %32 : vector<160x128xi1>, vector<160x128xf32>
    %c0_i32_13 = arith.constant 0 : i32
    %34 = vector.broadcast %c0_i32_13 : i32 to vector<160x1xi32>
    %35 = arith.cmpi sgt, %24, %34 : vector<160x1xi32>
    %c1_i32_14 = arith.constant 1 : i32
    %36 = tpu.dynamic_rotate %33 by %c1_i32_14 dim 0 : vector<160x128xf32>, i32 -> vector<160x128xf32>
    %cst_15 = arith.constant 0.000000e+00 : f32
    %37 = vector.shape_cast %35 : vector<160x1xi1> to vector<160x1xi1>
    %38 = vector.broadcast %37 : vector<160x1xi1> to vector<160x128xi1>
    %39 = vector.broadcast %cst_15 : f32 to vector<160x128xf32>
    %40 = arith.select %38, %36, %39 : vector<160x128xi1>, vector<160x128xf32>
    %c15_i32 = arith.constant 15 : i32
    %41 = vector.broadcast %c15_i32 : i32 to vector<160x1xi32>
    %42 = arith.cmpi slt, %24, %41 : vector<160x1xi32>
    %c159_i32 = arith.constant 159 : i32
    %43 = tpu.dynamic_rotate %33 by %c159_i32 dim 0 : vector<160x128xf32>, i32 -> vector<160x128xf32>
    %cst_16 = arith.constant 0.000000e+00 : f32
    %44 = vector.shape_cast %42 : vector<160x1xi1> to vector<160x1xi1>
    %45 = vector.broadcast %44 : vector<160x1xi1> to vector<160x128xi1>
    %46 = vector.broadcast %cst_16 : f32 to vector<160x128xf32>
    %47 = arith.select %45, %43, %46 : vector<160x128xi1>, vector<160x128xf32>
    %48 = tpu.concatenate %40, %33, %47 in 1 : vector<160x128xf32>, vector<160x128xf32>, vector<160x128xf32> -> vector<160x384xf32>
    %49 = vector.extract_strided_slice %48 {offsets = [0, 0], sizes = [128, 384], strides = [1, 1]} : vector<160x384xf32> to vector<128x384xf32>
    %c0_17 = arith.constant 0 : index
    %c0_18 = arith.constant 0 : index
    %c0_19 = arith.constant 0 : index
    %50 = vector.load %arg5[%c0_17, %c0_18, %c0_19] : memref<3x384x128xf32, #tpu.memory_space<vmem>>, vector<1x384x128xf32>
    %51 = vector.shape_cast %50 : vector<1x384x128xf32> to vector<384x128xf32>
    %cst_20 = arith.constant dense<0.000000e+00> : vector<128x128xf32>
    %52 = tpu.matmul %49, %51, %cst_20 {dimension_numbers = #tpu.dot_dimension_numbers<[1], [0], [0], [1], [0, 0, 1, 1], [], []>} : vector<128x384xf32>, vector<384x128xf32>, vector<128x128xf32> -> vector<128x128xf32>
    %53 = vector.extract_strided_slice %48 {offsets = [16, 0], sizes = [128, 384], strides = [1, 1]} : vector<160x384xf32> to vector<128x384xf32>
    %c1 = arith.constant 1 : index
    %c0_21 = arith.constant 0 : index
    %c0_22 = arith.constant 0 : index
    %54 = vector.load %arg5[%c1, %c0_21, %c0_22] : memref<3x384x128xf32, #tpu.memory_space<vmem>>, vector<1x384x128xf32>
    %55 = vector.shape_cast %54 : vector<1x384x128xf32> to vector<384x128xf32>
    %cst_23 = arith.constant dense<0.000000e+00> : vector<128x128xf32>
    %56 = tpu.matmul %53, %55, %cst_23 {dimension_numbers = #tpu.dot_dimension_numbers<[1], [0], [0], [1], [0, 0, 1, 1], [], []>} : vector<128x384xf32>, vector<384x128xf32>, vector<128x128xf32> -> vector<128x128xf32>
    %57 = arith.addf %52, %56 : vector<128x128xf32>
    %58 = vector.extract_strided_slice %48 {offsets = [32, 0], sizes = [128, 384], strides = [1, 1]} : vector<160x384xf32> to vector<128x384xf32>
    %c2 = arith.constant 2 : index
    %c0_24 = arith.constant 0 : index
    %c0_25 = arith.constant 0 : index
    %59 = vector.load %arg5[%c2, %c0_24, %c0_25] : memref<3x384x128xf32, #tpu.memory_space<vmem>>, vector<1x384x128xf32>
    %60 = vector.shape_cast %59 : vector<1x384x128xf32> to vector<384x128xf32>
    %cst_26 = arith.constant dense<0.000000e+00> : vector<128x128xf32>
    %61 = tpu.matmul %58, %60, %cst_26 {dimension_numbers = #tpu.dot_dimension_numbers<[1], [0], [0], [1], [0, 0, 1, 1], [], []>} : vector<128x384xf32>, vector<384x128xf32>, vector<128x128xf32> -> vector<128x128xf32>
    %62 = arith.addf %57, %61 : vector<128x128xf32>
    %c0_27 = arith.constant 0 : index
    %c0_28 = arith.constant 0 : index
    %63 = vector.load %arg6[%c0_27, %c0_28] : memref<1x128xf32, #tpu.memory_space<vmem>>, vector<1x128xf32>
    %64 = vector.broadcast %63 : vector<1x128xf32> to vector<128x128xf32>
    %65 = arith.addf %62, %64 : vector<128x128xf32>
    %cst_29 = arith.constant 0.000000e+00 : f32
    %66 = vector.broadcast %cst_29 : f32 to vector<128x128xf32>
    %67 = arith.cmpf ogt, %65, %66 : vector<128x128xf32>
    %cst_30 = arith.constant 1.000000e-01 : f32
    %68 = vector.broadcast %cst_30 : f32 to vector<128x128xf32>
    %69 = arith.mulf %68, %65 : vector<128x128xf32>
    %70 = arith.select %67, %65, %69 : vector<128x128xi1>, vector<128x128xf32>
    %71 = vector.extract_strided_slice %7 {offsets = [16, 0], sizes = [128, 128], strides = [1, 1]} : vector<160x128xf32> to vector<128x128xf32>
    %72 = arith.addf %70, %71 : vector<128x128xf32>
    %73 = vector.shape_cast %72 : vector<128x128xf32> to vector<8x16x128xf32>
    %c0_31 = arith.constant 0 : index
    %c0_32 = arith.constant 0 : index
    %c0_33 = arith.constant 0 : index
    %c0_34 = arith.constant 0 : index
    %74 = vector.load %arg7[%c0_31, %c0_32, %c0_33, %c0_34] : memref<1x8x16x128xf32, #tpu.memory_space<vmem>>, vector<1x8x16x128xf32>
    %75 = vector.shape_cast %74 : vector<1x8x16x128xf32> to vector<8x16x128xf32>
    %76 = vector.shape_cast %73 : vector<8x16x128xf32> to vector<1x8x16x128xf32>
    tpu.vector_store %arg7[%c0_31, %c0_32, %c0_33, %c0_34], %76 {strides = array<i32>} : memref<1x8x16x128xf32, #tpu.memory_space<vmem>>, vector<1x8x16x128xf32>,
    return
  }
  func.func @transform_1(%arg0: i32, %arg1: i32) -> (i32, i32) {
    %c0_i32 = arith.constant 0 : i32
    %c0_i32_0 = arith.constant 0 : i32
    %c0_i32_1 = arith.constant 0 : i32
    return %c0_i32, %c0_i32_0 : i32, i32
  }
  func.func @transform_2(%arg0: i32, %arg1: i32) -> (i32, i32) {
    %c0_i32 = arith.constant 0 : i32
    %c0_i32_0 = arith.constant 0 : i32
    %c0_i32_1 = arith.constant 0 : i32
    return %c0_i32, %c0_i32_0 : i32, i32
  }
  func.func @transform_3(%arg0: i32, %arg1: i32) -> (i32, i32, i32) {
    %c0_i32 = arith.constant 0 : i32
    %c0_i32_0 = arith.constant 0 : i32
    %c0_i32_1 = arith.constant 0 : i32
    %c0_i32_2 = arith.constant 0 : i32
    return %c0_i32, %c0_i32_0, %c0_i32_1 : i32, i32, i32
  }
  func.func @transform_4(%arg0: i32, %arg1: i32) -> (i32, i32) {
    %c0_i32 = arith.constant 0 : i32
    %c0_i32_0 = arith.constant 0 : i32
    %c0_i32_1 = arith.constant 0 : i32
    return %c0_i32, %c0_i32_0 : i32, i32
  }
  func.func @transform_5(%arg0: i32, %arg1: i32) -> (i32, i32, i32, i32) {
    %c0_i32 = arith.constant 0 : i32
    %c0_i32_0 = arith.constant 0 : i32
    %c0_i32_1 = arith.constant 0 : i32
    return %arg0, %arg1, %c0_i32, %c0_i32_0 : i32, i32, i32, i32
  }
}

module attributes {stable_mosaic.version = 11 : i64} {
  func.func @kernel(%arg0: i32, %arg1: i32, %arg2: memref<2x18x16x128xf32, #tpu.memory_space<any>>, %arg3: memref<128x128xf32, #tpu.memory_space<vmem>>, %arg4: memref<1x128xf32, #tpu.memory_space<vmem>>, %arg5: memref<3x384x128xf32, #tpu.memory_space<vmem>>, %arg6: memref<1x128xf32, #tpu.memory_space<vmem>>, %arg7: memref<1x8x16x128xf32, #tpu.memory_space<vmem>>, %arg8: memref<10x16x128xf32, #tpu.memory_space<vmem>>, %arg9: memref<!tpu.dma_semaphore, #tpu.memory_space<semaphore_mem>>) attributes {dimension_semantics = [#tpu.dimension_semantics<parallel>, #tpu.dimension_semantics<parallel>], iteration_bounds = array<i64: 2, 2>, scalar_prefetch = 0 : i64, scratch_operands = 2 : i64, tpu.core_type = #tpu.core_type<tc>, window_params = [{}, {pipeline_mode = #tpu.pipeline_mode<synchronous>, transform_indices = @transform_1, window_bounds = array<i64: 128, 128>}, {pipeline_mode = #tpu.pipeline_mode<synchronous>, transform_indices = @transform_2, window_bounds = array<i64: 1, 128>}, {pipeline_mode = #tpu.pipeline_mode<synchronous>, transform_indices = @transform_3, window_bounds = array<i64: 3, 384, 128>}, {pipeline_mode = #tpu.pipeline_mode<synchronous>, transform_indices = @transform_4, window_bounds = array<i64: 1, 128>}, {transform_indices = @transform_5, window_bounds = array<i64: 1, 8, 16, 128>}]} {
    %c8_i32 = arith.constant 8 : i32
    %0 = arith.muli %arg1, %c8_i32 : i32
    %1 = tpu.assume_multiple %0, 8 : i32
    %c0_i32 = arith.constant 0 : i32
    %c0_i32_0 = arith.constant 0 : i32
    %2 = tpu.memref_slice %arg2[%arg0, %1, %c0_i32, %c0_i32_0] : memref<2x18x16x128xf32, #tpu.memory_space<any>> -> memref<1x10x16x128xf32, #tpu.memory_space<any>>
    %3 = tpu.memref_squeeze %2 : memref<1x10x16x128xf32, #tpu.memory_space<any>> -> memref<10x16x128xf32, #tpu.memory_space<any>>
    tpu.enqueue_dma source(%3 : memref<10x16x128xf32, #tpu.memory_space<any>>) target(%arg8 : memref<10x16x128xf32, #tpu.memory_space<vmem>>) target_semaphore(%arg9 : memref<!tpu.dma_semaphore, #tpu.memory_space<semaphore_mem>>)
    %c0_i32_1 = arith.constant 0 : i32
    %c0_i32_2 = arith.constant 0 : i32
    %4 = tpu.memref_slice %arg2[%arg0, %1, %c0_i32_1, %c0_i32_2] : memref<2x18x16x128xf32, #tpu.memory_space<any>> -> memref<1x10x16x128xf32, #tpu.memory_space<any>>
    %5 = tpu.memref_squeeze %4 : memref<1x10x16x128xf32, #tpu.memory_space<any>> -> memref<10x16x128xf32, #tpu.memory_space<any>>
    tpu.wait_dma2 semaphore(%arg9 : memref<!tpu.dma_semaphore, #tpu.memory_space<semaphore_mem>>) src(%5 : memref<10x16x128xf32, #tpu.memory_space<any>>) dst(%arg8 : memref<10x16x128xf32, #tpu.memory_space<vmem>>)
    %c0 = arith.constant 0 : index
    %c0_3 = arith.constant 0 : index
    %c0_4 = arith.constant 0 : index
    %6 = vector.load %arg8[%c0, %c0_3, %c0_4] : memref<10x16x128xf32, #tpu.memory_space<vmem>>, vector<10x16x128xf32>
    %7 = vector.shape_cast %6 : vector<10x16x128xf32> to vector<160x128xf32>
    %c0_5 = arith.constant 0 : index
    %c0_6 = arith.constant 0 : index
    %8 = vector.load %arg3[%c0_5, %c0_6] : memref<128x128xf32, #tpu.memory_space<vmem>>, vector<128x128xf32>
    %cst = arith.constant dense<0.000000e+00> : vector<160x128xf32>
    %9 = tpu.matmul %7, %8, %cst {dimension_numbers = #tpu.dot_dimension_numbers<[1], [0], [0], [1], [0, 0, 1, 1], [], []>} : vector<160x128xf32>, vector<128x128xf32>, vector<160x128xf32> -> vector<160x128xf32>
    %c0_7 = arith.constant 0 : index
    %c0_8 = arith.constant 0 : index
    %10 = vector.load %arg4[%c0_7, %c0_8] : memref<1x128xf32, #tpu.memory_space<vmem>>, vector<1x128xf32>
    %11 = vector.broadcast %10 : vector<1x128xf32> to vector<160x128xf32>
    %12 = arith.addf %9, %11 : vector<160x128xf32>
    %cst_9 = arith.constant 0.000000e+00 : f32
    %13 = vector.broadcast %cst_9 : f32 to vector<160x128xf32>
    %14 = arith.cmpf ogt, %12, %13 : vector<160x128xf32>
    %cst_10 = arith.constant 1.000000e-01 : f32
    %15 = vector.broadcast %cst_10 : f32 to vector<160x128xf32>
    %16 = arith.mulf %15, %12 : vector<160x128xf32>
    %17 = arith.select %14, %12, %16 : vector<160x128xi1>, vector<160x128xf32>
    %18 = tpu.iota {dimensions = array<i32: 0>} : vector<10x16x1xi32>
    %19 = vector.shape_cast %18 : vector<10x16x1xi32> to vector<160x1xi32>
    %c1_i32 = arith.constant 1 : i32
    %20 = arith.subi %1, %c1_i32 : i32
    %21 = vector.broadcast %20 : i32 to vector<160x1xi32>
    %22 = arith.addi %19, %21 : vector<160x1xi32>
    %23 = tpu.iota {dimensions = array<i32: 1>} : vector<10x16x1xi32>
    %24 = vector.shape_cast %23 : vector<10x16x1xi32> to vector<160x1xi32>
    %c0_i32_11 = arith.constant 0 : i32
    %25 = vector.broadcast %c0_i32_11 : i32 to vector<160x1xi32>
    %26 = arith.cmpi sge, %22, %25 : vector<160x1xi32>
    %c16_i32 = arith.constant 16 : i32
    %27 = vector.broadcast %c16_i32 : i32 to vector<160x1xi32>
    %28 = arith.cmpi slt, %22, %27 : vector<160x1xi32>
    %29 = arith.andi %26, %28 : vector<160x1xi1>
    %cst_12 = arith.constant 0.000000e+00 : f32
    %30 = vector.shape_cast %29 : vector<160x1xi1> to vector<160x1xi1>
    %31 = vector.broadcast %30 : vector<160x1xi1> to vector<160x128xi1>
    %32 = vector.broadcast %cst_12 : f32 to vector<160x128xf32>
    %33 = arith.select %31, %17, %32 : vector<160x128xi1>, vector<160x128xf32>
    %c0_i32_13 = arith.constant 0 : i32
    %34 = vector.broadcast %c0_i32_13 : i32 to vector<160x1xi32>
    %35 = arith.cmpi sgt, %24, %34 : vector<160x1xi32>
    %c1_i32_14 = arith.constant 1 : i32
    %36 = tpu.dynamic_rotate %33 by %c1_i32_14 dim 0 : vector<160x128xf32>, i32 -> vector<160x128xf32>
    %cst_15 = arith.constant 0.000000e+00 : f32
    %37 = vector.shape_cast %35 : vector<160x1xi1> to vector<160x1xi1>
    %38 = vector.broadcast %37 : vector<160x1xi1> to vector<160x128xi1>
    %39 = vector.broadcast %cst_15 : f32 to vector<160x128xf32>
    %40 = arith.select %38, %36, %39 : vector<160x128xi1>, vector<160x128xf32>
    %c15_i32 = arith.constant 15 : i32
    %41 = vector.broadcast %c15_i32 : i32 to vector<160x1xi32>
    %42 = arith.cmpi slt, %24, %41 : vector<160x1xi32>
    %c159_i32 = arith.constant 159 : i32
    %43 = tpu.dynamic_rotate %33 by %c159_i32 dim 0 : vector<160x128xf32>, i32 -> vector<160x128xf32>
    %cst_16 = arith.constant 0.000000e+00 : f32
    %44 = vector.shape_cast %42 : vector<160x1xi1> to vector<160x1xi1>
    %45 = vector.broadcast %44 : vector<160x1xi1> to vector<160x128xi1>
    %46 = vector.broadcast %cst_16 : f32 to vector<160x128xf32>
    %47 = arith.select %45, %43, %46 : vector<160x128xi1>, vector<160x128xf32>
    %48 = tpu.concatenate %40, %33, %47 in 1 : vector<160x128xf32>, vector<160x128xf32>, vector<160x128xf32> -> vector<160x384xf32>
    %49 = vector.extract_strided_slice %48 {offsets = [0, 0], sizes = [128, 384], strides = [1, 1]} : vector<160x384xf32> to vector<128x384xf32>
    %c0_17 = arith.constant 0 : index
    %c0_18 = arith.constant 0 : index
    %c0_19 = arith.constant 0 : index
    %50 = vector.load %arg5[%c0_17, %c0_18, %c0_19] : memref<3x384x128xf32, #tpu.memory_space<vmem>>, vector<1x384x128xf32>
    %51 = vector.shape_cast %50 : vector<1x384x128xf32> to vector<384x128xf32>
    %cst_20 = arith.constant dense<0.000000e+00> : vector<128x128xf32>
    %52 = tpu.matmul %49, %51, %cst_20 {dimension_numbers = #tpu.dot_dimension_numbers<[1], [0], [0], [1], [0, 0, 1, 1], [], []>} : vector<128x384xf32>, vector<384x128xf32>, vector<128x128xf32> -> vector<128x128xf32>
    %53 = vector.extract_strided_slice %48 {offsets = [16, 0], sizes = [128, 384], strides = [1, 1]} : vector<160x384xf32> to vector<128x384xf32>
    %c1 = arith.constant 1 : index
    %c0_21 = arith.constant 0 : index
    %c0_22 = arith.constant 0 : index
    %54 = vector.load %arg5[%c1, %c0_21, %c0_22] : memref<3x384x128xf32, #tpu.memory_space<vmem>>, vector<1x384x128xf32>
    %55 = vector.shape_cast %54 : vector<1x384x128xf32> to vector<384x128xf32>
    %cst_23 = arith.constant dense<0.000000e+00> : vector<128x128xf32>
    %56 = tpu.matmul %53, %55, %cst_23 {dimension_numbers = #tpu.dot_dimension_numbers<[1], [0], [0], [1], [0, 0, 1, 1], [], []>} : vector<128x384xf32>, vector<384x128xf32>, vector<128x128xf32> -> vector<128x128xf32>
    %57 = arith.addf %52, %56 : vector<128x128xf32>
    %58 = vector.extract_strided_slice %48 {offsets = [32, 0], sizes = [128, 384], strides = [1, 1]} : vector<160x384xf32> to vector<128x384xf32>
    %c2 = arith.constant 2 : index
    %c0_24 = arith.constant 0 : index
    %c0_25 = arith.constant 0 : index
    %59 = vector.load %arg5[%c2, %c0_24, %c0_25] : memref<3x384x128xf32, #tpu.memory_space<vmem>>, vector<1x384x128xf32>
    %60 = vector.shape_cast %59 : vector<1x384x128xf32> to vector<384x128xf32>
    %cst_26 = arith.constant dense<0.000000e+00> : vector<128x128xf32>
    %61 = tpu.matmul %58, %60, %cst_26 {dimension_numbers = #tpu.dot_dimension_numbers<[1], [0], [0], [1], [0, 0, 1, 1], [], []>} : vector<128x384xf32>, vector<384x128xf32>, vector<128x128xf32> -> vector<128x128xf32>
    %62 = arith.addf %57, %61 : vector<128x128xf32>
    %c0_27 = arith.constant 0 : index
    %c0_28 = arith.constant 0 : index
    %63 = vector.load %arg6[%c0_27, %c0_28] : memref<1x128xf32, #tpu.memory_space<vmem>>, vector<1x128xf32>
    %64 = vector.broadcast %63 : vector<1x128xf32> to vector<128x128xf32>
    %65 = arith.addf %62, %64 : vector<128x128xf32>
    %cst_29 = arith.constant 0.000000e+00 : f32
    %66 = vector.broadcast %cst_29 : f32 to vector<128x128xf32>
    %67 = arith.cmpf ogt, %65, %66 : vector<128x128xf32>
    %cst_30 = arith.constant 1.000000e-01 : f32
    %68 = vector.broadcast %cst_30 : f32 to vector<128x128xf32>
    %69 = arith.mulf %68, %65 : vector<128x128xf32>
    %70 = arith.select %67, %65, %69 : vector<128x128xi1>, vector<128x128xf32>
    %71 = vector.extract_strided_slice %7 {offsets = [16, 0], sizes = [128, 128], strides = [1, 1]} : vector<160x128xf32> to vector<128x128xf32>
    %72 = arith.addf %70, %71 : vector<128x128xf32>
    %73 = vector.shape_cast %72 : vector<128x128xf32> to vector<8x16x128xf32>
    %c0_31 = arith.constant 0 : index
    %c0_32 = arith.constant 0 : index
    %c0_33 = arith.constant 0 : index
    %c0_34 = arith.constant 0 : index
    %74 = vector.load %arg7[%c0_31, %c0_32, %c0_33, %c0_34] : memref<1x8x16x128xf32, #tpu.memory_space<vmem>>, vector<1x8x16x128xf32>
    %75 = vector.shape_cast %74 : vector<1x8x16x128xf32> to vector<8x16x128xf32>
    %76 = vector.shape_cast %73 : vector<8x16x128xf32> to vector<1x8x16x128xf32>
    tpu.vector_store %arg7[%c0_31, %c0_32, %c0_33, %c0_34], %76 {strides = array<i32>} : memref<1x8x16x128xf32, #tpu.memory_space<vmem>>, vector<1x8x16x128xf32>,
    return
  }
  func.func @transform_1(%arg0: i32, %arg1: i32) -> (i32, i32) {
    %c0_i32 = arith.constant 0 : i32
    %c0_i32_0 = arith.constant 0 : i32
    %c0_i32_1 = arith.constant 0 : i32
    return %c0_i32, %c0_i32_0 : i32, i32
  }
  func.func @transform_2(%arg0: i32, %arg1: i32) -> (i32, i32) {
    %c0_i32 = arith.constant 0 : i32
    %c0_i32_0 = arith.constant 0 : i32
    %c0_i32_1 = arith.constant 0 : i32
    return %c0_i32, %c0_i32_0 : i32, i32
  }
  func.func @transform_3(%arg0: i32, %arg1: i32) -> (i32, i32, i32) {
    %c0_i32 = arith.constant 0 : i32
    %c0_i32_0 = arith.constant 0 : i32
    %c0_i32_1 = arith.constant 0 : i32
    %c0_i32_2 = arith.constant 0 : i32
    return %c0_i32, %c0_i32_0, %c0_i32_1 : i32, i32, i32
  }
  func.func @transform_4(%arg0: i32, %arg1: i32) -> (i32, i32) {
    %c0_i32 = arith.constant 0 : i32
    %c0_i32_0 = arith.constant 0 : i32
    %c0_i32_1 = arith.constant 0 : i32
    return %c0_i32, %c0_i32_0 : i32, i32
  }
  func.func @transform_5(%arg0: i32, %arg1: i32) -> (i32, i32, i32, i32) {
    %c0_i32 = arith.constant 0 : i32
    %c0_i32_0 = arith.constant 0 : i32
    %c0_i32_1 = arith.constant 0 : i32
    return %arg0, %arg1, %c0_i32, %c0_i32_0 : i32, i32, i32, i32
  }
}

</mosaic_0001>

<llo_original>
// kernel: tpu_custom_call.1
$region0: #{tpu_custom_call.1}
  #allocation0 [shape = 'u32[]', space=smem, size = 0x4, offset = 0x4, fixed_abs, tag = 'smem constant byte address 0x4 - core index']
  #allocation1 [shape = 'u32[72,128]{1,0:T(1,128)}', space=vmem, size = 0x9000, scoped, tag = 'internal scratch']
  #allocation2 [shape = 'f32[10,16,128]{2,1,0:T(8,128)}', space=vmem, size = 0x14000, scoped, tag = 'scratch operand']
  #allocation3 [shape = 's32[1]{0}', space=sflag, size = 0x4, scoped, tag = 'scratch operand']
  #allocation10 [shape = 's32[]', space=sflag, size = 0x4, offset = 0, fixed_abs, tag = 'sflag constant byte address 0x0 - dummy sync flag']
  #allocation11 [shape = 's32[]', space=sflag, size = 0x4, offset = 0, fixed_abs, tag = 'sflag constant byte address 0x0 - dummy sync flag']
  #allocation12 [shape = 'u32[]', space=smem, size = 0x4, offset = 0x44, fixed_abs, tag = 'smem constant byte address 0x44 - assertion arg 0']
  #allocation13 [shape = 'u32[]', space=smem, size = 0x4, offset = 0x48, fixed_abs, tag = 'smem constant byte address 0x48 - assertion arg 1']
  %s0 = inlined_call_operand.hbm [shape: f32[2,18,16,128], index: 0, kind: input, shape index: {}]
  %s1 = inlined_call_operand.hbm [shape: f32[128,128], index: 1, kind: input, shape index: {}]
  %s2 = inlined_call_operand.vmem [shape: f32[1,128], index: 2, kind: input, shape index: {}]
  %s3 = inlined_call_operand.hbm [shape: f32[3,384,128], index: 3, kind: input, shape index: {}]
  %s4 = inlined_call_operand.vmem [shape: f32[1,128], index: 4, kind: input, shape index: {}]
  %s5 = inlined_call_operand.hbm [shape: f32[2,16,16,128], index: 5, kind: output, shape index: {}]
  %s6 = sld [smem:[#allocation0]]
  $region61: #{tpu_custom_call.1} parent=0
    _
  %s8 = ssub.s32 1, %s6
  %s9 = scalar_select 0, %s8, %s6
  $region1: #{tpu_custom_call.1} parent=0
    #allocation4 [shape = 'u8[65536]{0}', space=vmem, size = 0x10000, scoped, tag = 'input window, operand 1, single buffered']
    #allocation5 [shape = 's32[2]{0}', space=sflag, size = 0x8, scoped, tag = 'scoped memory for tpu_custom_call.1']
    #allocation6 [shape = 's32[2]{0}', space=sflag, size = 0x8, scoped, tag = 'scoped memory for tpu_custom_call.1']
    #allocation7 [shape = 'u8[589824]{0}', space=vmem, size = 0x90000, scoped, tag = 'input window, operand 3, single buffered']
    #allocation8 [shape = 's32[1]{0}', space=sflag, size = 0x4, scoped, tag = 'scoped memory for tpu_custom_call.1']
    #allocation9 [shape = 'u8[131072]{0}', space=vmem, size = 0x20000, scoped, tag = 'output window, operand 0']
    %10 = vsyncpa [#allocation5], 0
    %11 = vsyncpa [#allocation8], 0
    %12 = vsyncpa [#allocation6], 0
    %s13 = scalar_lea.sflag [#allocation6], 1
    %14 = vsyncpa %s13, 0
    loop: start=0, step=1, limit=6
    $region2: #{tpu_custom_call.1} parent=1 // loop_pre_header
      _
    $region3: #{tpu_custom_call.1} parent=1 // loop_header
      %s16 = sphi 0, %s20
      %p17 = scmp.ge.s32.totalorder %s16, 6
      %s23 = sphi 0, %s35
      %s24 = sphi 0, %s31
      %s25 = sphi 0, %s23
      %s26 = sphi 0, %s24
      %s27 = sphi 0, %s25
      %s28 = sphi 0, %s26
      %s36 = sphi 0, %s36
      %s38 = sphi 0, %s36
      %s39 = sphi 0, %s38
      %s53 = sphi 0, %s39
      %s57 = sphi 0, %s57
      %s59 = sphi 0, %s57
      %s60 = sphi 0, %s59
      %s74 = sphi 0, %s60
      %s78 = sphi 0, %s78
      %s80 = sphi 0, %s78
      %s81 = sphi 0, %s80
      %s95 = sphi 0, %s81
      %s99 = sphi 0, %s99
      %s101 = sphi 0, %s99
      %s102 = sphi 0, %s101
      %s116 = sphi 0, %s102
      %s124 = sphi 0, %s126
      %s127 = sphi 0, %s124
      %s128 = sphi 0, %s127
      %s144 = sphi 0, %s128
    $region4: #{tpu_custom_call.1} parent=1 // loop_header_branch
      %19 = sbr.rel (%p17) target = $region8
    $region5: #{tpu_custom_call.1} parent=1 // loop_body
      %s21 = ssub.s32 %s16, 1
      %s22 = ssub.s32 %s16, 2
      %s29 = sadd.s32 1, %s24
      %p30 = scmp.ge.s32.totalorder %s29, 2
      %s31 = scalar_select %p30, 0, %s29
      %s32 = sadd.s32 1, %s23
      %s33 = scalar_select %p30, %s32, %s23
      %p34 = scmp.ge.s32.totalorder %s33, 2
      %s35 = scalar_select %p34, 0, %s33
      %s37 = sadd.s32 %s36, 1
      %p40 = scmp.eq.s32.totalorder %s16, 3
      %p41 = scmp.ne.s32.totalorder %s36, %s38
      %p42 = scmp.eq.s32.totalorder %s16, 0
      %p43 = por %p41, %p42
      %p44 = scmp.ne.s32.totalorder %s36, %s38
      %p45 = scmp.eq.s32.totalorder %s21, 3
      %p46 = por %p44, %p45
      %p47 = scmp.ne.s32.totalorder %s38, %s39
      %p48 = scmp.eq.s32.totalorder %s21, 0
      %p49 = por %p47, %p48
      %p50 = scmp.ne.s32.totalorder %s38, %s39
      %p51 = scmp.eq.s32.totalorder %s22, 3
      %p52 = por %p50, %p51
      %p54 = scmp.ne.s32.totalorder %s39, %s53
      %p55 = scmp.eq.s32.totalorder %s22, 0
      %p56 = por %p54, %p55
      %s58 = sadd.s32 %s57, 1
      %p61 = scmp.eq.s32.totalorder %s16, 3
      %p62 = scmp.ne.s32.totalorder %s57, %s59
      %p63 = scmp.eq.s32.totalorder %s16, 0
      %p64 = por %p62, %p63
      %p65 = scmp.ne.s32.totalorder %s57, %s59
      %p66 = scmp.eq.s32.totalorder %s21, 3
      %p67 = por %p65, %p66
      %p68 = scmp.ne.s32.totalorder %s59, %s60
      %p69 = scmp.eq.s32.totalorder %s21, 0
      %p70 = por %p68, %p69
      %p71 = scmp.ne.s32.totalorder %s59, %s60
      %p72 = scmp.eq.s32.totalorder %s22, 3
      %p73 = por %p71, %p72
      %p75 = scmp.ne.s32.totalorder %s60, %s74
      %p76 = scmp.eq.s32.totalorder %s22, 0
      %p77 = por %p75, %p76
      %s79 = sadd.s32 %s78, 1
      %p82 = scmp.eq.s32.totalorder %s16, 3
      %p83 = scmp.ne.s32.totalorder %s78, %s80
      %p84 = scmp.eq.s32.totalorder %s16, 0
      %p85 = por %p83, %p84
      %p86 = scmp.ne.s32.totalorder %s78, %s80
      %p87 = scmp.eq.s32.totalorder %s21, 3
      %p88 = por %p86, %p87
      %p89 = scmp.ne.s32.totalorder %s80, %s81
      %p90 = scmp.eq.s32.totalorder %s21, 0
      %p91 = por %p89, %p90
      %p92 = scmp.ne.s32.totalorder %s80, %s81
      %p93 = scmp.eq.s32.totalorder %s22, 3
      %p94 = por %p92, %p93
      %p96 = scmp.ne.s32.totalorder %s81, %s95
      %p97 = scmp.eq.s32.totalorder %s22, 0
      %p98 = por %p96, %p97
      %s100 = sadd.s32 %s99, 1
      %p103 = scmp.eq.s32.totalorder %s16, 3
      %p104 = scmp.ne.s32.totalorder %s99, %s101
      %p105 = scmp.eq.s32.totalorder %s16, 0
      %p106 = por %p104, %p105
      %p107 = scmp.ne.s32.totalorder %s99, %s101
      %p108 = scmp.eq.s32.totalorder %s21, 3
      %p109 = por %p107, %p108
      %p110 = scmp.ne.s32.totalorder %s101, %s102
      %p111 = scmp.eq.s32.totalorder %s21, 0
      %p112 = por %p110, %p111
      %p113 = scmp.ne.s32.totalorder %s101, %s102
      %p114 = scmp.eq.s32.totalorder %s22, 3
      %p115 = por %p113, %p114
      %p117 = scmp.ne.s32.totalorder %s102, %s116
      %p118 = scmp.eq.s32.totalorder %s22, 0
      %p119 = por %p117, %p118
      %s120 = ssub.s32 %s23, %s35
      %s121 = ssub.s32 %s24, %s31
      %s122 = sor.u32 %s120, %s121
      %p123 = scmp.eq.s32.totalorder %s122, 0
      %s125 = sadd.s32 %s124, 1
      %s126 = scalar_select %p123, %s124, %s125
      %p129 = pneg %p123
      %p130 = scmp.eq.s32.totalorder %s16, 3
      %p131 = por %p129, %p130
      %p132 = scmp.ne.s32.totalorder %s124, %s127
      %p133 = scmp.eq.s32.totalorder %s16, 0
      %p134 = por %p132, %p133
      %p135 = scmp.ne.s32.totalorder %s124, %s127
      %p136 = scmp.eq.s32.totalorder %s21, 3
      %p137 = por %p135, %p136
      %p138 = scmp.ne.s32.totalorder %s127, %s128
      %p139 = scmp.eq.s32.totalorder %s21, 0
      %p140 = por %p138, %p139
      %p141 = scmp.ne.s32.totalorder %s127, %s128
      %p142 = scmp.eq.s32.totalorder %s22, 3
      %p143 = por %p141, %p142
      %p145 = scmp.ne.s32.totalorder %s128, %s144
      %p146 = scmp.eq.s32.totalorder %s22, 0
      %p147 = por %p145, %p146
      %p148 = scmp.le.s32.totalorder 1, %s16
      %p149 = scmp.lt.s32.totalorder %s16, 5
      %p150 = pnand %p148, %p149
      %p151 = pneg %p150
      // Predicated region
      $region9: #{tpu_custom_call.1} parent=5 // pred_check
        _
      $region10: #{tpu_custom_call.1} parent=5 // pred_check_branch
        %153 = sbr.rel (%p150) target = $region12
      $region11: #{tpu_custom_call.1} parent=5 // pred_region
        %s154 = ssub.s32 %s16, 1
        // Predicated region
        $region13: #{tpu_custom_call.1} parent=11 // pred_check
          %p155 = pneg %p49
        $region14: #{tpu_custom_call.1} parent=11 // pred_check_branch
          %157 = sbr.rel (%p155) target = $region16
        $region15: #{tpu_custom_call.1} parent=11 // pred_region
          %159 = vsyncadd [#allocation5], 0
          %s160 = sshll.u32 %s1, 4
          %s161 = int_to_ptr.hbm [resolvable:$true] %s160
          %s162 = sshll.u32 [#allocation4], 4
          %s163 = int_to_ptr.vmem [resolvable:$true] %s162
          %168 = dma.hbm_to_vmem [thread:$0]  %s161, 2048, %s163, [#allocation5], 128, 128, 8
        $region16: #{tpu_custom_call.1} parent=11 // pred_fallthru
          _
        // Predicated region
        $region17: #{tpu_custom_call.1} parent=11 // pred_check
          %p169 = pneg %p70
        $region18: #{tpu_custom_call.1} parent=11 // pred_check_branch
          %171 = sbr.rel (%p169) target = $region20
        $region19: #{tpu_custom_call.1} parent=11 // pred_region
          _
        $region20: #{tpu_custom_call.1} parent=11 // pred_fallthru
          _
        // Predicated region
        $region21: #{tpu_custom_call.1} parent=11 // pred_check
          %p172 = pneg %p91
        $region22: #{tpu_custom_call.1} parent=11 // pred_check_branch
          %174 = sbr.rel (%p172) target = $region24
        $region23: #{tpu_custom_call.1} parent=11 // pred_region
          %176 = vsyncadd [#allocation8], 0
          %s177 = sshll.u32 %s3, 4
          %s178 = int_to_ptr.hbm [resolvable:$true] %s177
          %s179 = sshll.u32 [#allocation7], 4
          %s180 = int_to_ptr.vmem [resolvable:$true] %s179
          %185 = dma.hbm_to_vmem [thread:$0]  %s178, 18432, %s180, [#allocation8], 128, 128, 8
        $region24: #{tpu_custom_call.1} parent=11 // pred_fallthru
          _
        // Predicated region
        $region25: #{tpu_custom_call.1} parent=11 // pred_check
          %p186 = pneg %p112
        $region26: #{tpu_custom_call.1} parent=11 // pred_check_branch
          %188 = sbr.rel (%p186) target = $region28
        $region27: #{tpu_custom_call.1} parent=11 // pred_region
          _
        $region28: #{tpu_custom_call.1} parent=11 // pred_fallthru
          _
      $region12: #{tpu_custom_call.1} parent=5 // pred_fallthru
        _
      %p189 = scmp.lt.s32.totalorder %s16, 4
      // Predicated region
      $region29: #{tpu_custom_call.1} parent=5 // pred_check
        %p190 = pneg %p189
      $region30: #{tpu_custom_call.1} parent=5 // pred_check_branch
        %192 = sbr.rel (%p190) target = $region32
      $region31: #{tpu_custom_call.1} parent=5 // pred_region
        _
      $region32: #{tpu_custom_call.1} parent=5 // pred_fallthru
        _
      %p193 = scmp.le.s32.totalorder 1, %s16
      %p194 = scmp.lt.s32.totalorder %s16, 5
      %p195 = pnand %p193, %p194
      %p196 = pneg %p195
      // Predicated region
      $region33: #{tpu_custom_call.1} parent=5 // pred_check
        _
      $region34: #{tpu_custom_call.1} parent=5 // pred_check_branch
        %198 = sbr.rel (%p195) target = $region36
      $region35: #{tpu_custom_call.1} parent=5 // pred_region
        %s199 = ssub.s32 %s16, 1
        // Predicated region
        $region37: #{tpu_custom_call.1} parent=35 // pred_check
          %p200 = pneg %p49
        $region38: #{tpu_custom_call.1} parent=35 // pred_check_branch
          %202 = sbr.rel (%p200) target = $region40
        $region39: #{tpu_custom_call.1} parent=35 // pred_region
          %204 = dma.done [#allocation5], 2048
        $region40: #{tpu_custom_call.1} parent=35 // pred_fallthru
          _
        // Predicated region
        $region41: #{tpu_custom_call.1} parent=35 // pred_check
          %p205 = pneg %p91
        $region42: #{tpu_custom_call.1} parent=35 // pred_check_branch
          %207 = sbr.rel (%p205) target = $region44
        $region43: #{tpu_custom_call.1} parent=35 // pred_region
          %209 = dma.done [#allocation8], 18432
        $region44: #{tpu_custom_call.1} parent=35 // pred_fallthru
          _
        %p210 = pneg %p49
        %p211 = pneg %p46
        %p212 = pneg %p70
        %p213 = pneg %p67
        %p214 = pneg %p91
        %p215 = pneg %p88
        %p216 = pneg %p112
        %p217 = pneg %p109
        %p218 = pneg %p140
        %p219 = pneg %p137
        %s220 = sand.u32 %s127, 1
        %s221 = scalar_lea.sflag [#allocation6], %s220
        %s222 = sand.u32 %s127, 1
        %s223 = smul.addr %s222, 128
        %s224 = scalar_lea.vmem [#allocation9], %s223
        %s225 = smul.u32 8, %s26
        %s226 = smul.u32 %s26, 8
        %s227 = smul.u32 %s226, 16
        %s228 = smul.u32 %s25, 288
        %s229 = sadd.s32 %s227, %s228
        %s230 = scalar_lea.hbm %s0, %s229
        // Predicated region
        $region45: #{tpu_custom_call.1} parent=35 // pred_check
          _
        $region46: #{tpu_custom_call.1} parent=35 // pred_check_branch
          %232 = sbr.rel target = $region48
        $region47: #{tpu_custom_call.1} parent=35 // pred_region
          %233 = sst [smem:[#allocation12]] [#allocation11]
          %234 = sst [smem:[#allocation13]] [#allocation10]
        $region48: #{tpu_custom_call.1} parent=35 // pred_fallthru
          _
        %236 = shalt.err (0)
        %s238 = sshll.u32 %s230, 4
        %s239 = int_to_ptr.hbm [resolvable:$true] %s238
        %s240 = sshll.u32 [#allocation2], 4
        %s241 = int_to_ptr.vmem [resolvable:$true] %s240
        %243 = dma.hbm_to_vmem [thread:$0]  %s239, 2560, %s241, [#allocation3]
        %s244 = smul.u32 10, 16
        %s245 = smul.u32 %s244, 1
        %s246 = sshll.u32 %s245, 4
        %247 = dma.done [#allocation3], %s246
        %v248 = vld [vmem:[#allocation2] sm:$0xff]
        %v249 = vld [vmem:[#allocation2 + $0x8] sm:$0xff]
        %v250 = vld [vmem:[#allocation2 + $0x10] sm:$0xff]
        %v251 = vld [vmem:[#allocation2 + $0x18] sm:$0xff]
        %v252 = vld [vmem:[#allocation2 + $0x20] sm:$0xff]
        %v253 = vld [vmem:[#allocation2 + $0x28] sm:$0xff]
        %v254 = vld [vmem:[#allocation2 + $0x30] sm:$0xff]
        %v255 = vld [vmem:[#allocation2 + $0x38] sm:$0xff]
        %v256 = vld [vmem:[#allocation2 + $0x40] sm:$0xff]
        %v257 = vld [vmem:[#allocation2 + $0x48] sm:$0xff]
        %v258 = vld [vmem:[#allocation2 + $0x50] sm:$0xff]
        %v259 = vld [vmem:[#allocation2 + $0x58] sm:$0xff]
        %v260 = vld [vmem:[#allocation2 + $0x60] sm:$0xff]
        %v261 = vld [vmem:[#allocation2 + $0x68] sm:$0xff]
        %v262 = vld [vmem:[#allocation2 + $0x70] sm:$0xff]
        %v263 = vld [vmem:[#allocation2 + $0x78] sm:$0xff]
        %v264 = vld [vmem:[#allocation2 + $0x80] sm:$0xff]
        %v265 = vld [vmem:[#allocation2 + $0x88] sm:$0xff]
        %v266 = vld [vmem:[#allocation2 + $0x90] sm:$0xff]
        %v267 = vld [vmem:[#allocation2 + $0x98] sm:$0xff]
        %v268 = vld [vmem:[#allocation4] sm:$0xff]
        %v269 = vld [vmem:[#allocation4 + $0x8] sm:$0xff]
        %v270 = vld [vmem:[#allocation4 + $0x10] sm:$0xff]
        %v271 = vld [vmem:[#allocation4 + $0x18] sm:$0xff]
        %v272 = vld [vmem:[#allocation4 + $0x20] sm:$0xff]
        %v273 = vld [vmem:[#allocation4 + $0x28] sm:$0xff]
        %v274 = vld [vmem:[#allocation4 + $0x30] sm:$0xff]
        %v275 = vld [vmem:[#allocation4 + $0x38] sm:$0xff]
        %v276 = vld [vmem:[#allocation4 + $0x40] sm:$0xff]
        %v277 = vld [vmem:[#allocation4 + $0x48] sm:$0xff]
        %v278 = vld [vmem:[#allocation4 + $0x50] sm:$0xff]
        %v279 = vld [vmem:[#allocation4 + $0x58] sm:$0xff]
        %v280 = vld [vmem:[#allocation4 + $0x60] sm:$0xff]
        %v281 = vld [vmem:[#allocation4 + $0x68] sm:$0xff]
        %v282 = vld [vmem:[#allocation4 + $0x70] sm:$0xff]
        %v283 = vld [vmem:[#allocation4 + $0x78] sm:$0xff]
        %v284 = vld [vmem:[%s2] sm:$0x1]
        %v286 = vperm.slane %v284, 0
        %288 = vmatpush.msra.mxu0 %v283
        %289 = vmatpush.msra.mxu0 %v282
        %290 = vmatpush.msra.mxu0 %v281
        %291 = vmatpush.msra.mxu0 %v280
        %292 = vmatpush.msra.mxu0 %v279
        %293 = vmatpush.msra.mxu0 %v278
        %294 = vmatpush.msra.mxu0 %v277
        %295 = vmatpush.msra.mxu0 %v276
        %296 = vmatpush.msra.mxu0 %v275
        %297 = vmatpush.msra.mxu0 %v274
        %298 = vmatpush.msra.mxu0 %v273
        %299 = vmatpush.msra.mxu0 %v272
        %300 = vmatpush.msra.mxu0 %v271
        %301 = vmatpush.msra.mxu0 %v270
        %302 = vmatpush.msra.mxu0 %v269
        %303 = vmatpush.msra.mxu0 %v268
        %304 = vmatmul.f32.gmra.mxu0 %v248
        %v305 = vpop.f32.mrf.mxu0
        %v306 = vadd.f32 %v286, %v305
        %307 = vmatmul.f32.gmra.mxu0 %v249
        %v308 = vpop.f32.mrf.mxu0
        %v309 = vadd.f32 %v286, %v308
        %310 = vmatmul.f32.gmra.mxu0 %v250
        %v311 = vpop.f32.mrf.mxu0
        %v312 = vadd.f32 %v286, %v311
        %313 = vmatmul.f32.gmra.mxu0 %v251
        %v314 = vpop.f32.mrf.mxu0
        %v315 = vadd.f32 %v286, %v314
        %316 = vmatmul.f32.gmra.mxu0 %v252
        %v317 = vpop.f32.mrf.mxu0
        %v318 = vadd.f32 %v286, %v317
        %319 = vmatmul.f32.gmra.mxu0 %v253
        %v320 = vpop.f32.mrf.mxu0
        %v321 = vadd.f32 %v286, %v320
        %322 = vmatmul.f32.gmra.mxu0 %v254
        %v323 = vpop.f32.mrf.mxu0
        %v324 = vadd.f32 %v286, %v323
        %325 = vmatmul.f32.gmra.mxu0 %v255
        %v326 = vpop.f32.mrf.mxu0
        %v327 = vadd.f32 %v286, %v326
        %328 = vmatmul.f32.gmra.mxu0 %v256
        %v329 = vpop.f32.mrf.mxu0
        %v330 = vadd.f32 %v286, %v329
        %331 = vmatmul.f32.gmra.mxu0 %v257
        %v332 = vpop.f32.mrf.mxu0
        %v333 = vadd.f32 %v286, %v332
        %334 = vmatmul.f32.gmra.mxu0 %v258
        %v335 = vpop.f32.mrf.mxu0
        %v336 = vadd.f32 %v286, %v335
        %337 = vmatmul.f32.gmra.mxu0 %v259
        %v338 = vpop.f32.mrf.mxu0
        %v339 = vadd.f32 %v286, %v338
        %340 = vmatmul.f32.gmra.mxu0 %v260
        %v341 = vpop.f32.mrf.mxu0
        %v342 = vadd.f32 %v286, %v341
        %343 = vmatmul.f32.gmra.mxu0 %v261
        %v344 = vpop.f32.mrf.mxu0
        %v345 = vadd.f32 %v286, %v344
        %346 = vmatmul.f32.gmra.mxu0 %v262
        %v347 = vpop.f32.mrf.mxu0
        %v348 = vadd.f32 %v286, %v347
        %349 = vmatmul.f32.gmra.mxu0 %v263
        %v350 = vpop.f32.mrf.mxu0
        %v351 = vadd.f32 %v286, %v350
        %352 = vmatmul.f32.gmra.mxu0 %v264
        %v353 = vpop.f32.mrf.mxu0
        %v354 = vadd.f32 %v286, %v353
        %355 = vmatmul.f32.gmra.mxu0 %v265
        %v356 = vpop.f32.mrf.mxu0
        %v357 = vadd.f32 %v286, %v356
        %358 = vmatmul.f32.gmra.mxu0 %v266
        %v359 = vpop.f32.mrf.mxu0
        %v360 = vadd.f32 %v286, %v359
        %361 = vmatmul.f32.gmra.mxu0 %v267
        %v362 = vpop.f32.mrf.mxu0
        %v363 = vadd.f32 %v286, %v362
        %364 = vdwg.mxu0
        %vm365 = vcmp.gt.f32.partialorder %v306, 0.0
        %vm366 = vcmp.gt.f32.partialorder %v309, 0.0
        %vm367 = vcmp.gt.f32.partialorder %v312, 0.0
        %vm368 = vcmp.gt.f32.partialorder %v315, 0.0
        %vm369 = vcmp.gt.f32.partialorder %v318, 0.0
        %vm370 = vcmp.gt.f32.partialorder %v321, 0.0
        %vm371 = vcmp.gt.f32.partialorder %v324, 0.0
        %vm372 = vcmp.gt.f32.partialorder %v327, 0.0
        %vm373 = vcmp.gt.f32.partialorder %v330, 0.0
        %vm374 = vcmp.gt.f32.partialorder %v333, 0.0
        %vm375 = vcmp.gt.f32.partialorder %v336, 0.0
        %vm376 = vcmp.gt.f32.partialorder %v339, 0.0
        %vm377 = vcmp.gt.f32.partialorder %v342, 0.0
        %vm378 = vcmp.gt.f32.partialorder %v345, 0.0
        %vm379 = vcmp.gt.f32.partialorder %v348, 0.0
        %vm380 = vcmp.gt.f32.partialorder %v351, 0.0
        %vm381 = vcmp.gt.f32.partialorder %v354, 0.0
        %vm382 = vcmp.gt.f32.partialorder %v357, 0.0
        %vm383 = vcmp.gt.f32.partialorder %v360, 0.0
        %vm384 = vcmp.gt.f32.partialorder %v363, 0.0
        %v385 = vmul.f32 %v306, 0.1
        %v386 = vmul.f32 %v309, 0.1
        %v387 = vmul.f32 %v312, 0.1
        %v388 = vmul.f32 %v315, 0.1
        %v389 = vmul.f32 %v318, 0.1
        %v390 = vmul.f32 %v321, 0.1
        %v391 = vmul.f32 %v324, 0.1
        %v392 = vmul.f32 %v327, 0.1
        %v393 = vmul.f32 %v330, 0.1
        %v394 = vmul.f32 %v333, 0.1
        %v395 = vmul.f32 %v336, 0.1
        %v396 = vmul.f32 %v339, 0.1
        %v397 = vmul.f32 %v342, 0.1
        %v398 = vmul.f32 %v345, 0.1
        %v399 = vmul.f32 %v348, 0.1
        %v400 = vmul.f32 %v351, 0.1
        %v401 = vmul.f32 %v354, 0.1
        %v402 = vmul.f32 %v357, 0.1
        %v403 = vmul.f32 %v360, 0.1
        %v404 = vmul.f32 %v363, 0.1
        %v405 = vsel %vm365, %v306, %v385
        %v406 = vsel %vm366, %v309, %v386
        %v407 = vsel %vm367, %v312, %v387
        %v408 = vsel %vm368, %v315, %v388
        %v409 = vsel %vm369, %v318, %v389
        %v410 = vsel %vm370, %v321, %v390
        %v411 = vsel %vm371, %v324, %v391
        %v412 = vsel %vm372, %v327, %v392
        %v413 = vsel %vm373, %v330, %v393
        %v414 = vsel %vm374, %v333, %v394
        %v415 = vsel %vm375, %v336, %v395
        %v416 = vsel %vm376, %v339, %v396
        %v417 = vsel %vm377, %v342, %v397
        %v418 = vsel %vm378, %v345, %v398
        %v419 = vsel %vm379, %v348, %v399
        %v420 = vsel %vm380, %v351, %v400
        %v421 = vsel %vm381, %v354, %v401
        %v422 = vsel %vm382, %v357, %v402
        %v423 = vsel %vm383, %v360, %v403
        %v424 = vsel %vm384, %v363, %v404
        %s425 = ssub.s32 %s226, 1
        %v426 = vstv %s425
        %v427 = vadd.s32 %v426, 1
        %v428 = vadd.s32 %v426, 2
        %v429 = vadd.s32 %v426, 3
        %v430 = vadd.s32 %v426, 4
        %v431 = vadd.s32 %v426, 5
        %v432 = vadd.s32 %v426, 6
        %v433 = vadd.s32 %v426, 7
        %v434 = vadd.s32 %v426, 8
        %v435 = vadd.s32 %v426, 9
        %v436 = vlaneseq
        %v437 = vshrl.u32 %v436, 7
        %v438 = vadd.s32 %v437, 8
        %vm439 = vcmp.ge.s32.totalorder %v426, 0
        %vm440 = vcmp.ge.s32.totalorder %v427, 0
        %vm441 = vcmp.ge.s32.totalorder %v428, 0
        %vm442 = vcmp.ge.s32.totalorder %v429, 0
        %vm443 = vcmp.ge.s32.totalorder %v430, 0
        %vm444 = vcmp.ge.s32.totalorder %v431, 0
        %vm445 = vcmp.ge.s32.totalorder %v432, 0
        %vm446 = vcmp.ge.s32.totalorder %v433, 0
        %vm447 = vcmp.ge.s32.totalorder %v434, 0
        %vm448 = vcmp.ge.s32.totalorder %v435, 0
        %vm449 = vcmp.lt.s32.totalorder %v426, 16
        %vm450 = vcmp.lt.s32.totalorder %v427, 16
        %vm451 = vcmp.lt.s32.totalorder %v428, 16
        %vm452 = vcmp.lt.s32.totalorder %v429, 16
        %vm453 = vcmp.lt.s32.totalorder %v430, 16
        %vm454 = vcmp.lt.s32.totalorder %v431, 16
        %vm455 = vcmp.lt.s32.totalorder %v432, 16
        %vm456 = vcmp.lt.s32.totalorder %v433, 16
        %vm457 = vcmp.lt.s32.totalorder %v434, 16
        %vm458 = vcmp.lt.s32.totalorder %v435, 16
        %vm459 = vmand %vm439, %vm449
        %vm460 = vmand %vm440, %vm450
        %vm461 = vmand %vm441, %vm451
        %vm462 = vmand %vm442, %vm452
        %vm463 = vmand %vm443, %vm453
        %vm464 = vmand %vm444, %vm454
        %vm465 = vmand %vm445, %vm455
        %vm466 = vmand %vm446, %vm456
        %vm467 = vmand %vm447, %vm457
        %vm468 = vmand %vm448, %vm458
        %v469 = vsel %vm459, 1, 0
        %v470 = vsel %vm460, 1, 0
        %v471 = vsel %vm461, 1, 0
        %v472 = vsel %vm462, 1, 0
        %v473 = vsel %vm463, 1, 0
        %v474 = vsel %vm464, 1, 0
        %v475 = vsel %vm465, 1, 0
        %v476 = vsel %vm466, 1, 0
        %v477 = vsel %vm467, 1, 0
        %v478 = vsel %vm468, 1, 0
        %vm479 = vcmp.eq.s32.totalorder %v469, 1
        %vm480 = vcmp.eq.s32.totalorder %v470, 1
        %vm481 = vcmp.eq.s32.totalorder %v471, 1
        %vm482 = vcmp.eq.s32.totalorder %v472, 1
        %vm483 = vcmp.eq.s32.totalorder %v473, 1
        %vm484 = vcmp.eq.s32.totalorder %v474, 1
        %vm485 = vcmp.eq.s32.totalorder %v475, 1
        %vm486 = vcmp.eq.s32.totalorder %v476, 1
        %vm487 = vcmp.eq.s32.totalorder %v477, 1
        %vm488 = vcmp.eq.s32.totalorder %v478, 1
        %v489 = vsel %vm479, %v405, 0.0
        %v490 = vsel %vm479, %v406, 0.0
        %v491 = vsel %vm480, %v407, 0.0
        %v492 = vsel %vm480, %v408, 0.0
        %v493 = vsel %vm481, %v409, 0.0
        %v494 = vsel %vm481, %v410, 0.0
        %v495 = vsel %vm482, %v411, 0.0
        %v496 = vsel %vm482, %v412, 0.0
        %v497 = vsel %vm483, %v413, 0.0
        %v498 = vsel %vm483, %v414, 0.0
        %v499 = vsel %vm484, %v415, 0.0
        %v500 = vsel %vm484, %v416, 0.0
        %v501 = vsel %vm485, %v417, 0.0
        %v502 = vsel %vm485, %v418, 0.0
        %v503 = vsel %vm486, %v419, 0.0
        %v504 = vsel %vm486, %v420, 0.0
        %v505 = vsel %vm487, %v421, 0.0
        %v506 = vsel %vm487, %v422, 0.0
        %v507 = vsel %vm488, %v423, 0.0
        %v508 = vsel %vm488, %v424, 0.0
        %vm509 = vcmp.gt.s32.totalorder %v437, 0
        %vm510 = vcmp.gt.s32.totalorder %v438, 0
        %v511 = vrot.slane %v489, 7
        %v512 = vrot.slane %v490, 7
        %v513 = vrot.slane %v491, 7
        %v514 = vrot.slane %v492, 7
        %v515 = vrot.slane %v493, 7
        %v516 = vrot.slane %v494, 7
        %v517 = vrot.slane %v495, 7
        %v518 = vrot.slane %v496, 7
        %v519 = vrot.slane %v497, 7
        %v520 = vrot.slane %v498, 7
        %v521 = vrot.slane %v499, 7
        %v522 = vrot.slane %v500, 7
        %v523 = vrot.slane %v501, 7
        %v524 = vrot.slane %v502, 7
        %v525 = vrot.slane %v503, 7
        %v526 = vrot.slane %v504, 7
        %v527 = vrot.slane %v505, 7
        %v528 = vrot.slane %v506, 7
        %v529 = vrot.slane %v507, 7
        %v530 = vrot.slane %v508, 7
        %vm531 = vcmp.lt.s32.totalorder %v437, 1
        %v532 = vsel %vm531, %v529, %v530
        %v533 = vsel %vm531, %v528, %v529
        %v534 = vsel %vm531, %v527, %v528
        %v535 = vsel %vm531, %v526, %v527
        %v536 = vsel %vm531, %v525, %v526
        %v537 = vsel %vm531, %v524, %v525
        %v538 = vsel %vm531, %v523, %v524
        %v539 = vsel %vm531, %v522, %v523
        %v540 = vsel %vm531, %v521, %v522
        %v541 = vsel %vm531, %v520, %v521
        %v542 = vsel %vm531, %v519, %v520
        %v543 = vsel %vm531, %v518, %v519
        %v544 = vsel %vm531, %v517, %v518
        %v545 = vsel %vm531, %v516, %v517
        %v546 = vsel %vm531, %v515, %v516
        %v547 = vsel %vm531, %v514, %v515
        %v548 = vsel %vm531, %v513, %v514
        %v549 = vsel %vm531, %v512, %v513
        %v550 = vsel %vm531, %v511, %v512
        %v551 = vsel %vm531, %v530, %v511
        %v552 = vsel %vm509, 1, 0
        %v553 = vsel %vm510, 1, 0
        %vm554 = vcmp.eq.s32.totalorder %v552, 1
        %vm555 = vcmp.eq.s32.totalorder %v553, 1
        %v556 = vsel %vm554, %v551, 0.0
        %v557 = vsel %vm555, %v550, 0.0
        %v558 = vsel %vm554, %v549, 0.0
        %v559 = vsel %vm555, %v548, 0.0
        %v560 = vsel %vm554, %v547, 0.0
        %v561 = vsel %vm555, %v546, 0.0
        %v562 = vsel %vm554, %v545, 0.0
        %v563 = vsel %vm555, %v544, 0.0
        %v564 = vsel %vm554, %v543, 0.0
        %v565 = vsel %vm555, %v542, 0.0
        %v566 = vsel %vm554, %v541, 0.0
        %v567 = vsel %vm555, %v540, 0.0
        %v568 = vsel %vm554, %v539, 0.0
        %v569 = vsel %vm555, %v538, 0.0
        %v570 = vsel %vm554, %v537, 0.0
        %v571 = vsel %vm555, %v536, 0.0
        %v572 = vsel %vm554, %v535, 0.0
        %v573 = vsel %vm555, %v534, 0.0
        %v574 = vsel %vm554, %v533, 0.0
        %v575 = vsel %vm555, %v532, 0.0
        %vm576 = vcmp.lt.s32.totalorder %v437, 15
        %vm577 = vcmp.lt.s32.totalorder %v438, 15
        %v578 = vrot.slane %v489, 1
        %v579 = vrot.slane %v490, 1
        %v580 = vrot.slane %v491, 1
        %v581 = vrot.slane %v492, 1
        %v582 = vrot.slane %v493, 1
        %v583 = vrot.slane %v494, 1
        %v584 = vrot.slane %v495, 1
        %v585 = vrot.slane %v496, 1
        %v586 = vrot.slane %v497, 1
        %v587 = vrot.slane %v498, 1
        %v588 = vrot.slane %v499, 1
        %v589 = vrot.slane %v500, 1
        %v590 = vrot.slane %v501, 1
        %v591 = vrot.slane %v502, 1
        %v592 = vrot.slane %v503, 1
        %v593 = vrot.slane %v504, 1
        %v594 = vrot.slane %v505, 1
        %v595 = vrot.slane %v506, 1
        %v596 = vrot.slane %v507, 1
        %v597 = vrot.slane %v508, 1
        %vm598 = vcmp.lt.s32.totalorder %v437, 7
        %v599 = vsel %vm598, %v596, %v597
        %v600 = vsel %vm598, %v595, %v596
        %v601 = vsel %vm598, %v594, %v595
        %v602 = vsel %vm598, %v593, %v594
        %v603 = vsel %vm598, %v592, %v593
        %v604 = vsel %vm598, %v591, %v592
        %v605 = vsel %vm598, %v590, %v591
        %v606 = vsel %vm598, %v589, %v590
        %v607 = vsel %vm598, %v588, %v589
        %v608 = vsel %vm598, %v587, %v588
        %v609 = vsel %vm598, %v586, %v587
        %v610 = vsel %vm598, %v585, %v586
        %v611 = vsel %vm598, %v584, %v585
        %v612 = vsel %vm598, %v583, %v584
        %v613 = vsel %vm598, %v582, %v583
        %v614 = vsel %vm598, %v581, %v582
        %v615 = vsel %vm598, %v580, %v581
        %v616 = vsel %vm598, %v579, %v580
        %v617 = vsel %vm598, %v578, %v579
        %v618 = vsel %vm598, %v597, %v578
        %v619 = vsel %vm576, 1, 0
        %v620 = vsel %vm577, 1, 0
        %vm621 = vcmp.eq.s32.totalorder %v619, 1
        %vm622 = vcmp.eq.s32.totalorder %v620, 1
        %v623 = vsel %vm621, %v617, 0.0
        %v624 = vsel %vm622, %v616, 0.0
        %v625 = vsel %vm621, %v615, 0.0
        %v626 = vsel %vm622, %v614, 0.0
        %v627 = vsel %vm621, %v613, 0.0
        %v628 = vsel %vm622, %v612, 0.0
        %v629 = vsel %vm621, %v611, 0.0
        %v630 = vsel %vm622, %v610, 0.0
        %v631 = vsel %vm621, %v609, 0.0
        %v632 = vsel %vm622, %v608, 0.0
        %v633 = vsel %vm621, %v607, 0.0
        %v634 = vsel %vm622, %v606, 0.0
        %v635 = vsel %vm621, %v605, 0.0
        %v636 = vsel %vm622, %v604, 0.0
        %v637 = vsel %vm621, %v603, 0.0
        %v638 = vsel %vm622, %v602, 0.0
        %v639 = vsel %vm621, %v601, 0.0
        %v640 = vsel %vm622, %v600, 0.0
        %v641 = vsel %vm621, %v599, 0.0
        %v642 = vsel %vm622, %v618, 0.0
        %v643 = vld [vmem:[#allocation7] sm:$0xff]
        %v644 = vld [vmem:[#allocation7 + $0x8] sm:$0xff]
        %v645 = vld [vmem:[#allocation7 + $0x10] sm:$0xff]
        %v646 = vld [vmem:[#allocation7 + $0x18] sm:$0xff]
        %v647 = vld [vmem:[#allocation7 + $0x20] sm:$0xff]
        %v648 = vld [vmem:[#allocation7 + $0x28] sm:$0xff]
        %v649 = vld [vmem:[#allocation7 + $0x30] sm:$0xff]
        %v650 = vld [vmem:[#allocation7 + $0x38] sm:$0xff]
        %v651 = vld [vmem:[#allocation7 + $0x40] sm:$0xff]
        %v652 = vld [vmem:[#allocation7 + $0x48] sm:$0xff]
        %v653 = vld [vmem:[#allocation7 + $0x50] sm:$0xff]
        %v654 = vld [vmem:[#allocation7 + $0x58] sm:$0xff]
        %v655 = vld [vmem:[#allocation7 + $0x60] sm:$0xff]
        %v656 = vld [vmem:[#allocation7 + $0x68] sm:$0xff]
        %v657 = vld [vmem:[#allocation7 + $0x70] sm:$0xff]
        %v658 = vld [vmem:[#allocation7 + $0x78] sm:$0xff]
        %v659 = vld [vmem:[#allocation7 + $0x80] sm:$0xff]
        %v660 = vld [vmem:[#allocation7 + $0x88] sm:$0xff]
        %v661 = vld [vmem:[#allocation7 + $0x90] sm:$0xff]
        %v662 = vld [vmem:[#allocation7 + $0x98] sm:$0xff]
        %v663 = vld [vmem:[#allocation7 + $0xa0] sm:$0xff]
        %v664 = vld [vmem:[#allocation7 + $0xa8] sm:$0xff]
        %v665 = vld [vmem:[#allocation7 + $0xb0] sm:$0xff]
        %v666 = vld [vmem:[#allocation7 + $0xb8] sm:$0xff]
        %v667 = vld [vmem:[#allocation7 + $0xc0] sm:$0xff]
        %v668 = vld [vmem:[#allocation7 + $0xc8] sm:$0xff]
        %v669 = vld [vmem:[#allocation7 + $0xd0] sm:$0xff]
        %v670 = vld [vmem:[#allocation7 + $0xd8] sm:$0xff]
        %v671 = vld [vmem:[#allocation7 + $0xe0] sm:$0xff]
        %v672 = vld [vmem:[#allocation7 + $0xe8] sm:$0xff]
        %v673 = vld [vmem:[#allocation7 + $0xf0] sm:$0xff]
        %v674 = vld [vmem:[#allocation7 + $0xf8] sm:$0xff]
        %v675 = vld [vmem:[#allocation7 + $0x100] sm:$0xff]
        %v676 = vld [vmem:[#allocation7 + $0x108] sm:$0xff]
        %v677 = vld [vmem:[#allocation7 + $0x110] sm:$0xff]
        %v678 = vld [vmem:[#allocation7 + $0x118] sm:$0xff]
        %v679 = vld [vmem:[#allocation7 + $0x120] sm:$0xff]
        %v680 = vld [vmem:[#allocation7 + $0x128] sm:$0xff]
        %v681 = vld [vmem:[#allocation7 + $0x130] sm:$0xff]
        %v682 = vld [vmem:[#allocation7 + $0x138] sm:$0xff]
        %v683 = vld [vmem:[#allocation7 + $0x140] sm:$0xff]
        %v684 = vld [vmem:[#allocation7 + $0x148] sm:$0xff]
        %v685 = vld [vmem:[#allocation7 + $0x150] sm:$0xff]
        %v686 = vld [vmem:[#allocation7 + $0x158] sm:$0xff]
        %v687 = vld [vmem:[#allocation7 + $0x160] sm:$0xff]
        %v688 = vld [vmem:[#allocation7 + $0x168] sm:$0xff]
        %v689 = vld [vmem:[#allocation7 + $0x170] sm:$0xff]
        %v690 = vld [vmem:[#allocation7 + $0x178] sm:$0xff]
        %s691 = scalar_lea.vmem [#allocation7], 384
        %v692 = vld [vmem:[%s691] sm:$0xff]
        %v693 = vld [vmem:[%s691 + $0x8] sm:$0xff]
        %v694 = vld [vmem:[%s691 + $0x10] sm:$0xff]
        %v695 = vld [vmem:[%s691 + $0x18] sm:$0xff]
        %v696 = vld [vmem:[%s691 + $0x20] sm:$0xff]
        %v697 = vld [vmem:[%s691 + $0x28] sm:$0xff]
        %v698 = vld [vmem:[%s691 + $0x30] sm:$0xff]
        %v699 = vld [vmem:[%s691 + $0x38] sm:$0xff]
        %v700 = vld [vmem:[%s691 + $0x40] sm:$0xff]
        %v701 = vld [vmem:[%s691 + $0x48] sm:$0xff]
        %v702 = vld [vmem:[%s691 + $0x50] sm:$0xff]
        %v703 = vld [vmem:[%s691 + $0x58] sm:$0xff]
        %v704 = vld [vmem:[%s691 + $0x60] sm:$0xff]
        %v705 = vld [vmem:[%s691 + $0x68] sm:$0xff]
        %v706 = vld [vmem:[%s691 + $0x70] sm:$0xff]
        %v707 = vld [vmem:[%s691 + $0x78] sm:$0xff]
        %v708 = vld [vmem:[%s691 + $0x80] sm:$0xff]
        %v709 = vld [vmem:[%s691 + $0x88] sm:$0xff]
        %v710 = vld [vmem:[%s691 + $0x90] sm:$0xff]
        %v711 = vld [vmem:[%s691 + $0x98] sm:$0xff]
        %v712 = vld [vmem:[%s691 + $0xa0] sm:$0xff]
        %v713 = vld [vmem:[%s691 + $0xa8] sm:$0xff]
        %v714 = vld [vmem:[%s691 + $0xb0] sm:$0xff]
        %v715 = vld [vmem:[%s691 + $0xb8] sm:$0xff]
        %v716 = vld [vmem:[%s691 + $0xc0] sm:$0xff]
        %v717 = vld [vmem:[%s691 + $0xc8] sm:$0xff]
        %v718 = vld [vmem:[%s691 + $0xd0] sm:$0xff]
        %v719 = vld [vmem:[%s691 + $0xd8] sm:$0xff]
        %v720 = vld [vmem:[%s691 + $0xe0] sm:$0xff]
        %v721 = vld [vmem:[%s691 + $0xe8] sm:$0xff]
        %v722 = vld [vmem:[%s691 + $0xf0] sm:$0xff]
        %v723 = vld [vmem:[%s691 + $0xf8] sm:$0xff]
        %v724 = vld [vmem:[%s691 + $0x100] sm:$0xff]
        %v725 = vld [vmem:[%s691 + $0x108] sm:$0xff]
        %v726 = vld [vmem:[%s691 + $0x110] sm:$0xff]
        %v727 = vld [vmem:[%s691 + $0x118] sm:$0xff]
        %v728 = vld [vmem:[%s691 + $0x120] sm:$0xff]
        %v729 = vld [vmem:[%s691 + $0x128] sm:$0xff]
        %v730 = vld [vmem:[%s691 + $0x130] sm:$0xff]
        %v731 = vld [vmem:[%s691 + $0x138] sm:$0xff]
        %v732 = vld [vmem:[%s691 + $0x140] sm:$0xff]
        %v733 = vld [vmem:[%s691 + $0x148] sm:$0xff]
        %v734 = vld [vmem:[%s691 + $0x150] sm:$0xff]
        %v735 = vld [vmem:[%s691 + $0x158] sm:$0xff]
        %v736 = vld [vmem:[%s691 + $0x160] sm:$0xff]
        %v737 = vld [vmem:[%s691 + $0x168] sm:$0xff]
        %v738 = vld [vmem:[%s691 + $0x170] sm:$0xff]
        %v739 = vld [vmem:[%s691 + $0x178] sm:$0xff]
        %740 = vmatpush.msra.mxu0 %v707
        %741 = vmatpush.msra.mxu0 %v706
        %742 = vmatpush.msra.mxu0 %v705
        %743 = vmatpush.msra.mxu0 %v704
        %744 = vmatpush.msra.mxu0 %v703
        %745 = vmatpush.msra.mxu0 %v702
        %746 = vmatpush.msra.mxu0 %v701
        %747 = vmatpush.msra.mxu0 %v700
        %748 = vmatpush.msra.mxu0 %v699
        %749 = vmatpush.msra.mxu0 %v698
        %750 = vmatpush.msra.mxu0 %v697
        %751 = vmatpush.msra.mxu0 %v696
        %752 = vmatpush.msra.mxu0 %v695
        %753 = vmatpush.msra.mxu0 %v694
        %754 = vmatpush.msra.mxu0 %v693
        %755 = vmatpush.msra.mxu0 %v692
        %756 = vmatmul.f32.gmra.mxu0 %v558
        %v757 = vpop.f32.mrf.mxu0
        %v758 = vadd.f32 0.0, %v757
        %759 = vmatmul.f32.gmra.mxu0 %v559
        %v760 = vpop.f32.mrf.mxu0
        %v761 = vadd.f32 0.0, %v760
        %762 = vmatmul.f32.gmra.mxu0 %v560
        %v763 = vpop.f32.mrf.mxu0
        %v764 = vadd.f32 0.0, %v763
        %765 = vmatmul.f32.gmra.mxu0 %v561
        %v766 = vpop.f32.mrf.mxu0
        %v767 = vadd.f32 0.0, %v766
        %768 = vmatmul.f32.gmra.mxu0 %v562
        %v769 = vpop.f32.mrf.mxu0
        %v770 = vadd.f32 0.0, %v769
        %771 = vmatmul.f32.gmra.mxu0 %v563
        %v772 = vpop.f32.mrf.mxu0
        %v773 = vadd.f32 0.0, %v772
        %774 = vmatmul.f32.gmra.mxu0 %v564
        %v775 = vpop.f32.mrf.mxu0
        %v776 = vadd.f32 0.0, %v775
        %777 = vmatmul.f32.gmra.mxu0 %v565
        %v778 = vpop.f32.mrf.mxu0
        %v779 = vadd.f32 0.0, %v778
        %780 = vmatmul.f32.gmra.mxu0 %v566
        %v781 = vpop.f32.mrf.mxu0
        %v782 = vadd.f32 0.0, %v781
        %783 = vmatmul.f32.gmra.mxu0 %v567
        %v784 = vpop.f32.mrf.mxu0
        %v785 = vadd.f32 0.0, %v784
        %786 = vmatmul.f32.gmra.mxu0 %v568
        %v787 = vpop.f32.mrf.mxu0
        %v788 = vadd.f32 0.0, %v787
        %789 = vmatmul.f32.gmra.mxu0 %v569
        %v790 = vpop.f32.mrf.mxu0
        %v791 = vadd.f32 0.0, %v790
        %792 = vmatmul.f32.gmra.mxu0 %v570
        %v793 = vpop.f32.mrf.mxu0
        %v794 = vadd.f32 0.0, %v793
        %795 = vmatmul.f32.gmra.mxu0 %v571
        %v796 = vpop.f32.mrf.mxu0
        %v797 = vadd.f32 0.0, %v796
        %798 = vmatmul.f32.gmra.mxu0 %v572
        %v799 = vpop.f32.mrf.mxu0
        %v800 = vadd.f32 0.0, %v799
        %801 = vmatmul.f32.gmra.mxu0 %v573
        %v802 = vpop.f32.mrf.mxu0
        %v803 = vadd.f32 0.0, %v802
        %804 = vdwg.mxu0
        %805 = vmatpush.msra.mxu0 %v723
        %806 = vmatpush.msra.mxu0 %v722
        %807 = vmatpush.msra.mxu0 %v721
        %808 = vmatpush.msra.mxu0 %v720
        %809 = vmatpush.msra.mxu0 %v719
        %810 = vmatpush.msra.mxu0 %v718
        %811 = vmatpush.msra.mxu0 %v717
        %812 = vmatpush.msra.mxu0 %v716
        %813 = vmatpush.msra.mxu0 %v715
        %814 = vmatpush.msra.mxu0 %v714
        %815 = vmatpush.msra.mxu0 %v713
        %816 = vmatpush.msra.mxu0 %v712
        %817 = vmatpush.msra.mxu0 %v711
        %818 = vmatpush.msra.mxu0 %v710
        %819 = vmatpush.msra.mxu0 %v709
        %820 = vmatpush.msra.mxu0 %v708
        %821 = vmatmul.f32.gmra.mxu0 %v491
        %v822 = vpop.f32.mrf.mxu0
        %v823 = vadd.f32 %v758, %v822
        %824 = vmatmul.f32.gmra.mxu0 %v492
        %v825 = vpop.f32.mrf.mxu0
        %v826 = vadd.f32 %v761, %v825
        %827 = vmatmul.f32.gmra.mxu0 %v493
        %v828 = vpop.f32.mrf.mxu0
        %v829 = vadd.f32 %v764, %v828
        %830 = vmatmul.f32.gmra.mxu0 %v494
        %v831 = vpop.f32.mrf.mxu0
        %v832 = vadd.f32 %v767, %v831
        %833 = vmatmul.f32.gmra.mxu0 %v495
        %v834 = vpop.f32.mrf.mxu0
        %v835 = vadd.f32 %v770, %v834
        %836 = vmatmul.f32.gmra.mxu0 %v496
        %v837 = vpop.f32.mrf.mxu0
        %v838 = vadd.f32 %v773, %v837
        %839 = vmatmul.f32.gmra.mxu0 %v497
        %v840 = vpop.f32.mrf.mxu0
        %v841 = vadd.f32 %v776, %v840
        %842 = vmatmul.f32.gmra.mxu0 %v498
        %v843 = vpop.f32.mrf.mxu0
        %v844 = vadd.f32 %v779, %v843
        %845 = vmatmul.f32.gmra.mxu0 %v499
        %v846 = vpop.f32.mrf.mxu0
        %v847 = vadd.f32 %v782, %v846
        %848 = vmatmul.f32.gmra.mxu0 %v500
        %v849 = vpop.f32.mrf.mxu0
        %v850 = vadd.f32 %v785, %v849
        %851 = vmatmul.f32.gmra.mxu0 %v501
        %v852 = vpop.f32.mrf.mxu0
        %v853 = vadd.f32 %v788, %v852
        %854 = vmatmul.f32.gmra.mxu0 %v502
        %v855 = vpop.f32.mrf.mxu0
        %v856 = vadd.f32 %v791, %v855
        %857 = vmatmul.f32.gmra.mxu0 %v503
        %v858 = vpop.f32.mrf.mxu0
        %v859 = vadd.f32 %v794, %v858
        %860 = vmatmul.f32.gmra.mxu0 %v504
        %v861 = vpop.f32.mrf.mxu0
        %v862 = vadd.f32 %v797, %v861
        %863 = vmatmul.f32.gmra.mxu0 %v505
        %v864 = vpop.f32.mrf.mxu0
        %v865 = vadd.f32 %v800, %v864
        %866 = vmatmul.f32.gmra.mxu0 %v506
        %v867 = vpop.f32.mrf.mxu0
        %v868 = vadd.f32 %v803, %v867
        %869 = vdwg.mxu0
        %870 = vmatpush.msra.mxu0 %v739
        %871 = vmatpush.msra.mxu0 %v738
        %872 = vmatpush.msra.mxu0 %v737
        %873 = vmatpush.msra.mxu0 %v736
        %874 = vmatpush.msra.mxu0 %v735
        %875 = vmatpush.msra.mxu0 %v734
        %876 = vmatpush.msra.mxu0 %v733
        %877 = vmatpush.msra.mxu0 %v732
        %878 = vmatpush.msra.mxu0 %v731
        %879 = vmatpush.msra.mxu0 %v730
        %880 = vmatpush.msra.mxu0 %v729
        %881 = vmatpush.msra.mxu0 %v728
        %882 = vmatpush.msra.mxu0 %v727
        %883 = vmatpush.msra.mxu0 %v726
        %884 = vmatpush.msra.mxu0 %v725
        %885 = vmatpush.msra.mxu0 %v724
        %886 = vmatmul.f32.gmra.mxu0 %v625
        %v887 = vpop.f32.mrf.mxu0
        %v888 = vadd.f32 %v823, %v887
        %889 = vmatmul.f32.gmra.mxu0 %v626
        %v890 = vpop.f32.mrf.mxu0
        %v891 = vadd.f32 %v826, %v890
        %892 = vmatmul.f32.gmra.mxu0 %v627
        %v893 = vpop.f32.mrf.mxu0
        %v894 = vadd.f32 %v829, %v893
        %895 = vmatmul.f32.gmra.mxu0 %v628
        %v896 = vpop.f32.mrf.mxu0
        %v897 = vadd.f32 %v832, %v896
        %898 = vmatmul.f32.gmra.mxu0 %v629
        %v899 = vpop.f32.mrf.mxu0
        %v900 = vadd.f32 %v835, %v899
        %901 = vmatmul.f32.gmra.mxu0 %v630
        %v902 = vpop.f32.mrf.mxu0
        %v903 = vadd.f32 %v838, %v902
        %904 = vmatmul.f32.gmra.mxu0 %v631
        %v905 = vpop.f32.mrf.mxu0
        %v906 = vadd.f32 %v841, %v905
        %907 = vmatmul.f32.gmra.mxu0 %v632
        %v908 = vpop.f32.mrf.mxu0
        %v909 = vadd.f32 %v844, %v908
        %910 = vmatmul.f32.gmra.mxu0 %v633
        %v911 = vpop.f32.mrf.mxu0
        %v912 = vadd.f32 %v847, %v911
        %913 = vmatmul.f32.gmra.mxu0 %v634
        %v914 = vpop.f32.mrf.mxu0
        %v915 = vadd.f32 %v850, %v914
        %916 = vmatmul.f32.gmra.mxu0 %v635
        %v917 = vpop.f32.mrf.mxu0
        %v918 = vadd.f32 %v853, %v917
        %919 = vmatmul.f32.gmra.mxu0 %v636
        %v920 = vpop.f32.mrf.mxu0
        %v921 = vadd.f32 %v856, %v920
        %922 = vmatmul.f32.gmra.mxu0 %v637
        %v923 = vpop.f32.mrf.mxu0
        %v924 = vadd.f32 %v859, %v923
        %925 = vmatmul.f32.gmra.mxu0 %v638
        %v926 = vpop.f32.mrf.mxu0
        %v927 = vadd.f32 %v862, %v926
        %928 = vmatmul.f32.gmra.mxu0 %v639
        %v929 = vpop.f32.mrf.mxu0
        %v930 = vadd.f32 %v865, %v929
        %931 = vmatmul.f32.gmra.mxu0 %v640
        %v932 = vpop.f32.mrf.mxu0
        %v933 = vadd.f32 %v868, %v932
        %934 = vdwg.mxu0
        %935 = vmatpush.msra.mxu0 %v658
        %936 = vmatpush.msra.mxu0 %v657
        %937 = vmatpush.msra.mxu0 %v656
        %938 = vmatpush.msra.mxu0 %v655
        %939 = vmatpush.msra.mxu0 %v654
        %940 = vmatpush.msra.mxu0 %v653
        %941 = vmatpush.msra.mxu0 %v652
        %942 = vmatpush.msra.mxu0 %v651
        %943 = vmatpush.msra.mxu0 %v650
        %944 = vmatpush.msra.mxu0 %v649
        %945 = vmatpush.msra.mxu0 %v648
        %946 = vmatpush.msra.mxu0 %v647
        %947 = vmatpush.msra.mxu0 %v646
        %948 = vmatpush.msra.mxu0 %v645
        %949 = vmatpush.msra.mxu0 %v644
        %950 = vmatpush.msra.mxu0 %v643
        %951 = vmatmul.f32.gmra.mxu0 %v556
        %v952 = vpop.f32.mrf.mxu0
        %v953 = vadd.f32 %v888, %v952
        %954 = vmatmul.f32.gmra.mxu0 %v557
        %v955 = vpop.f32.mrf.mxu0
        %v956 = vadd.f32 %v891, %v955
        %957 = vmatmul.f32.gmra.mxu0 %v558
        %v958 = vpop.f32.mrf.mxu0
        %v959 = vadd.f32 %v894, %v958
        %960 = vmatmul.f32.gmra.mxu0 %v559
        %v961 = vpop.f32.mrf.mxu0
        %v962 = vadd.f32 %v897, %v961
        %963 = vmatmul.f32.gmra.mxu0 %v560
        %v964 = vpop.f32.mrf.mxu0
        %v965 = vadd.f32 %v900, %v964
        %966 = vmatmul.f32.gmra.mxu0 %v561
        %v967 = vpop.f32.mrf.mxu0
        %v968 = vadd.f32 %v903, %v967
        %969 = vmatmul.f32.gmra.mxu0 %v562
        %v970 = vpop.f32.mrf.mxu0
        %v971 = vadd.f32 %v906, %v970
        %972 = vmatmul.f32.gmra.mxu0 %v563
        %v973 = vpop.f32.mrf.mxu0
        %v974 = vadd.f32 %v909, %v973
        %975 = vmatmul.f32.gmra.mxu0 %v564
        %v976 = vpop.f32.mrf.mxu0
        %v977 = vadd.f32 %v912, %v976
        %978 = vmatmul.f32.gmra.mxu0 %v565
        %v979 = vpop.f32.mrf.mxu0
        %v980 = vadd.f32 %v915, %v979
        %981 = vmatmul.f32.gmra.mxu0 %v566
        %v982 = vpop.f32.mrf.mxu0
        %v983 = vadd.f32 %v918, %v982
        %984 = vmatmul.f32.gmra.mxu0 %v567
        %v985 = vpop.f32.mrf.mxu0
        %v986 = vadd.f32 %v921, %v985
        %987 = vmatmul.f32.gmra.mxu0 %v568
        %v988 = vpop.f32.mrf.mxu0
        %v989 = vadd.f32 %v924, %v988
        %990 = vmatmul.f32.gmra.mxu0 %v569
        %v991 = vpop.f32.mrf.mxu0
        %v992 = vadd.f32 %v927, %v991
        %993 = vmatmul.f32.gmra.mxu0 %v570
        %v994 = vpop.f32.mrf.mxu0
        %v995 = vadd.f32 %v930, %v994
        %996 = vmatmul.f32.gmra.mxu0 %v571
        %v997 = vpop.f32.mrf.mxu0
        %v998 = vadd.f32 %v933, %v997
        %999 = vdwg.mxu0
        %1000 = vmatpush.msra.mxu0 %v674
        %1001 = vmatpush.msra.mxu0 %v673
        %1002 = vmatpush.msra.mxu0 %v672
        %1003 = vmatpush.msra.mxu0 %v671
        %1004 = vmatpush.msra.mxu0 %v670
        %1005 = vmatpush.msra.mxu0 %v669
        %1006 = vmatpush.msra.mxu0 %v668
        %1007 = vmatpush.msra.mxu0 %v667
        %1008 = vmatpush.msra.mxu0 %v666
        %1009 = vmatpush.msra.mxu0 %v665
        %1010 = vmatpush.msra.mxu0 %v664
        %1011 = vmatpush.msra.mxu0 %v663
        %1012 = vmatpush.msra.mxu0 %v662
        %1013 = vmatpush.msra.mxu0 %v661
        %1014 = vmatpush.msra.mxu0 %v660
        %1015 = vmatpush.msra.mxu0 %v659
        %1016 = vmatmul.f32.gmra.mxu0 %v489
        %v1017 = vpop.f32.mrf.mxu0
        %v1018 = vadd.f32 %v953, %v1017
        %1019 = vmatmul.f32.gmra.mxu0 %v490
        %v1020 = vpop.f32.mrf.mxu0
        %v1021 = vadd.f32 %v956, %v1020
        %1022 = vmatmul.f32.gmra.mxu0 %v491
        %v1023 = vpop.f32.mrf.mxu0
        %v1024 = vadd.f32 %v959, %v1023
        %1025 = vmatmul.f32.gmra.mxu0 %v492
        %v1026 = vpop.f32.mrf.mxu0
        %v1027 = vadd.f32 %v962, %v1026
        %1028 = vmatmul.f32.gmra.mxu0 %v493
        %v1029 = vpop.f32.mrf.mxu0
        %v1030 = vadd.f32 %v965, %v1029
        %1031 = vmatmul.f32.gmra.mxu0 %v494
        %v1032 = vpop.f32.mrf.mxu0
        %v1033 = vadd.f32 %v968, %v1032
        %1034 = vmatmul.f32.gmra.mxu0 %v495
        %v1035 = vpop.f32.mrf.mxu0
        %v1036 = vadd.f32 %v971, %v1035
        %1037 = vmatmul.f32.gmra.mxu0 %v496
        %v1038 = vpop.f32.mrf.mxu0
        %v1039 = vadd.f32 %v974, %v1038
        %1040 = vmatmul.f32.gmra.mxu0 %v497
        %v1041 = vpop.f32.mrf.mxu0
        %v1042 = vadd.f32 %v977, %v1041
        %1043 = vmatmul.f32.gmra.mxu0 %v498
        %v1044 = vpop.f32.mrf.mxu0
        %v1045 = vadd.f32 %v980, %v1044
        %1046 = vmatmul.f32.gmra.mxu0 %v499
        %v1047 = vpop.f32.mrf.mxu0
        %v1048 = vadd.f32 %v983, %v1047
        %1049 = vmatmul.f32.gmra.mxu0 %v500
        %v1050 = vpop.f32.mrf.mxu0
        %v1051 = vadd.f32 %v986, %v1050
        %1052 = vmatmul.f32.gmra.mxu0 %v501
        %v1053 = vpop.f32.mrf.mxu0
        %v1054 = vadd.f32 %v989, %v1053
        %1055 = vmatmul.f32.gmra.mxu0 %v502
        %v1056 = vpop.f32.mrf.mxu0
        %v1057 = vadd.f32 %v992, %v1056
        %1058 = vmatmul.f32.gmra.mxu0 %v503
        %v1059 = vpop.f32.mrf.mxu0
        %v1060 = vadd.f32 %v995, %v1059
        %1061 = vmatmul.f32.gmra.mxu0 %v504
        %v1062 = vpop.f32.mrf.mxu0
        %v1063 = vadd.f32 %v998, %v1062
        %1064 = vdwg.mxu0
        %1065 = vmatpush.msra.mxu0 %v690
        %1066 = vmatpush.msra.mxu0 %v689
        %1067 = vmatpush.msra.mxu0 %v688
        %1068 = vmatpush.msra.mxu0 %v687
        %1069 = vmatpush.msra.mxu0 %v686
        %1070 = vmatpush.msra.mxu0 %v685
        %1071 = vmatpush.msra.mxu0 %v684
        %1072 = vmatpush.msra.mxu0 %v683
        %1073 = vmatpush.msra.mxu0 %v682
        %1074 = vmatpush.msra.mxu0 %v681
        %1075 = vmatpush.msra.mxu0 %v680
        %1076 = vmatpush.msra.mxu0 %v679
        %1077 = vmatpush.msra.mxu0 %v678
        %1078 = vmatpush.msra.mxu0 %v677
        %1079 = vmatpush.msra.mxu0 %v676
        %1080 = vmatpush.msra.mxu0 %v675
        %1081 = vmatmul.f32.gmra.mxu0 %v623
        %v1082 = vpop.f32.mrf.mxu0
        %v1083 = vadd.f32 %v1018, %v1082
        %1084 = vmatmul.f32.gmra.mxu0 %v624
        %v1085 = vpop.f32.mrf.mxu0
        %v1086 = vadd.f32 %v1021, %v1085
        %1087 = vmatmul.f32.gmra.mxu0 %v625
        %v1088 = vpop.f32.mrf.mxu0
        %v1089 = vadd.f32 %v1024, %v1088
        %1090 = vmatmul.f32.gmra.mxu0 %v626
        %v1091 = vpop.f32.mrf.mxu0
        %v1092 = vadd.f32 %v1027, %v1091
        %1093 = vmatmul.f32.gmra.mxu0 %v627
        %v1094 = vpop.f32.mrf.mxu0
        %v1095 = vadd.f32 %v1030, %v1094
        %1096 = vmatmul.f32.gmra.mxu0 %v628
        %v1097 = vpop.f32.mrf.mxu0
        %v1098 = vadd.f32 %v1033, %v1097
        %1099 = vmatmul.f32.gmra.mxu0 %v629
        %v1100 = vpop.f32.mrf.mxu0
        %v1101 = vadd.f32 %v1036, %v1100
        %1102 = vmatmul.f32.gmra.mxu0 %v630
        %v1103 = vpop.f32.mrf.mxu0
        %v1104 = vadd.f32 %v1039, %v1103
        %1105 = vmatmul.f32.gmra.mxu0 %v631
        %v1106 = vpop.f32.mrf.mxu0
        %v1107 = vadd.f32 %v1042, %v1106
        %1108 = vmatmul.f32.gmra.mxu0 %v632
        %v1109 = vpop.f32.mrf.mxu0
        %v1110 = vadd.f32 %v1045, %v1109
        %1111 = vmatmul.f32.gmra.mxu0 %v633
        %v1112 = vpop.f32.mrf.mxu0
        %v1113 = vadd.f32 %v1048, %v1112
        %1114 = vmatmul.f32.gmra.mxu0 %v634
        %v1115 = vpop.f32.mrf.mxu0
        %v1116 = vadd.f32 %v1051, %v1115
        %1117 = vmatmul.f32.gmra.mxu0 %v635
        %v1118 = vpop.f32.mrf.mxu0
        %v1119 = vadd.f32 %v1054, %v1118
        %1120 = vmatmul.f32.gmra.mxu0 %v636
        %v1121 = vpop.f32.mrf.mxu0
        %v1122 = vadd.f32 %v1057, %v1121
        %1123 = vmatmul.f32.gmra.mxu0 %v637
        %v1124 = vpop.f32.mrf.mxu0
        %v1125 = vadd.f32 %v1060, %v1124
        %1126 = vmatmul.f32.gmra.mxu0 %v638
        %v1127 = vpop.f32.mrf.mxu0
        %v1128 = vadd.f32 %v1063, %v1127
        %1129 = vdwg.mxu0
        %s1130 = scalar_lea.vmem [#allocation7], 768
        %v1131 = vld [vmem:[%s1130] sm:$0xff]
        %v1132 = vld [vmem:[%s1130 + $0x8] sm:$0xff]
        %v1133 = vld [vmem:[%s1130 + $0x10] sm:$0xff]
        %v1134 = vld [vmem:[%s1130 + $0x18] sm:$0xff]
        %v1135 = vld [vmem:[%s1130 + $0x20] sm:$0xff]
        %v1136 = vld [vmem:[%s1130 + $0x28] sm:$0xff]
        %v1137 = vld [vmem:[%s1130 + $0x30] sm:$0xff]
        %v1138 = vld [vmem:[%s1130 + $0x38] sm:$0xff]
        %v1139 = vld [vmem:[%s1130 + $0x40] sm:$0xff]
        %v1140 = vld [vmem:[%s1130 + $0x48] sm:$0xff]
        %v1141 = vld [vmem:[%s1130 + $0x50] sm:$0xff]
        %v1142 = vld [vmem:[%s1130 + $0x58] sm:$0xff]
        %v1143 = vld [vmem:[%s1130 + $0x60] sm:$0xff]
        %v1144 = vld [vmem:[%s1130 + $0x68] sm:$0xff]
        %v1145 = vld [vmem:[%s1130 + $0x70] sm:$0xff]
        %v1146 = vld [vmem:[%s1130 + $0x78] sm:$0xff]
        %v1147 = vld [vmem:[%s1130 + $0x80] sm:$0xff]
        %v1148 = vld [vmem:[%s1130 + $0x88] sm:$0xff]
        %v1149 = vld [vmem:[%s1130 + $0x90] sm:$0xff]
        %v1150 = vld [vmem:[%s1130 + $0x98] sm:$0xff]
        %v1151 = vld [vmem:[%s1130 + $0xa0] sm:$0xff]
        %v1152 = vld [vmem:[%s1130 + $0xa8] sm:$0xff]
        %v1153 = vld [vmem:[%s1130 + $0xb0] sm:$0xff]
        %v1154 = vld [vmem:[%s1130 + $0xb8] sm:$0xff]
        %v1155 = vld [vmem:[%s1130 + $0xc0] sm:$0xff]
        %v1156 = vld [vmem:[%s1130 + $0xc8] sm:$0xff]
        %v1157 = vld [vmem:[%s1130 + $0xd0] sm:$0xff]
        %v1158 = vld [vmem:[%s1130 + $0xd8] sm:$0xff]
        %v1159 = vld [vmem:[%s1130 + $0xe0] sm:$0xff]
        %v1160 = vld [vmem:[%s1130 + $0xe8] sm:$0xff]
        %v1161 = vld [vmem:[%s1130 + $0xf0] sm:$0xff]
        %v1162 = vld [vmem:[%s1130 + $0xf8] sm:$0xff]
        %v1163 = vld [vmem:[%s1130 + $0x100] sm:$0xff]
        %v1164 = vld [vmem:[%s1130 + $0x108] sm:$0xff]
        %v1165 = vld [vmem:[%s1130 + $0x110] sm:$0xff]
        %v1166 = vld [vmem:[%s1130 + $0x118] sm:$0xff]
        %v1167 = vld [vmem:[%s1130 + $0x120] sm:$0xff]
        %v1168 = vld [vmem:[%s1130 + $0x128] sm:$0xff]
        %v1169 = vld [vmem:[%s1130 + $0x130] sm:$0xff]
        %v1170 = vld [vmem:[%s1130 + $0x138] sm:$0xff]
        %v1171 = vld [vmem:[%s1130 + $0x140] sm:$0xff]
        %v1172 = vld [vmem:[%s1130 + $0x148] sm:$0xff]
        %v1173 = vld [vmem:[%s1130 + $0x150] sm:$0xff]
        %v1174 = vld [vmem:[%s1130 + $0x158] sm:$0xff]
        %v1175 = vld [vmem:[%s1130 + $0x160] sm:$0xff]
        %v1176 = vld [vmem:[%s1130 + $0x168] sm:$0xff]
        %v1177 = vld [vmem:[%s1130 + $0x170] sm:$0xff]
        %v1178 = vld [vmem:[%s1130 + $0x178] sm:$0xff]
        %1179 = vmatpush.msra.mxu0 %v1146
        %1180 = vmatpush.msra.mxu0 %v1145
        %1181 = vmatpush.msra.mxu0 %v1144
        %1182 = vmatpush.msra.mxu0 %v1143
        %1183 = vmatpush.msra.mxu0 %v1142
        %1184 = vmatpush.msra.mxu0 %v1141
        %1185 = vmatpush.msra.mxu0 %v1140
        %1186 = vmatpush.msra.mxu0 %v1139
        %1187 = vmatpush.msra.mxu0 %v1138
        %1188 = vmatpush.msra.mxu0 %v1137
        %1189 = vmatpush.msra.mxu0 %v1136
        %1190 = vmatpush.msra.mxu0 %v1135
        %1191 = vmatpush.msra.mxu0 %v1134
        %1192 = vmatpush.msra.mxu0 %v1133
        %1193 = vmatpush.msra.mxu0 %v1132
        %1194 = vmatpush.msra.mxu0 %v1131
        %1195 = vmatmul.f32.gmra.mxu0 %v560
        %v1196 = vpop.f32.mrf.mxu0
        %v1197 = vadd.f32 0.0, %v1196
        %1198 = vmatmul.f32.gmra.mxu0 %v561
        %v1199 = vpop.f32.mrf.mxu0
        %v1200 = vadd.f32 0.0, %v1199
        %1201 = vmatmul.f32.gmra.mxu0 %v562
        %v1202 = vpop.f32.mrf.mxu0
        %v1203 = vadd.f32 0.0, %v1202
        %1204 = vmatmul.f32.gmra.mxu0 %v563
        %v1205 = vpop.f32.mrf.mxu0
        %v1206 = vadd.f32 0.0, %v1205
        %1207 = vmatmul.f32.gmra.mxu0 %v564
        %v1208 = vpop.f32.mrf.mxu0
        %v1209 = vadd.f32 0.0, %v1208
        %1210 = vmatmul.f32.gmra.mxu0 %v565
        %v1211 = vpop.f32.mrf.mxu0
        %v1212 = vadd.f32 0.0, %v1211
        %1213 = vmatmul.f32.gmra.mxu0 %v566
        %v1214 = vpop.f32.mrf.mxu0
        %v1215 = vadd.f32 0.0, %v1214
        %1216 = vmatmul.f32.gmra.mxu0 %v567
        %v1217 = vpop.f32.mrf.mxu0
        %v1218 = vadd.f32 0.0, %v1217
        %1219 = vmatmul.f32.gmra.mxu0 %v568
        %v1220 = vpop.f32.mrf.mxu0
        %v1221 = vadd.f32 0.0, %v1220
        %1222 = vmatmul.f32.gmra.mxu0 %v569
        %v1223 = vpop.f32.mrf.mxu0
        %v1224 = vadd.f32 0.0, %v1223
        %1225 = vmatmul.f32.gmra.mxu0 %v570
        %v1226 = vpop.f32.mrf.mxu0
        %v1227 = vadd.f32 0.0, %v1226
        %1228 = vmatmul.f32.gmra.mxu0 %v571
        %v1229 = vpop.f32.mrf.mxu0
        %v1230 = vadd.f32 0.0, %v1229
        %1231 = vmatmul.f32.gmra.mxu0 %v572
        %v1232 = vpop.f32.mrf.mxu0
        %v1233 = vadd.f32 0.0, %v1232
        %1234 = vmatmul.f32.gmra.mxu0 %v573
        %v1235 = vpop.f32.mrf.mxu0
        %v1236 = vadd.f32 0.0, %v1235
        %1237 = vmatmul.f32.gmra.mxu0 %v574
        %v1238 = vpop.f32.mrf.mxu0
        %v1239 = vadd.f32 0.0, %v1238
        %1240 = vmatmul.f32.gmra.mxu0 %v575
        %v1241 = vpop.f32.mrf.mxu0
        %v1242 = vadd.f32 0.0, %v1241
        %1243 = vdwg.mxu0
        %1244 = vmatpush.msra.mxu0 %v1162
        %1245 = vmatpush.msra.mxu0 %v1161
        %1246 = vmatpush.msra.mxu0 %v1160
        %1247 = vmatpush.msra.mxu0 %v1159
        %1248 = vmatpush.msra.mxu0 %v1158
        %1249 = vmatpush.msra.mxu0 %v1157
        %1250 = vmatpush.msra.mxu0 %v1156
        %1251 = vmatpush.msra.mxu0 %v1155
        %1252 = vmatpush.msra.mxu0 %v1154
        %1253 = vmatpush.msra.mxu0 %v1153
        %1254 = vmatpush.msra.mxu0 %v1152
        %1255 = vmatpush.msra.mxu0 %v1151
        %1256 = vmatpush.msra.mxu0 %v1150
        %1257 = vmatpush.msra.mxu0 %v1149
        %1258 = vmatpush.msra.mxu0 %v1148
        %1259 = vmatpush.msra.mxu0 %v1147
        %1260 = vmatmul.f32.gmra.mxu0 %v493
        %v1261 = vpop.f32.mrf.mxu0
        %v1262 = vadd.f32 %v1197, %v1261
        %1263 = vmatmul.f32.gmra.mxu0 %v494
        %v1264 = vpop.f32.mrf.mxu0
        %v1265 = vadd.f32 %v1200, %v1264
        %1266 = vmatmul.f32.gmra.mxu0 %v495
        %v1267 = vpop.f32.mrf.mxu0
        %v1268 = vadd.f32 %v1203, %v1267
        %1269 = vmatmul.f32.gmra.mxu0 %v496
        %v1270 = vpop.f32.mrf.mxu0
        %v1271 = vadd.f32 %v1206, %v1270
        %1272 = vmatmul.f32.gmra.mxu0 %v497
        %v1273 = vpop.f32.mrf.mxu0
        %v1274 = vadd.f32 %v1209, %v1273
        %1275 = vmatmul.f32.gmra.mxu0 %v498
        %v1276 = vpop.f32.mrf.mxu0
        %v1277 = vadd.f32 %v1212, %v1276
        %1278 = vmatmul.f32.gmra.mxu0 %v499
        %v1279 = vpop.f32.mrf.mxu0
        %v1280 = vadd.f32 %v1215, %v1279
        %1281 = vmatmul.f32.gmra.mxu0 %v500
        %v1282 = vpop.f32.mrf.mxu0
        %v1283 = vadd.f32 %v1218, %v1282
        %1284 = vmatmul.f32.gmra.mxu0 %v501
        %v1285 = vpop.f32.mrf.mxu0
        %v1286 = vadd.f32 %v1221, %v1285
        %1287 = vmatmul.f32.gmra.mxu0 %v502
        %v1288 = vpop.f32.mrf.mxu0
        %v1289 = vadd.f32 %v1224, %v1288
        %1290 = vmatmul.f32.gmra.mxu0 %v503
        %v1291 = vpop.f32.mrf.mxu0
        %v1292 = vadd.f32 %v1227, %v1291
        %1293 = vmatmul.f32.gmra.mxu0 %v504
        %v1294 = vpop.f32.mrf.mxu0
        %v1295 = vadd.f32 %v1230, %v1294
        %1296 = vmatmul.f32.gmra.mxu0 %v505
        %v1297 = vpop.f32.mrf.mxu0
        %v1298 = vadd.f32 %v1233, %v1297
        %1299 = vmatmul.f32.gmra.mxu0 %v506
        %v1300 = vpop.f32.mrf.mxu0
        %v1301 = vadd.f32 %v1236, %v1300
        %1302 = vmatmul.f32.gmra.mxu0 %v507
        %v1303 = vpop.f32.mrf.mxu0
        %v1304 = vadd.f32 %v1239, %v1303
        %1305 = vmatmul.f32.gmra.mxu0 %v508
        %v1306 = vpop.f32.mrf.mxu0
        %v1307 = vadd.f32 %v1242, %v1306
        %1308 = vdwg.mxu0
        %1309 = vmatpush.msra.mxu0 %v1178
        %1310 = vmatpush.msra.mxu0 %v1177
        %1311 = vmatpush.msra.mxu0 %v1176
        %1312 = vmatpush.msra.mxu0 %v1175
        %1313 = vmatpush.msra.mxu0 %v1174
        %1314 = vmatpush.msra.mxu0 %v1173
        %1315 = vmatpush.msra.mxu0 %v1172
        %1316 = vmatpush.msra.mxu0 %v1171
        %1317 = vmatpush.msra.mxu0 %v1170
        %1318 = vmatpush.msra.mxu0 %v1169
        %1319 = vmatpush.msra.mxu0 %v1168
        %1320 = vmatpush.msra.mxu0 %v1167
        %1321 = vmatpush.msra.mxu0 %v1166
        %1322 = vmatpush.msra.mxu0 %v1165
        %1323 = vmatpush.msra.mxu0 %v1164
        %1324 = vmatpush.msra.mxu0 %v1163
        %1325 = vmatmul.f32.gmra.mxu0 %v627
        %v1326 = vpop.f32.mrf.mxu0
        %v1327 = vadd.f32 %v1262, %v1326
        %1328 = vmatmul.f32.gmra.mxu0 %v628
        %v1329 = vpop.f32.mrf.mxu0
        %v1330 = vadd.f32 %v1265, %v1329
        %1331 = vmatmul.f32.gmra.mxu0 %v629
        %v1332 = vpop.f32.mrf.mxu0
        %v1333 = vadd.f32 %v1268, %v1332
        %1334 = vmatmul.f32.gmra.mxu0 %v630
        %v1335 = vpop.f32.mrf.mxu0
        %v1336 = vadd.f32 %v1271, %v1335
        %1337 = vmatmul.f32.gmra.mxu0 %v631
        %v1338 = vpop.f32.mrf.mxu0
        %v1339 = vadd.f32 %v1274, %v1338
        %1340 = vmatmul.f32.gmra.mxu0 %v632
        %v1341 = vpop.f32.mrf.mxu0
        %v1342 = vadd.f32 %v1277, %v1341
        %1343 = vmatmul.f32.gmra.mxu0 %v633
        %v1344 = vpop.f32.mrf.mxu0
        %v1345 = vadd.f32 %v1280, %v1344
        %1346 = vmatmul.f32.gmra.mxu0 %v634
        %v1347 = vpop.f32.mrf.mxu0
        %v1348 = vadd.f32 %v1283, %v1347
        %1349 = vmatmul.f32.gmra.mxu0 %v635
        %v1350 = vpop.f32.mrf.mxu0
        %v1351 = vadd.f32 %v1286, %v1350
        %1352 = vmatmul.f32.gmra.mxu0 %v636
        %v1353 = vpop.f32.mrf.mxu0
        %v1354 = vadd.f32 %v1289, %v1353
        %1355 = vmatmul.f32.gmra.mxu0 %v637
        %v1356 = vpop.f32.mrf.mxu0
        %v1357 = vadd.f32 %v1292, %v1356
        %1358 = vmatmul.f32.gmra.mxu0 %v638
        %v1359 = vpop.f32.mrf.mxu0
        %v1360 = vadd.f32 %v1295, %v1359
        %1361 = vmatmul.f32.gmra.mxu0 %v639
        %v1362 = vpop.f32.mrf.mxu0
        %v1363 = vadd.f32 %v1298, %v1362
        %1364 = vmatmul.f32.gmra.mxu0 %v640
        %v1365 = vpop.f32.mrf.mxu0
        %v1366 = vadd.f32 %v1301, %v1365
        %1367 = vmatmul.f32.gmra.mxu0 %v641
        %v1368 = vpop.f32.mrf.mxu0
        %v1369 = vadd.f32 %v1304, %v1368
        %1370 = vmatmul.f32.gmra.mxu0 %v642
        %v1371 = vpop.f32.mrf.mxu0
        %v1372 = vadd.f32 %v1307, %v1371
        %1373 = vdwg.mxu0
        %v1374 = vadd.f32 %v1083, %v1327
        %v1375 = vadd.f32 %v1086, %v1330
        %v1376 = vadd.f32 %v1089, %v1333
        %v1377 = vadd.f32 %v1092, %v1336
        %v1378 = vadd.f32 %v1095, %v1339
        %v1379 = vadd.f32 %v1098, %v1342
        %v1380 = vadd.f32 %v1101, %v1345
        %v1381 = vadd.f32 %v1104, %v1348
        %v1382 = vadd.f32 %v1107, %v1351
        %v1383 = vadd.f32 %v1110, %v1354
        %v1384 = vadd.f32 %v1113, %v1357
        %v1385 = vadd.f32 %v1116, %v1360
        %v1386 = vadd.f32 %v1119, %v1363
        %v1387 = vadd.f32 %v1122, %v1366
        %v1388 = vadd.f32 %v1125, %v1369
        %v1389 = vadd.f32 %v1128, %v1372
        %v1390 = vld [vmem:[%s4] sm:$0x1]
        %v1392 = vperm.slane %v1390, 0
        %v1394 = vadd.f32 %v1374, %v1392
        %v1395 = vadd.f32 %v1375, %v1392
        %v1396 = vadd.f32 %v1376, %v1392
        %v1397 = vadd.f32 %v1377, %v1392
        %v1398 = vadd.f32 %v1378, %v1392
        %v1399 = vadd.f32 %v1379, %v1392
        %v1400 = vadd.f32 %v1380, %v1392
        %v1401 = vadd.f32 %v1381, %v1392
        %v1402 = vadd.f32 %v1382, %v1392
        %v1403 = vadd.f32 %v1383, %v1392
        %v1404 = vadd.f32 %v1384, %v1392
        %v1405 = vadd.f32 %v1385, %v1392
        %v1406 = vadd.f32 %v1386, %v1392
        %v1407 = vadd.f32 %v1387, %v1392
        %v1408 = vadd.f32 %v1388, %v1392
        %v1409 = vadd.f32 %v1389, %v1392
        %vm1410 = vcmp.gt.f32.partialorder %v1394, 0.0
        %vm1411 = vcmp.gt.f32.partialorder %v1395, 0.0
        %vm1412 = vcmp.gt.f32.partialorder %v1396, 0.0
        %vm1413 = vcmp.gt.f32.partialorder %v1397, 0.0
        %vm1414 = vcmp.gt.f32.partialorder %v1398, 0.0
        %vm1415 = vcmp.gt.f32.partialorder %v1399, 0.0
        %vm1416 = vcmp.gt.f32.partialorder %v1400, 0.0
        %vm1417 = vcmp.gt.f32.partialorder %v1401, 0.0
        %vm1418 = vcmp.gt.f32.partialorder %v1402, 0.0
        %vm1419 = vcmp.gt.f32.partialorder %v1403, 0.0
        %vm1420 = vcmp.gt.f32.partialorder %v1404, 0.0
        %vm1421 = vcmp.gt.f32.partialorder %v1405, 0.0
        %vm1422 = vcmp.gt.f32.partialorder %v1406, 0.0
        %vm1423 = vcmp.gt.f32.partialorder %v1407, 0.0
        %vm1424 = vcmp.gt.f32.partialorder %v1408, 0.0
        %vm1425 = vcmp.gt.f32.partialorder %v1409, 0.0
        %v1426 = vmul.f32 %v1394, 0.1
        %v1427 = vmul.f32 %v1395, 0.1
        %v1428 = vmul.f32 %v1396, 0.1
        %v1429 = vmul.f32 %v1397, 0.1
        %v1430 = vmul.f32 %v1398, 0.1
        %v1431 = vmul.f32 %v1399, 0.1
        %v1432 = vmul.f32 %v1400, 0.1
        %v1433 = vmul.f32 %v1401, 0.1
        %v1434 = vmul.f32 %v1402, 0.1
        %v1435 = vmul.f32 %v1403, 0.1
        %v1436 = vmul.f32 %v1404, 0.1
        %v1437 = vmul.f32 %v1405, 0.1
        %v1438 = vmul.f32 %v1406, 0.1
        %v1439 = vmul.f32 %v1407, 0.1
        %v1440 = vmul.f32 %v1408, 0.1
        %v1441 = vmul.f32 %v1409, 0.1
        %v1442 = vsel %vm1410, %v1394, %v1426
        %v1443 = vsel %vm1411, %v1395, %v1427
        %v1444 = vsel %vm1412, %v1396, %v1428
        %v1445 = vsel %vm1413, %v1397, %v1429
        %v1446 = vsel %vm1414, %v1398, %v1430
        %v1447 = vsel %vm1415, %v1399, %v1431
        %v1448 = vsel %vm1416, %v1400, %v1432
        %v1449 = vsel %vm1417, %v1401, %v1433
        %v1450 = vsel %vm1418, %v1402, %v1434
        %v1451 = vsel %vm1419, %v1403, %v1435
        %v1452 = vsel %vm1420, %v1404, %v1436
        %v1453 = vsel %vm1421, %v1405, %v1437
        %v1454 = vsel %vm1422, %v1406, %v1438
        %v1455 = vsel %vm1423, %v1407, %v1439
        %v1456 = vsel %vm1424, %v1408, %v1440
        %v1457 = vsel %vm1425, %v1409, %v1441
        %v1458 = vadd.f32 %v1442, %v250
        %v1459 = vadd.f32 %v1443, %v251
        %v1460 = vadd.f32 %v1444, %v252
        %v1461 = vadd.f32 %v1445, %v253
        %v1462 = vadd.f32 %v1446, %v254
        %v1463 = vadd.f32 %v1447, %v255
        %v1464 = vadd.f32 %v1448, %v256
        %v1465 = vadd.f32 %v1449, %v257
        %v1466 = vadd.f32 %v1450, %v258
        %v1467 = vadd.f32 %v1451, %v259
        %v1468 = vadd.f32 %v1452, %v260
        %v1469 = vadd.f32 %v1453, %v261
        %v1470 = vadd.f32 %v1454, %v262
        %v1471 = vadd.f32 %v1455, %v263
        %v1472 = vadd.f32 %v1456, %v264
        %v1473 = vadd.f32 %v1457, %v265
        %1474 = vst [vmem:[%s224] sm:$0xff] %v1458
        %1475 = vst [vmem:[%s224 + $0x8] sm:$0xff] %v1459
        %1476 = vst [vmem:[%s224 + $0x10] sm:$0xff] %v1460
        %1477 = vst [vmem:[%s224 + $0x18] sm:$0xff] %v1461
        %1478 = vst [vmem:[%s224 + $0x20] sm:$0xff] %v1462
        %1479 = vst [vmem:[%s224 + $0x28] sm:$0xff] %v1463
        %1480 = vst [vmem:[%s224 + $0x30] sm:$0xff] %v1464
        %1481 = vst [vmem:[%s224 + $0x38] sm:$0xff] %v1465
        %1482 = vst [vmem:[%s224 + $0x40] sm:$0xff] %v1466
        %1483 = vst [vmem:[%s224 + $0x48] sm:$0xff] %v1467
        %1484 = vst [vmem:[%s224 + $0x50] sm:$0xff] %v1468
        %1485 = vst [vmem:[%s224 + $0x58] sm:$0xff] %v1469
        %1486 = vst [vmem:[%s224 + $0x60] sm:$0xff] %v1470
        %1487 = vst [vmem:[%s224 + $0x68] sm:$0xff] %v1471
        %1488 = vst [vmem:[%s224 + $0x70] sm:$0xff] %v1472
        %1489 = vst [vmem:[%s224 + $0x78] sm:$0xff] %v1473
        %s1490 = sand.u32 %s127, 1
        %s1491 = scalar_lea.sflag [#allocation6], %s1490
        %s1492 = sand.u32 %s127, 1
        %s1493 = smul.addr %s1492, 128
        %s1494 = scalar_lea.vmem [#allocation9], %s1493
        // Predicated region
        $region49: #{tpu_custom_call.1} parent=35 // pred_check
          %p1495 = pneg %p137
        $region50: #{tpu_custom_call.1} parent=35 // pred_check_branch
          %1497 = sbr.rel (%p1495) target = $region52
        $region51: #{tpu_custom_call.1} parent=35 // pred_region
          %s1498 = smul.u32 8, %s26
          %1500 = vsyncadd %s1491, 0
          %s1501 = smul.addr %s1498, 2
          %s1502 = smul.addr %s25, 32
          %s1503 = sadd.s32 %s1501, %s1502
          %s1504 = smul.addr %s1503, 8
          %s1505 = scalar_lea.hbm %s5, %s1504
          %s1506 = sshll.u32 %s1494, 4
          %s1507 = int_to_ptr.vmem [resolvable:$true] %s1506
          %s1508 = sshll.u32 %s1505, 4
          %s1509 = int_to_ptr.hbm [resolvable:$true] %s1508
          %1514 = dma.vmem_to_hbm [thread:$0]  %s1507, 2048, %s1509, %s1491, 128, 128, 8
        $region52: #{tpu_custom_call.1} parent=35 // pred_fallthru
          _
      $region36: #{tpu_custom_call.1} parent=5 // pred_fallthru
        _
      %p1515 = scmp.le.s32.totalorder 2, %s16
      // Predicated region
      $region53: #{tpu_custom_call.1} parent=5 // pred_check
        %p1516 = pneg %p1515
      $region54: #{tpu_custom_call.1} parent=5 // pred_check_branch
        %1518 = sbr.rel (%p1516) target = $region56
      $region55: #{tpu_custom_call.1} parent=5 // pred_region
        %s1519 = ssub.s32 %s16, 2
        // Predicated region
        $region57: #{tpu_custom_call.1} parent=55 // pred_check
          %p1520 = pneg %p143
        $region58: #{tpu_custom_call.1} parent=55 // pred_check_branch
          %1522 = sbr.rel (%p1520) target = $region60
        $region59: #{tpu_custom_call.1} parent=55 // pred_region
          %s1523 = sand.u32 %s128, 1
          %s1524 = scalar_lea.sflag [#allocation6], %s1523
          %s1525 = sand.u32 %s128, 1
          %s1526 = smul.addr %s1525, 128
          %s1527 = scalar_lea.vmem [#allocation9], %s1526
          %1529 = dma.done %s1524, 2048
        $region60: #{tpu_custom_call.1} parent=55 // pred_fallthru
          _
      $region56: #{tpu_custom_call.1} parent=5 // pred_fallthru
        _
    $region6: #{tpu_custom_call.1} parent=1 // loop_footer
      %s20 = sadd.s32 1, %s16
    $region7: #{tpu_custom_call.1} parent=1 // loop_footer_branch
      %15 = sbr.rel target = $region3
    $region8: #{tpu_custom_call.1} parent=1 // loop_exit
      _
    %1530 = vsyncpa [#allocation5], 1
    %s1531 = scalar_lea.sflag [#allocation5], 1
    %1532 = vsyncpa %s1531, 1
    %1533 = vsyncpa [#allocation8], 1
    %1534 = vsyncpa [#allocation6], 1
    %s1535 = scalar_lea.sflag [#allocation6], 1
    %1536 = vsyncpa %s1535, 1
  %1537 = vsyncmov [#allocation3]
  %s1538 = vpop.sfrf %1537
  %p1539 = scmp.eq.s32.totalorder %s1538, 0
  %p1540 = pneg %p1539
  %1542 = shalt.err (%p1540)

// kernel: tpu_custom_call.1
$region0: #{tpu_custom_call.1}
  #allocation0 [shape = 'u32[]', space=smem, size = 0x4, offset = 0x4, fixed_abs, tag = 'smem constant byte address 0x4 - core index']
  #allocation1 [shape = 'u32[72,128]{1,0:T(1,128)}', space=vmem, size = 0x9000, scoped, tag = 'internal scratch']
  #allocation2 [shape = 'f32[10,16,128]{2,1,0:T(8,128)}', space=vmem, size = 0x14000, scoped, tag = 'scratch operand']
  #allocation3 [shape = 's32[1]{0}', space=sflag, size = 0x4, scoped, tag = 'scratch operand']
  #allocation10 [shape = 's32[]', space=sflag, size = 0x4, offset = 0, fixed_abs, tag = 'sflag constant byte address 0x0 - dummy sync flag']
  #allocation11 [shape = 's32[]', space=sflag, size = 0x4, offset = 0, fixed_abs, tag = 'sflag constant byte address 0x0 - dummy sync flag']
  #allocation12 [shape = 'u32[]', space=smem, size = 0x4, offset = 0x44, fixed_abs, tag = 'smem constant byte address 0x44 - assertion arg 0']
  #allocation13 [shape = 'u32[]', space=smem, size = 0x4, offset = 0x48, fixed_abs, tag = 'smem constant byte address 0x48 - assertion arg 1']
  %s0 = inlined_call_operand.hbm [shape: f32[2,18,16,128], index: 0, kind: input, shape index: {}]
  %s1 = inlined_call_operand.hbm [shape: f32[128,128], index: 1, kind: input, shape index: {}]
  %s2 = inlined_call_operand.vmem [shape: f32[1,128], index: 2, kind: input, shape index: {}]
  %s3 = inlined_call_operand.hbm [shape: f32[3,384,128], index: 3, kind: input, shape index: {}]
  %s4 = inlined_call_operand.vmem [shape: f32[1,128], index: 4, kind: input, shape index: {}]
  %s5 = inlined_call_operand.hbm [shape: f32[2,16,16,128], index: 5, kind: output, shape index: {}]
  %s6 = sld [smem:[#allocation0]]
  $region61: #{tpu_custom_call.1} parent=0
    _
  %s8 = ssub.s32 1, %s6
  %s9 = scalar_select 0, %s8, %s6
  $region1: #{tpu_custom_call.1} parent=0
    #allocation4 [shape = 'u8[65536]{0}', space=vmem, size = 0x10000, scoped, tag = 'input window, operand 1, single buffered']
    #allocation5 [shape = 's32[2]{0}', space=sflag, size = 0x8, scoped, tag = 'scoped memory for tpu_custom_call.1']
    #allocation6 [shape = 's32[2]{0}', space=sflag, size = 0x8, scoped, tag = 'scoped memory for tpu_custom_call.1']
    #allocation7 [shape = 'u8[589824]{0}', space=vmem, size = 0x90000, scoped, tag = 'input window, operand 3, single buffered']
    #allocation8 [shape = 's32[1]{0}', space=sflag, size = 0x4, scoped, tag = 'scoped memory for tpu_custom_call.1']
    #allocation9 [shape = 'u8[131072]{0}', space=vmem, size = 0x20000, scoped, tag = 'output window, operand 0']
    %10 = vsyncpa [#allocation5], 0
    %11 = vsyncpa [#allocation8], 0
    %12 = vsyncpa [#allocation6], 0
    %s13 = scalar_lea.sflag [#allocation6], 1
    %14 = vsyncpa %s13, 0
    loop: start=0, step=1, limit=6
    $region2: #{tpu_custom_call.1} parent=1 // loop_pre_header
      _
    $region3: #{tpu_custom_call.1} parent=1 // loop_header
      %s16 = sphi 0, %s20
      %p17 = scmp.ge.s32.totalorder %s16, 6
      %s23 = sphi 0, %s35
      %s24 = sphi 0, %s31
      %s25 = sphi 0, %s23
      %s26 = sphi 0, %s24
      %s27 = sphi 0, %s25
      %s28 = sphi 0, %s26
      %s36 = sphi 0, %s36
      %s38 = sphi 0, %s36
      %s39 = sphi 0, %s38
      %s53 = sphi 0, %s39
      %s57 = sphi 0, %s57
      %s59 = sphi 0, %s57
      %s60 = sphi 0, %s59
      %s74 = sphi 0, %s60
      %s78 = sphi 0, %s78
      %s80 = sphi 0, %s78
      %s81 = sphi 0, %s80
      %s95 = sphi 0, %s81
      %s99 = sphi 0, %s99
      %s101 = sphi 0, %s99
      %s102 = sphi 0, %s101
      %s116 = sphi 0, %s102
      %s124 = sphi 0, %s126
      %s127 = sphi 0, %s124
      %s128 = sphi 0, %s127
      %s144 = sphi 0, %s128
    $region4: #{tpu_custom_call.1} parent=1 // loop_header_branch
      %19 = sbr.rel (%p17) target = $region8
    $region5: #{tpu_custom_call.1} parent=1 // loop_body
      %s21 = ssub.s32 %s16, 1
      %s22 = ssub.s32 %s16, 2
      %s29 = sadd.s32 1, %s24
      %p30 = scmp.ge.s32.totalorder %s29, 2
      %s31 = scalar_select %p30, 0, %s29
      %s32 = sadd.s32 1, %s23
      %s33 = scalar_select %p30, %s32, %s23
      %p34 = scmp.ge.s32.totalorder %s33, 2
      %s35 = scalar_select %p34, 0, %s33
      %s37 = sadd.s32 %s36, 1
      %p40 = scmp.eq.s32.totalorder %s16, 3
      %p41 = scmp.ne.s32.totalorder %s36, %s38
      %p42 = scmp.eq.s32.totalorder %s16, 0
      %p43 = por %p41, %p42
      %p44 = scmp.ne.s32.totalorder %s36, %s38
      %p45 = scmp.eq.s32.totalorder %s21, 3
      %p46 = por %p44, %p45
      %p47 = scmp.ne.s32.totalorder %s38, %s39
      %p48 = scmp.eq.s32.totalorder %s21, 0
      %p49 = por %p47, %p48
      %p50 = scmp.ne.s32.totalorder %s38, %s39
      %p51 = scmp.eq.s32.totalorder %s22, 3
      %p52 = por %p50, %p51
      %p54 = scmp.ne.s32.totalorder %s39, %s53
      %p55 = scmp.eq.s32.totalorder %s22, 0
      %p56 = por %p54, %p55
      %s58 = sadd.s32 %s57, 1
      %p61 = scmp.eq.s32.totalorder %s16, 3
      %p62 = scmp.ne.s32.totalorder %s57, %s59
      %p63 = scmp.eq.s32.totalorder %s16, 0
      %p64 = por %p62, %p63
      %p65 = scmp.ne.s32.totalorder %s57, %s59
      %p66 = scmp.eq.s32.totalorder %s21, 3
      %p67 = por %p65, %p66
      %p68 = scmp.ne.s32.totalorder %s59, %s60
      %p69 = scmp.eq.s32.totalorder %s21, 0
      %p70 = por %p68, %p69
      %p71 = scmp.ne.s32.totalorder %s59, %s60
      %p72 = scmp.eq.s32.totalorder %s22, 3
      %p73 = por %p71, %p72
      %p75 = scmp.ne.s32.totalorder %s60, %s74
      %p76 = scmp.eq.s32.totalorder %s22, 0
      %p77 = por %p75, %p76
      %s79 = sadd.s32 %s78, 1
      %p82 = scmp.eq.s32.totalorder %s16, 3
      %p83 = scmp.ne.s32.totalorder %s78, %s80
      %p84 = scmp.eq.s32.totalorder %s16, 0
      %p85 = por %p83, %p84
      %p86 = scmp.ne.s32.totalorder %s78, %s80
      %p87 = scmp.eq.s32.totalorder %s21, 3
      %p88 = por %p86, %p87
      %p89 = scmp.ne.s32.totalorder %s80, %s81
      %p90 = scmp.eq.s32.totalorder %s21, 0
      %p91 = por %p89, %p90
      %p92 = scmp.ne.s32.totalorder %s80, %s81
      %p93 = scmp.eq.s32.totalorder %s22, 3
      %p94 = por %p92, %p93
      %p96 = scmp.ne.s32.totalorder %s81, %s95
      %p97 = scmp.eq.s32.totalorder %s22, 0
      %p98 = por %p96, %p97
      %s100 = sadd.s32 %s99, 1
      %p103 = scmp.eq.s32.totalorder %s16, 3
      %p104 = scmp.ne.s32.totalorder %s99, %s101
      %p105 = scmp.eq.s32.totalorder %s16, 0
      %p106 = por %p104, %p105
      %p107 = scmp.ne.s32.totalorder %s99, %s101
      %p108 = scmp.eq.s32.totalorder %s21, 3
      %p109 = por %p107, %p108
      %p110 = scmp.ne.s32.totalorder %s101, %s102
      %p111 = scmp.eq.s32.totalorder %s21, 0
      %p112 = por %p110, %p111
      %p113 = scmp.ne.s32.totalorder %s101, %s102
      %p114 = scmp.eq.s32.totalorder %s22, 3
      %p115 = por %p113, %p114
      %p117 = scmp.ne.s32.totalorder %s102, %s116
      %p118 = scmp.eq.s32.totalorder %s22, 0
      %p119 = por %p117, %p118
      %s120 = ssub.s32 %s23, %s35
      %s121 = ssub.s32 %s24, %s31
      %s122 = sor.u32 %s120, %s121
      %p123 = scmp.eq.s32.totalorder %s122, 0
      %s125 = sadd.s32 %s124, 1
      %s126 = scalar_select %p123, %s124, %s125
      %p129 = pneg %p123
      %p130 = scmp.eq.s32.totalorder %s16, 3
      %p131 = por %p129, %p130
      %p132 = scmp.ne.s32.totalorder %s124, %s127
      %p133 = scmp.eq.s32.totalorder %s16, 0
      %p134 = por %p132, %p133
      %p135 = scmp.ne.s32.totalorder %s124, %s127
      %p136 = scmp.eq.s32.totalorder %s21, 3
      %p137 = por %p135, %p136
      %p138 = scmp.ne.s32.totalorder %s127, %s128
      %p139 = scmp.eq.s32.totalorder %s21, 0
      %p140 = por %p138, %p139
      %p141 = scmp.ne.s32.totalorder %s127, %s128
      %p142 = scmp.eq.s32.totalorder %s22, 3
      %p143 = por %p141, %p142
      %p145 = scmp.ne.s32.totalorder %s128, %s144
      %p146 = scmp.eq.s32.totalorder %s22, 0
      %p147 = por %p145, %p146
      %p148 = scmp.le.s32.totalorder 1, %s16
      %p149 = scmp.lt.s32.totalorder %s16, 5
      %p150 = pnand %p148, %p149
      %p151 = pneg %p150
      // Predicated region
      $region9: #{tpu_custom_call.1} parent=5 // pred_check
        _
      $region10: #{tpu_custom_call.1} parent=5 // pred_check_branch
        %153 = sbr.rel (%p150) target = $region12
      $region11: #{tpu_custom_call.1} parent=5 // pred_region
        %s154 = ssub.s32 %s16, 1
        // Predicated region
        $region13: #{tpu_custom_call.1} parent=11 // pred_check
          %p155 = pneg %p49
        $region14: #{tpu_custom_call.1} parent=11 // pred_check_branch
          %157 = sbr.rel (%p155) target = $region16
        $region15: #{tpu_custom_call.1} parent=11 // pred_region
          %159 = vsyncadd [#allocation5], 0
          %s160 = sshll.u32 %s1, 4
          %s161 = int_to_ptr.hbm [resolvable:$true] %s160
          %s162 = sshll.u32 [#allocation4], 4
          %s163 = int_to_ptr.vmem [resolvable:$true] %s162
          %168 = dma.hbm_to_vmem [thread:$0]  %s161, 2048, %s163, [#allocation5], 128, 128, 8
        $region16: #{tpu_custom_call.1} parent=11 // pred_fallthru
          _
        // Predicated region
        $region17: #{tpu_custom_call.1} parent=11 // pred_check
          %p169 = pneg %p70
        $region18: #{tpu_custom_call.1} parent=11 // pred_check_branch
          %171 = sbr.rel (%p169) target = $region20
        $region19: #{tpu_custom_call.1} parent=11 // pred_region
          _
        $region20: #{tpu_custom_call.1} parent=11 // pred_fallthru
          _
        // Predicated region
        $region21: #{tpu_custom_call.1} parent=11 // pred_check
          %p172 = pneg %p91
        $region22: #{tpu_custom_call.1} parent=11 // pred_check_branch
          %174 = sbr.rel (%p172) target = $region24
        $region23: #{tpu_custom_call.1} parent=11 // pred_region
          %176 = vsyncadd [#allocation8], 0
          %s177 = sshll.u32 %s3, 4
          %s178 = int_to_ptr.hbm [resolvable:$true] %s177
          %s179 = sshll.u32 [#allocation7], 4
          %s180 = int_to_ptr.vmem [resolvable:$true] %s179
          %185 = dma.hbm_to_vmem [thread:$0]  %s178, 18432, %s180, [#allocation8], 128, 128, 8
        $region24: #{tpu_custom_call.1} parent=11 // pred_fallthru
          _
        // Predicated region
        $region25: #{tpu_custom_call.1} parent=11 // pred_check
          %p186 = pneg %p112
        $region26: #{tpu_custom_call.1} parent=11 // pred_check_branch
          %188 = sbr.rel (%p186) target = $region28
        $region27: #{tpu_custom_call.1} parent=11 // pred_region
          _
        $region28: #{tpu_custom_call.1} parent=11 // pred_fallthru
          _
      $region12: #{tpu_custom_call.1} parent=5 // pred_fallthru
        _
      %p189 = scmp.lt.s32.totalorder %s16, 4
      // Predicated region
      $region29: #{tpu_custom_call.1} parent=5 // pred_check
        %p190 = pneg %p189
      $region30: #{tpu_custom_call.1} parent=5 // pred_check_branch
        %192 = sbr.rel (%p190) target = $region32
      $region31: #{tpu_custom_call.1} parent=5 // pred_region
        _
      $region32: #{tpu_custom_call.1} parent=5 // pred_fallthru
        _
      %p193 = scmp.le.s32.totalorder 1, %s16
      %p194 = scmp.lt.s32.totalorder %s16, 5
      %p195 = pnand %p193, %p194
      %p196 = pneg %p195
      // Predicated region
      $region33: #{tpu_custom_call.1} parent=5 // pred_check
        _
      $region34: #{tpu_custom_call.1} parent=5 // pred_check_branch
        %198 = sbr.rel (%p195) target = $region36
      $region35: #{tpu_custom_call.1} parent=5 // pred_region
        %s199 = ssub.s32 %s16, 1
        // Predicated region
        $region37: #{tpu_custom_call.1} parent=35 // pred_check
          %p200 = pneg %p49
        $region38: #{tpu_custom_call.1} parent=35 // pred_check_branch
          %202 = sbr.rel (%p200) target = $region40
        $region39: #{tpu_custom_call.1} parent=35 // pred_region
          %204 = dma.done [#allocation5], 2048
        $region40: #{tpu_custom_call.1} parent=35 // pred_fallthru
          _
        // Predicated region
        $region41: #{tpu_custom_call.1} parent=35 // pred_check
          %p205 = pneg %p91
        $region42: #{tpu_custom_call.1} parent=35 // pred_check_branch
          %207 = sbr.rel (%p205) target = $region44
        $region43: #{tpu_custom_call.1} parent=35 // pred_region
          %209 = dma.done [#allocation8], 18432
        $region44: #{tpu_custom_call.1} parent=35 // pred_fallthru
          _
        %p210 = pneg %p49
        %p211 = pneg %p46
        %p212 = pneg %p70
        %p213 = pneg %p67
        %p214 = pneg %p91
        %p215 = pneg %p88
        %p216 = pneg %p112
        %p217 = pneg %p109
        %p218 = pneg %p140
        %p219 = pneg %p137
        %s220 = sand.u32 %s127, 1
        %s221 = scalar_lea.sflag [#allocation6], %s220
        %s222 = sand.u32 %s127, 1
        %s223 = smul.addr %s222, 128
        %s224 = scalar_lea.vmem [#allocation9], %s223
        %s225 = smul.u32 8, %s26
        %s226 = smul.u32 %s26, 8
        %s227 = smul.u32 %s226, 16
        %s228 = smul.u32 %s25, 288
        %s229 = sadd.s32 %s227, %s228
        %s230 = scalar_lea.hbm %s0, %s229
        // Predicated region
        $region45: #{tpu_custom_call.1} parent=35 // pred_check
          _
        $region46: #{tpu_custom_call.1} parent=35 // pred_check_branch
          %232 = sbr.rel target = $region48
        $region47: #{tpu_custom_call.1} parent=35 // pred_region
          %233 = sst [smem:[#allocation12]] [#allocation11]
          %234 = sst [smem:[#allocation13]] [#allocation10]
        $region48: #{tpu_custom_call.1} parent=35 // pred_fallthru
          _
        %236 = shalt.err (0)
        %s238 = sshll.u32 %s230, 4
        %s239 = int_to_ptr.hbm [resolvable:$true] %s238
        %s240 = sshll.u32 [#allocation2], 4
        %s241 = int_to_ptr.vmem [resolvable:$true] %s240
        %243 = dma.hbm_to_vmem [thread:$0]  %s239, 2560, %s241, [#allocation3]
        %s244 = smul.u32 10, 16
        %s245 = smul.u32 %s244, 1
        %s246 = sshll.u32 %s245, 4
        %247 = dma.done [#allocation3], %s246
        %v248 = vld [vmem:[#allocation2] sm:$0xff]
        %v249 = vld [vmem:[#allocation2 + $0x8] sm:$0xff]
        %v250 = vld [vmem:[#allocation2 + $0x10] sm:$0xff]
        %v251 = vld [vmem:[#allocation2 + $0x18] sm:$0xff]
        %v252 = vld [vmem:[#allocation2 + $0x20] sm:$0xff]
        %v253 = vld [vmem:[#allocation2 + $0x28] sm:$0xff]
        %v254 = vld [vmem:[#allocation2 + $0x30] sm:$0xff]
        %v255 = vld [vmem:[#allocation2 + $0x38] sm:$0xff]
        %v256 = vld [vmem:[#allocation2 + $0x40] sm:$0xff]
        %v257 = vld [vmem:[#allocation2 + $0x48] sm:$0xff]
        %v258 = vld [vmem:[#allocation2 + $0x50] sm:$0xff]
        %v259 = vld [vmem:[#allocation2 + $0x58] sm:$0xff]
        %v260 = vld [vmem:[#allocation2 + $0x60] sm:$0xff]
        %v261 = vld [vmem:[#allocation2 + $0x68] sm:$0xff]
        %v262 = vld [vmem:[#allocation2 + $0x70] sm:$0xff]
        %v263 = vld [vmem:[#allocation2 + $0x78] sm:$0xff]
        %v264 = vld [vmem:[#allocation2 + $0x80] sm:$0xff]
        %v265 = vld [vmem:[#allocation2 + $0x88] sm:$0xff]
        %v266 = vld [vmem:[#allocation2 + $0x90] sm:$0xff]
        %v267 = vld [vmem:[#allocation2 + $0x98] sm:$0xff]
        %v268 = vld [vmem:[#allocation4] sm:$0xff]
        %v269 = vld [vmem:[#allocation4 + $0x8] sm:$0xff]
        %v270 = vld [vmem:[#allocation4 + $0x10] sm:$0xff]
        %v271 = vld [vmem:[#allocation4 + $0x18] sm:$0xff]
        %v272 = vld [vmem:[#allocation4 + $0x20] sm:$0xff]
        %v273 = vld [vmem:[#allocation4 + $0x28] sm:$0xff]
        %v274 = vld [vmem:[#allocation4 + $0x30] sm:$0xff]
        %v275 = vld [vmem:[#allocation4 + $0x38] sm:$0xff]
        %v276 = vld [vmem:[#allocation4 + $0x40] sm:$0xff]
        %v277 = vld [vmem:[#allocation4 + $0x48] sm:$0xff]
        %v278 = vld [vmem:[#allocation4 + $0x50] sm:$0xff]
        %v279 = vld [vmem:[#allocation4 + $0x58] sm:$0xff]
        %v280 = vld [vmem:[#allocation4 + $0x60] sm:$0xff]
        %v281 = vld [vmem:[#allocation4 + $0x68] sm:$0xff]
        %v282 = vld [vmem:[#allocation4 + $0x70] sm:$0xff]
        %v283 = vld [vmem:[#allocation4 + $0x78] sm:$0xff]
        %v284 = vld [vmem:[%s2] sm:$0x1]
        %v286 = vperm.slane %v284, 0
        %288 = vmatpush.msra.mxu0 %v283
        %289 = vmatpush.msra.mxu0 %v282
        %290 = vmatpush.msra.mxu0 %v281
        %291 = vmatpush.msra.mxu0 %v280
        %292 = vmatpush.msra.mxu0 %v279
        %293 = vmatpush.msra.mxu0 %v278
        %294 = vmatpush.msra.mxu0 %v277
        %295 = vmatpush.msra.mxu0 %v276
        %296 = vmatpush.msra.mxu0 %v275
        %297 = vmatpush.msra.mxu0 %v274
        %298 = vmatpush.msra.mxu0 %v273
        %299 = vmatpush.msra.mxu0 %v272
        %300 = vmatpush.msra.mxu0 %v271
        %301 = vmatpush.msra.mxu0 %v270
        %302 = vmatpush.msra.mxu0 %v269
        %303 = vmatpush.msra.mxu0 %v268
        %304 = vmatmul.f32.gmra.mxu0 %v248
        %v305 = vpop.f32.mrf.mxu0
        %v306 = vadd.f32 %v286, %v305
        %307 = vmatmul.f32.gmra.mxu0 %v249
        %v308 = vpop.f32.mrf.mxu0
        %v309 = vadd.f32 %v286, %v308
        %310 = vmatmul.f32.gmra.mxu0 %v250
        %v311 = vpop.f32.mrf.mxu0
        %v312 = vadd.f32 %v286, %v311
        %313 = vmatmul.f32.gmra.mxu0 %v251
        %v314 = vpop.f32.mrf.mxu0
        %v315 = vadd.f32 %v286, %v314
        %316 = vmatmul.f32.gmra.mxu0 %v252
        %v317 = vpop.f32.mrf.mxu0
        %v318 = vadd.f32 %v286, %v317
        %319 = vmatmul.f32.gmra.mxu0 %v253
        %v320 = vpop.f32.mrf.mxu0
        %v321 = vadd.f32 %v286, %v320
        %322 = vmatmul.f32.gmra.mxu0 %v254
        %v323 = vpop.f32.mrf.mxu0
        %v324 = vadd.f32 %v286, %v323
        %325 = vmatmul.f32.gmra.mxu0 %v255
        %v326 = vpop.f32.mrf.mxu0
        %v327 = vadd.f32 %v286, %v326
        %328 = vmatmul.f32.gmra.mxu0 %v256
        %v329 = vpop.f32.mrf.mxu0
        %v330 = vadd.f32 %v286, %v329
        %331 = vmatmul.f32.gmra.mxu0 %v257
        %v332 = vpop.f32.mrf.mxu0
        %v333 = vadd.f32 %v286, %v332
        %334 = vmatmul.f32.gmra.mxu0 %v258
        %v335 = vpop.f32.mrf.mxu0
        %v336 = vadd.f32 %v286, %v335
        %337 = vmatmul.f32.gmra.mxu0 %v259
        %v338 = vpop.f32.mrf.mxu0
        %v339 = vadd.f32 %v286, %v338
        %340 = vmatmul.f32.gmra.mxu0 %v260
        %v341 = vpop.f32.mrf.mxu0
        %v342 = vadd.f32 %v286, %v341
        %343 = vmatmul.f32.gmra.mxu0 %v261
        %v344 = vpop.f32.mrf.mxu0
        %v345 = vadd.f32 %v286, %v344
        %346 = vmatmul.f32.gmra.mxu0 %v262
        %v347 = vpop.f32.mrf.mxu0
        %v348 = vadd.f32 %v286, %v347
        %349 = vmatmul.f32.gmra.mxu0 %v263
        %v350 = vpop.f32.mrf.mxu0
        %v351 = vadd.f32 %v286, %v350
        %352 = vmatmul.f32.gmra.mxu0 %v264
        %v353 = vpop.f32.mrf.mxu0
        %v354 = vadd.f32 %v286, %v353
        %355 = vmatmul.f32.gmra.mxu0 %v265
        %v356 = vpop.f32.mrf.mxu0
        %v357 = vadd.f32 %v286, %v356
        %358 = vmatmul.f32.gmra.mxu0 %v266
        %v359 = vpop.f32.mrf.mxu0
        %v360 = vadd.f32 %v286, %v359
        %361 = vmatmul.f32.gmra.mxu0 %v267
        %v362 = vpop.f32.mrf.mxu0
        %v363 = vadd.f32 %v286, %v362
        %364 = vdwg.mxu0
        %vm365 = vcmp.gt.f32.partialorder %v306, 0.0
        %vm366 = vcmp.gt.f32.partialorder %v309, 0.0
        %vm367 = vcmp.gt.f32.partialorder %v312, 0.0
        %vm368 = vcmp.gt.f32.partialorder %v315, 0.0
        %vm369 = vcmp.gt.f32.partialorder %v318, 0.0
        %vm370 = vcmp.gt.f32.partialorder %v321, 0.0
        %vm371 = vcmp.gt.f32.partialorder %v324, 0.0
        %vm372 = vcmp.gt.f32.partialorder %v327, 0.0
        %vm373 = vcmp.gt.f32.partialorder %v330, 0.0
        %vm374 = vcmp.gt.f32.partialorder %v333, 0.0
        %vm375 = vcmp.gt.f32.partialorder %v336, 0.0
        %vm376 = vcmp.gt.f32.partialorder %v339, 0.0
        %vm377 = vcmp.gt.f32.partialorder %v342, 0.0
        %vm378 = vcmp.gt.f32.partialorder %v345, 0.0
        %vm379 = vcmp.gt.f32.partialorder %v348, 0.0
        %vm380 = vcmp.gt.f32.partialorder %v351, 0.0
        %vm381 = vcmp.gt.f32.partialorder %v354, 0.0
        %vm382 = vcmp.gt.f32.partialorder %v357, 0.0
        %vm383 = vcmp.gt.f32.partialorder %v360, 0.0
        %vm384 = vcmp.gt.f32.partialorder %v363, 0.0
        %v385 = vmul.f32 %v306, 0.1
        %v386 = vmul.f32 %v309, 0.1
        %v387 = vmul.f32 %v312, 0.1
        %v388 = vmul.f32 %v315, 0.1
        %v389 = vmul.f32 %v318, 0.1
        %v390 = vmul.f32 %v321, 0.1
        %v391 = vmul.f32 %v324, 0.1
        %v392 = vmul.f32 %v327, 0.1
        %v393 = vmul.f32 %v330, 0.1
        %v394 = vmul.f32 %v333, 0.1
        %v395 = vmul.f32 %v336, 0.1
        %v396 = vmul.f32 %v339, 0.1
        %v397 = vmul.f32 %v342, 0.1
        %v398 = vmul.f32 %v345, 0.1
        %v399 = vmul.f32 %v348, 0.1
        %v400 = vmul.f32 %v351, 0.1
        %v401 = vmul.f32 %v354, 0.1
        %v402 = vmul.f32 %v357, 0.1
        %v403 = vmul.f32 %v360, 0.1
        %v404 = vmul.f32 %v363, 0.1
        %v405 = vsel %vm365, %v306, %v385
        %v406 = vsel %vm366, %v309, %v386
        %v407 = vsel %vm367, %v312, %v387
        %v408 = vsel %vm368, %v315, %v388
        %v409 = vsel %vm369, %v318, %v389
        %v410 = vsel %vm370, %v321, %v390
        %v411 = vsel %vm371, %v324, %v391
        %v412 = vsel %vm372, %v327, %v392
        %v413 = vsel %vm373, %v330, %v393
        %v414 = vsel %vm374, %v333, %v394
        %v415 = vsel %vm375, %v336, %v395
        %v416 = vsel %vm376, %v339, %v396
        %v417 = vsel %vm377, %v342, %v397
        %v418 = vsel %vm378, %v345, %v398
        %v419 = vsel %vm379, %v348, %v399
        %v420 = vsel %vm380, %v351, %v400
        %v421 = vsel %vm381, %v354, %v401
        %v422 = vsel %vm382, %v357, %v402
        %v423 = vsel %vm383, %v360, %v403
        %v424 = vsel %vm384, %v363, %v404
        %s425 = ssub.s32 %s226, 1
        %v426 = vstv %s425
        %v427 = vadd.s32 %v426, 1
        %v428 = vadd.s32 %v426, 2
        %v429 = vadd.s32 %v426, 3
        %v430 = vadd.s32 %v426, 4
        %v431 = vadd.s32 %v426, 5
        %v432 = vadd.s32 %v426, 6
        %v433 = vadd.s32 %v426, 7
        %v434 = vadd.s32 %v426, 8
        %v435 = vadd.s32 %v426, 9
        %v436 = vlaneseq
        %v437 = vshrl.u32 %v436, 7
        %v438 = vadd.s32 %v437, 8
        %vm439 = vcmp.ge.s32.totalorder %v426, 0
        %vm440 = vcmp.ge.s32.totalorder %v427, 0
        %vm441 = vcmp.ge.s32.totalorder %v428, 0
        %vm442 = vcmp.ge.s32.totalorder %v429, 0
        %vm443 = vcmp.ge.s32.totalorder %v430, 0
        %vm444 = vcmp.ge.s32.totalorder %v431, 0
        %vm445 = vcmp.ge.s32.totalorder %v432, 0
        %vm446 = vcmp.ge.s32.totalorder %v433, 0
        %vm447 = vcmp.ge.s32.totalorder %v434, 0
        %vm448 = vcmp.ge.s32.totalorder %v435, 0
        %vm449 = vcmp.lt.s32.totalorder %v426, 16
        %vm450 = vcmp.lt.s32.totalorder %v427, 16
        %vm451 = vcmp.lt.s32.totalorder %v428, 16
        %vm452 = vcmp.lt.s32.totalorder %v429, 16
        %vm453 = vcmp.lt.s32.totalorder %v430, 16
        %vm454 = vcmp.lt.s32.totalorder %v431, 16
        %vm455 = vcmp.lt.s32.totalorder %v432, 16
        %vm456 = vcmp.lt.s32.totalorder %v433, 16
        %vm457 = vcmp.lt.s32.totalorder %v434, 16
        %vm458 = vcmp.lt.s32.totalorder %v435, 16
        %vm459 = vmand %vm439, %vm449
        %vm460 = vmand %vm440, %vm450
        %vm461 = vmand %vm441, %vm451
        %vm462 = vmand %vm442, %vm452
        %vm463 = vmand %vm443, %vm453
        %vm464 = vmand %vm444, %vm454
        %vm465 = vmand %vm445, %vm455
        %vm466 = vmand %vm446, %vm456
        %vm467 = vmand %vm447, %vm457
        %vm468 = vmand %vm448, %vm458
        %v469 = vsel %vm459, 1, 0
        %v470 = vsel %vm460, 1, 0
        %v471 = vsel %vm461, 1, 0
        %v472 = vsel %vm462, 1, 0
        %v473 = vsel %vm463, 1, 0
        %v474 = vsel %vm464, 1, 0
        %v475 = vsel %vm465, 1, 0
        %v476 = vsel %vm466, 1, 0
        %v477 = vsel %vm467, 1, 0
        %v478 = vsel %vm468, 1, 0
        %vm479 = vcmp.eq.s32.totalorder %v469, 1
        %vm480 = vcmp.eq.s32.totalorder %v470, 1
        %vm481 = vcmp.eq.s32.totalorder %v471, 1
        %vm482 = vcmp.eq.s32.totalorder %v472, 1
        %vm483 = vcmp.eq.s32.totalorder %v473, 1
        %vm484 = vcmp.eq.s32.totalorder %v474, 1
        %vm485 = vcmp.eq.s32.totalorder %v475, 1
        %vm486 = vcmp.eq.s32.totalorder %v476, 1
        %vm487 = vcmp.eq.s32.totalorder %v477, 1
        %vm488 = vcmp.eq.s32.totalorder %v478, 1
        %v489 = vsel %vm479, %v405, 0.0
        %v490 = vsel %vm479, %v406, 0.0
        %v491 = vsel %vm480, %v407, 0.0
        %v492 = vsel %vm480, %v408, 0.0
        %v493 = vsel %vm481, %v409, 0.0
        %v494 = vsel %vm481, %v410, 0.0
        %v495 = vsel %vm482, %v411, 0.0
        %v496 = vsel %vm482, %v412, 0.0
        %v497 = vsel %vm483, %v413, 0.0
        %v498 = vsel %vm483, %v414, 0.0
        %v499 = vsel %vm484, %v415, 0.0
        %v500 = vsel %vm484, %v416, 0.0
        %v501 = vsel %vm485, %v417, 0.0
        %v502 = vsel %vm485, %v418, 0.0
        %v503 = vsel %vm486, %v419, 0.0
        %v504 = vsel %vm486, %v420, 0.0
        %v505 = vsel %vm487, %v421, 0.0
        %v506 = vsel %vm487, %v422, 0.0
        %v507 = vsel %vm488, %v423, 0.0
        %v508 = vsel %vm488, %v424, 0.0
        %vm509 = vcmp.gt.s32.totalorder %v437, 0
        %vm510 = vcmp.gt.s32.totalorder %v438, 0
        %v511 = vrot.slane %v489, 7
        %v512 = vrot.slane %v490, 7
        %v513 = vrot.slane %v491, 7
        %v514 = vrot.slane %v492, 7
        %v515 = vrot.slane %v493, 7
        %v516 = vrot.slane %v494, 7
        %v517 = vrot.slane %v495, 7
        %v518 = vrot.slane %v496, 7
        %v519 = vrot.slane %v497, 7
        %v520 = vrot.slane %v498, 7
        %v521 = vrot.slane %v499, 7
        %v522 = vrot.slane %v500, 7
        %v523 = vrot.slane %v501, 7
        %v524 = vrot.slane %v502, 7
        %v525 = vrot.slane %v503, 7
        %v526 = vrot.slane %v504, 7
        %v527 = vrot.slane %v505, 7
        %v528 = vrot.slane %v506, 7
        %v529 = vrot.slane %v507, 7
        %v530 = vrot.slane %v508, 7
        %vm531 = vcmp.lt.s32.totalorder %v437, 1
        %v532 = vsel %vm531, %v529, %v530
        %v533 = vsel %vm531, %v528, %v529
        %v534 = vsel %vm531, %v527, %v528
        %v535 = vsel %vm531, %v526, %v527
        %v536 = vsel %vm531, %v525, %v526
        %v537 = vsel %vm531, %v524, %v525
        %v538 = vsel %vm531, %v523, %v524
        %v539 = vsel %vm531, %v522, %v523
        %v540 = vsel %vm531, %v521, %v522
        %v541 = vsel %vm531, %v520, %v521
        %v542 = vsel %vm531, %v519, %v520
        %v543 = vsel %vm531, %v518, %v519
        %v544 = vsel %vm531, %v517, %v518
        %v545 = vsel %vm531, %v516, %v517
        %v546 = vsel %vm531, %v515, %v516
        %v547 = vsel %vm531, %v514, %v515
        %v548 = vsel %vm531, %v513, %v514
        %v549 = vsel %vm531, %v512, %v513
        %v550 = vsel %vm531, %v511, %v512
        %v551 = vsel %vm531, %v530, %v511
        %v552 = vsel %vm509, 1, 0
        %v553 = vsel %vm510, 1, 0
        %vm554 = vcmp.eq.s32.totalorder %v552, 1
        %vm555 = vcmp.eq.s32.totalorder %v553, 1
        %v556 = vsel %vm554, %v551, 0.0
        %v557 = vsel %vm555, %v550, 0.0
        %v558 = vsel %vm554, %v549, 0.0
        %v559 = vsel %vm555, %v548, 0.0
        %v560 = vsel %vm554, %v547, 0.0
        %v561 = vsel %vm555, %v546, 0.0
        %v562 = vsel %vm554, %v545, 0.0
        %v563 = vsel %vm555, %v544, 0.0
        %v564 = vsel %vm554, %v543, 0.0
        %v565 = vsel %vm555, %v542, 0.0
        %v566 = vsel %vm554, %v541, 0.0
        %v567 = vsel %vm555, %v540, 0.0
        %v568 = vsel %vm554, %v539, 0.0
        %v569 = vsel %vm555, %v538, 0.0
        %v570 = vsel %vm554, %v537, 0.0
        %v571 = vsel %vm555, %v536, 0.0
        %v572 = vsel %vm554, %v535, 0.0
        %v573 = vsel %vm555, %v534, 0.0
        %v574 = vsel %vm554, %v533, 0.0
        %v575 = vsel %vm555, %v532, 0.0
        %vm576 = vcmp.lt.s32.totalorder %v437, 15
        %vm577 = vcmp.lt.s32.totalorder %v438, 15
        %v578 = vrot.slane %v489, 1
        %v579 = vrot.slane %v490, 1
        %v580 = vrot.slane %v491, 1
        %v581 = vrot.slane %v492, 1
        %v582 = vrot.slane %v493, 1
        %v583 = vrot.slane %v494, 1
        %v584 = vrot.slane %v495, 1
        %v585 = vrot.slane %v496, 1
        %v586 = vrot.slane %v497, 1
        %v587 = vrot.slane %v498, 1
        %v588 = vrot.slane %v499, 1
        %v589 = vrot.slane %v500, 1
        %v590 = vrot.slane %v501, 1
        %v591 = vrot.slane %v502, 1
        %v592 = vrot.slane %v503, 1
        %v593 = vrot.slane %v504, 1
        %v594 = vrot.slane %v505, 1
        %v595 = vrot.slane %v506, 1
        %v596 = vrot.slane %v507, 1
        %v597 = vrot.slane %v508, 1
        %vm598 = vcmp.lt.s32.totalorder %v437, 7
        %v599 = vsel %vm598, %v596, %v597
        %v600 = vsel %vm598, %v595, %v596
        %v601 = vsel %vm598, %v594, %v595
        %v602 = vsel %vm598, %v593, %v594
        %v603 = vsel %vm598, %v592, %v593
        %v604 = vsel %vm598, %v591, %v592
        %v605 = vsel %vm598, %v590, %v591
        %v606 = vsel %vm598, %v589, %v590
        %v607 = vsel %vm598, %v588, %v589
        %v608 = vsel %vm598, %v587, %v588
        %v609 = vsel %vm598, %v586, %v587
        %v610 = vsel %vm598, %v585, %v586
        %v611 = vsel %vm598, %v584, %v585
        %v612 = vsel %vm598, %v583, %v584
        %v613 = vsel %vm598, %v582, %v583
        %v614 = vsel %vm598, %v581, %v582
        %v615 = vsel %vm598, %v580, %v581
        %v616 = vsel %vm598, %v579, %v580
        %v617 = vsel %vm598, %v578, %v579
        %v618 = vsel %vm598, %v597, %v578
        %v619 = vsel %vm576, 1, 0
        %v620 = vsel %vm577, 1, 0
        %vm621 = vcmp.eq.s32.totalorder %v619, 1
        %vm622 = vcmp.eq.s32.totalorder %v620, 1
        %v623 = vsel %vm621, %v617, 0.0
        %v624 = vsel %vm622, %v616, 0.0
        %v625 = vsel %vm621, %v615, 0.0
        %v626 = vsel %vm622, %v614, 0.0
        %v627 = vsel %vm621, %v613, 0.0
        %v628 = vsel %vm622, %v612, 0.0
        %v629 = vsel %vm621, %v611, 0.0
        %v630 = vsel %vm622, %v610, 0.0
        %v631 = vsel %vm621, %v609, 0.0
        %v632 = vsel %vm622, %v608, 0.0
        %v633 = vsel %vm621, %v607, 0.0
        %v634 = vsel %vm622, %v606, 0.0
        %v635 = vsel %vm621, %v605, 0.0
        %v636 = vsel %vm622, %v604, 0.0
        %v637 = vsel %vm621, %v603, 0.0
        %v638 = vsel %vm622, %v602, 0.0
        %v639 = vsel %vm621, %v601, 0.0
        %v640 = vsel %vm622, %v600, 0.0
        %v641 = vsel %vm621, %v599, 0.0
        %v642 = vsel %vm622, %v618, 0.0
        %v643 = vld [vmem:[#allocation7] sm:$0xff]
        %v644 = vld [vmem:[#allocation7 + $0x8] sm:$0xff]
        %v645 = vld [vmem:[#allocation7 + $0x10] sm:$0xff]
        %v646 = vld [vmem:[#allocation7 + $0x18] sm:$0xff]
        %v647 = vld [vmem:[#allocation7 + $0x20] sm:$0xff]
        %v648 = vld [vmem:[#allocation7 + $0x28] sm:$0xff]
        %v649 = vld [vmem:[#allocation7 + $0x30] sm:$0xff]
        %v650 = vld [vmem:[#allocation7 + $0x38] sm:$0xff]
        %v651 = vld [vmem:[#allocation7 + $0x40] sm:$0xff]
        %v652 = vld [vmem:[#allocation7 + $0x48] sm:$0xff]
        %v653 = vld [vmem:[#allocation7 + $0x50] sm:$0xff]
        %v654 = vld [vmem:[#allocation7 + $0x58] sm:$0xff]
        %v655 = vld [vmem:[#allocation7 + $0x60] sm:$0xff]
        %v656 = vld [vmem:[#allocation7 + $0x68] sm:$0xff]
        %v657 = vld [vmem:[#allocation7 + $0x70] sm:$0xff]
        %v658 = vld [vmem:[#allocation7 + $0x78] sm:$0xff]
        %v659 = vld [vmem:[#allocation7 + $0x80] sm:$0xff]
        %v660 = vld [vmem:[#allocation7 + $0x88] sm:$0xff]
        %v661 = vld [vmem:[#allocation7 + $0x90] sm:$0xff]
        %v662 = vld [vmem:[#allocation7 + $0x98] sm:$0xff]
        %v663 = vld [vmem:[#allocation7 + $0xa0] sm:$0xff]
        %v664 = vld [vmem:[#allocation7 + $0xa8] sm:$0xff]
        %v665 = vld [vmem:[#allocation7 + $0xb0] sm:$0xff]
        %v666 = vld [vmem:[#allocation7 + $0xb8] sm:$0xff]
        %v667 = vld [vmem:[#allocation7 + $0xc0] sm:$0xff]
        %v668 = vld [vmem:[#allocation7 + $0xc8] sm:$0xff]
        %v669 = vld [vmem:[#allocation7 + $0xd0] sm:$0xff]
        %v670 = vld [vmem:[#allocation7 + $0xd8] sm:$0xff]
        %v671 = vld [vmem:[#allocation7 + $0xe0] sm:$0xff]
        %v672 = vld [vmem:[#allocation7 + $0xe8] sm:$0xff]
        %v673 = vld [vmem:[#allocation7 + $0xf0] sm:$0xff]
        %v674 = vld [vmem:[#allocation7 + $0xf8] sm:$0xff]
        %v675 = vld [vmem:[#allocation7 + $0x100] sm:$0xff]
        %v676 = vld [vmem:[#allocation7 + $0x108] sm:$0xff]
        %v677 = vld [vmem:[#allocation7 + $0x110] sm:$0xff]
        %v678 = vld [vmem:[#allocation7 + $0x118] sm:$0xff]
        %v679 = vld [vmem:[#allocation7 + $0x120] sm:$0xff]
        %v680 = vld [vmem:[#allocation7 + $0x128] sm:$0xff]
        %v681 = vld [vmem:[#allocation7 + $0x130] sm:$0xff]
        %v682 = vld [vmem:[#allocation7 + $0x138] sm:$0xff]
        %v683 = vld [vmem:[#allocation7 + $0x140] sm:$0xff]
        %v684 = vld [vmem:[#allocation7 + $0x148] sm:$0xff]
        %v685 = vld [vmem:[#allocation7 + $0x150] sm:$0xff]
        %v686 = vld [vmem:[#allocation7 + $0x158] sm:$0xff]
        %v687 = vld [vmem:[#allocation7 + $0x160] sm:$0xff]
        %v688 = vld [vmem:[#allocation7 + $0x168] sm:$0xff]
        %v689 = vld [vmem:[#allocation7 + $0x170] sm:$0xff]
        %v690 = vld [vmem:[#allocation7 + $0x178] sm:$0xff]
        %s691 = scalar_lea.vmem [#allocation7], 384
        %v692 = vld [vmem:[%s691] sm:$0xff]
        %v693 = vld [vmem:[%s691 + $0x8] sm:$0xff]
        %v694 = vld [vmem:[%s691 + $0x10] sm:$0xff]
        %v695 = vld [vmem:[%s691 + $0x18] sm:$0xff]
        %v696 = vld [vmem:[%s691 + $0x20] sm:$0xff]
        %v697 = vld [vmem:[%s691 + $0x28] sm:$0xff]
        %v698 = vld [vmem:[%s691 + $0x30] sm:$0xff]
        %v699 = vld [vmem:[%s691 + $0x38] sm:$0xff]
        %v700 = vld [vmem:[%s691 + $0x40] sm:$0xff]
        %v701 = vld [vmem:[%s691 + $0x48] sm:$0xff]
        %v702 = vld [vmem:[%s691 + $0x50] sm:$0xff]
        %v703 = vld [vmem:[%s691 + $0x58] sm:$0xff]
        %v704 = vld [vmem:[%s691 + $0x60] sm:$0xff]
        %v705 = vld [vmem:[%s691 + $0x68] sm:$0xff]
        %v706 = vld [vmem:[%s691 + $0x70] sm:$0xff]
        %v707 = vld [vmem:[%s691 + $0x78] sm:$0xff]
        %v708 = vld [vmem:[%s691 + $0x80] sm:$0xff]
        %v709 = vld [vmem:[%s691 + $0x88] sm:$0xff]
        %v710 = vld [vmem:[%s691 + $0x90] sm:$0xff]
        %v711 = vld [vmem:[%s691 + $0x98] sm:$0xff]
        %v712 = vld [vmem:[%s691 + $0xa0] sm:$0xff]
        %v713 = vld [vmem:[%s691 + $0xa8] sm:$0xff]
        %v714 = vld [vmem:[%s691 + $0xb0] sm:$0xff]
        %v715 = vld [vmem:[%s691 + $0xb8] sm:$0xff]
        %v716 = vld [vmem:[%s691 + $0xc0] sm:$0xff]
        %v717 = vld [vmem:[%s691 + $0xc8] sm:$0xff]
        %v718 = vld [vmem:[%s691 + $0xd0] sm:$0xff]
        %v719 = vld [vmem:[%s691 + $0xd8] sm:$0xff]
        %v720 = vld [vmem:[%s691 + $0xe0] sm:$0xff]
        %v721 = vld [vmem:[%s691 + $0xe8] sm:$0xff]
        %v722 = vld [vmem:[%s691 + $0xf0] sm:$0xff]
        %v723 = vld [vmem:[%s691 + $0xf8] sm:$0xff]
        %v724 = vld [vmem:[%s691 + $0x100] sm:$0xff]
        %v725 = vld [vmem:[%s691 + $0x108] sm:$0xff]
        %v726 = vld [vmem:[%s691 + $0x110] sm:$0xff]
        %v727 = vld [vmem:[%s691 + $0x118] sm:$0xff]
        %v728 = vld [vmem:[%s691 + $0x120] sm:$0xff]
        %v729 = vld [vmem:[%s691 + $0x128] sm:$0xff]
        %v730 = vld [vmem:[%s691 + $0x130] sm:$0xff]
        %v731 = vld [vmem:[%s691 + $0x138] sm:$0xff]
        %v732 = vld [vmem:[%s691 + $0x140] sm:$0xff]
        %v733 = vld [vmem:[%s691 + $0x148] sm:$0xff]
        %v734 = vld [vmem:[%s691 + $0x150] sm:$0xff]
        %v735 = vld [vmem:[%s691 + $0x158] sm:$0xff]
        %v736 = vld [vmem:[%s691 + $0x160] sm:$0xff]
        %v737 = vld [vmem:[%s691 + $0x168] sm:$0xff]
        %v738 = vld [vmem:[%s691 + $0x170] sm:$0xff]
        %v739 = vld [vmem:[%s691 + $0x178] sm:$0xff]
        %740 = vmatpush.msra.mxu0 %v707
        %741 = vmatpush.msra.mxu0 %v706
        %742 = vmatpush.msra.mxu0 %v705
        %743 = vmatpush.msra.mxu0 %v704
        %744 = vmatpush.msra.mxu0 %v703
        %745 = vmatpush.msra.mxu0 %v702
        %746 = vmatpush.msra.mxu0 %v701
        %747 = vmatpush.msra.mxu0 %v700
        %748 = vmatpush.msra.mxu0 %v699
        %749 = vmatpush.msra.mxu0 %v698
        %750 = vmatpush.msra.mxu0 %v697
        %751 = vmatpush.msra.mxu0 %v696
        %752 = vmatpush.msra.mxu0 %v695
        %753 = vmatpush.msra.mxu0 %v694
        %754 = vmatpush.msra.mxu0 %v693
        %755 = vmatpush.msra.mxu0 %v692
        %756 = vmatmul.f32.gmra.mxu0 %v558
        %v757 = vpop.f32.mrf.mxu0
        %v758 = vadd.f32 0.0, %v757
        %759 = vmatmul.f32.gmra.mxu0 %v559
        %v760 = vpop.f32.mrf.mxu0
        %v761 = vadd.f32 0.0, %v760
        %762 = vmatmul.f32.gmra.mxu0 %v560
        %v763 = vpop.f32.mrf.mxu0
        %v764 = vadd.f32 0.0, %v763
        %765 = vmatmul.f32.gmra.mxu0 %v561
        %v766 = vpop.f32.mrf.mxu0
        %v767 = vadd.f32 0.0, %v766
        %768 = vmatmul.f32.gmra.mxu0 %v562
        %v769 = vpop.f32.mrf.mxu0
        %v770 = vadd.f32 0.0, %v769
        %771 = vmatmul.f32.gmra.mxu0 %v563
        %v772 = vpop.f32.mrf.mxu0
        %v773 = vadd.f32 0.0, %v772
        %774 = vmatmul.f32.gmra.mxu0 %v564
        %v775 = vpop.f32.mrf.mxu0
        %v776 = vadd.f32 0.0, %v775
        %777 = vmatmul.f32.gmra.mxu0 %v565
        %v778 = vpop.f32.mrf.mxu0
        %v779 = vadd.f32 0.0, %v778
        %780 = vmatmul.f32.gmra.mxu0 %v566
        %v781 = vpop.f32.mrf.mxu0
        %v782 = vadd.f32 0.0, %v781
        %783 = vmatmul.f32.gmra.mxu0 %v567
        %v784 = vpop.f32.mrf.mxu0
        %v785 = vadd.f32 0.0, %v784
        %786 = vmatmul.f32.gmra.mxu0 %v568
        %v787 = vpop.f32.mrf.mxu0
        %v788 = vadd.f32 0.0, %v787
        %789 = vmatmul.f32.gmra.mxu0 %v569
        %v790 = vpop.f32.mrf.mxu0
        %v791 = vadd.f32 0.0, %v790
        %792 = vmatmul.f32.gmra.mxu0 %v570
        %v793 = vpop.f32.mrf.mxu0
        %v794 = vadd.f32 0.0, %v793
        %795 = vmatmul.f32.gmra.mxu0 %v571
        %v796 = vpop.f32.mrf.mxu0
        %v797 = vadd.f32 0.0, %v796
        %798 = vmatmul.f32.gmra.mxu0 %v572
        %v799 = vpop.f32.mrf.mxu0
        %v800 = vadd.f32 0.0, %v799
        %801 = vmatmul.f32.gmra.mxu0 %v573
        %v802 = vpop.f32.mrf.mxu0
        %v803 = vadd.f32 0.0, %v802
        %804 = vdwg.mxu0
        %805 = vmatpush.msra.mxu0 %v723
        %806 = vmatpush.msra.mxu0 %v722
        %807 = vmatpush.msra.mxu0 %v721
        %808 = vmatpush.msra.mxu0 %v720
        %809 = vmatpush.msra.mxu0 %v719
        %810 = vmatpush.msra.mxu0 %v718
        %811 = vmatpush.msra.mxu0 %v717
        %812 = vmatpush.msra.mxu0 %v716
        %813 = vmatpush.msra.mxu0 %v715
        %814 = vmatpush.msra.mxu0 %v714
        %815 = vmatpush.msra.mxu0 %v713
        %816 = vmatpush.msra.mxu0 %v712
        %817 = vmatpush.msra.mxu0 %v711
        %818 = vmatpush.msra.mxu0 %v710
        %819 = vmatpush.msra.mxu0 %v709
        %820 = vmatpush.msra.mxu0 %v708
        %821 = vmatmul.f32.gmra.mxu0 %v491
        %v822 = vpop.f32.mrf.mxu0
        %v823 = vadd.f32 %v758, %v822
        %824 = vmatmul.f32.gmra.mxu0 %v492
        %v825 = vpop.f32.mrf.mxu0
        %v826 = vadd.f32 %v761, %v825
        %827 = vmatmul.f32.gmra.mxu0 %v493
        %v828 = vpop.f32.mrf.mxu0
        %v829 = vadd.f32 %v764, %v828
        %830 = vmatmul.f32.gmra.mxu0 %v494
        %v831 = vpop.f32.mrf.mxu0
        %v832 = vadd.f32 %v767, %v831
        %833 = vmatmul.f32.gmra.mxu0 %v495
        %v834 = vpop.f32.mrf.mxu0
        %v835 = vadd.f32 %v770, %v834
        %836 = vmatmul.f32.gmra.mxu0 %v496
        %v837 = vpop.f32.mrf.mxu0
        %v838 = vadd.f32 %v773, %v837
        %839 = vmatmul.f32.gmra.mxu0 %v497
        %v840 = vpop.f32.mrf.mxu0
        %v841 = vadd.f32 %v776, %v840
        %842 = vmatmul.f32.gmra.mxu0 %v498
        %v843 = vpop.f32.mrf.mxu0
        %v844 = vadd.f32 %v779, %v843
        %845 = vmatmul.f32.gmra.mxu0 %v499
        %v846 = vpop.f32.mrf.mxu0
        %v847 = vadd.f32 %v782, %v846
        %848 = vmatmul.f32.gmra.mxu0 %v500
        %v849 = vpop.f32.mrf.mxu0
        %v850 = vadd.f32 %v785, %v849
        %851 = vmatmul.f32.gmra.mxu0 %v501
        %v852 = vpop.f32.mrf.mxu0
        %v853 = vadd.f32 %v788, %v852
        %854 = vmatmul.f32.gmra.mxu0 %v502
        %v855 = vpop.f32.mrf.mxu0
        %v856 = vadd.f32 %v791, %v855
        %857 = vmatmul.f32.gmra.mxu0 %v503
        %v858 = vpop.f32.mrf.mxu0
        %v859 = vadd.f32 %v794, %v858
        %860 = vmatmul.f32.gmra.mxu0 %v504
        %v861 = vpop.f32.mrf.mxu0
        %v862 = vadd.f32 %v797, %v861
        %863 = vmatmul.f32.gmra.mxu0 %v505
        %v864 = vpop.f32.mrf.mxu0
        %v865 = vadd.f32 %v800, %v864
        %866 = vmatmul.f32.gmra.mxu0 %v506
        %v867 = vpop.f32.mrf.mxu0
        %v868 = vadd.f32 %v803, %v867
        %869 = vdwg.mxu0
        %870 = vmatpush.msra.mxu0 %v739
        %871 = vmatpush.msra.mxu0 %v738
        %872 = vmatpush.msra.mxu0 %v737
        %873 = vmatpush.msra.mxu0 %v736
        %874 = vmatpush.msra.mxu0 %v735
        %875 = vmatpush.msra.mxu0 %v734
        %876 = vmatpush.msra.mxu0 %v733
        %877 = vmatpush.msra.mxu0 %v732
        %878 = vmatpush.msra.mxu0 %v731
        %879 = vmatpush.msra.mxu0 %v730
        %880 = vmatpush.msra.mxu0 %v729
        %881 = vmatpush.msra.mxu0 %v728
        %882 = vmatpush.msra.mxu0 %v727
        %883 = vmatpush.msra.mxu0 %v726
        %884 = vmatpush.msra.mxu0 %v725
        %885 = vmatpush.msra.mxu0 %v724
        %886 = vmatmul.f32.gmra.mxu0 %v625
        %v887 = vpop.f32.mrf.mxu0
        %v888 = vadd.f32 %v823, %v887
        %889 = vmatmul.f32.gmra.mxu0 %v626
        %v890 = vpop.f32.mrf.mxu0
        %v891 = vadd.f32 %v826, %v890
        %892 = vmatmul.f32.gmra.mxu0 %v627
        %v893 = vpop.f32.mrf.mxu0
        %v894 = vadd.f32 %v829, %v893
        %895 = vmatmul.f32.gmra.mxu0 %v628
        %v896 = vpop.f32.mrf.mxu0
        %v897 = vadd.f32 %v832, %v896
        %898 = vmatmul.f32.gmra.mxu0 %v629
        %v899 = vpop.f32.mrf.mxu0
        %v900 = vadd.f32 %v835, %v899
        %901 = vmatmul.f32.gmra.mxu0 %v630
        %v902 = vpop.f32.mrf.mxu0
        %v903 = vadd.f32 %v838, %v902
        %904 = vmatmul.f32.gmra.mxu0 %v631
        %v905 = vpop.f32.mrf.mxu0
        %v906 = vadd.f32 %v841, %v905
        %907 = vmatmul.f32.gmra.mxu0 %v632
        %v908 = vpop.f32.mrf.mxu0
        %v909 = vadd.f32 %v844, %v908
        %910 = vmatmul.f32.gmra.mxu0 %v633
        %v911 = vpop.f32.mrf.mxu0
        %v912 = vadd.f32 %v847, %v911
        %913 = vmatmul.f32.gmra.mxu0 %v634
        %v914 = vpop.f32.mrf.mxu0
        %v915 = vadd.f32 %v850, %v914
        %916 = vmatmul.f32.gmra.mxu0 %v635
        %v917 = vpop.f32.mrf.mxu0
        %v918 = vadd.f32 %v853, %v917
        %919 = vmatmul.f32.gmra.mxu0 %v636
        %v920 = vpop.f32.mrf.mxu0
        %v921 = vadd.f32 %v856, %v920
        %922 = vmatmul.f32.gmra.mxu0 %v637
        %v923 = vpop.f32.mrf.mxu0
        %v924 = vadd.f32 %v859, %v923
        %925 = vmatmul.f32.gmra.mxu0 %v638
        %v926 = vpop.f32.mrf.mxu0
        %v927 = vadd.f32 %v862, %v926
        %928 = vmatmul.f32.gmra.mxu0 %v639
        %v929 = vpop.f32.mrf.mxu0
        %v930 = vadd.f32 %v865, %v929
        %931 = vmatmul.f32.gmra.mxu0 %v640
        %v932 = vpop.f32.mrf.mxu0
        %v933 = vadd.f32 %v868, %v932
        %934 = vdwg.mxu0
        %935 = vmatpush.msra.mxu0 %v658
        %936 = vmatpush.msra.mxu0 %v657
        %937 = vmatpush.msra.mxu0 %v656
        %938 = vmatpush.msra.mxu0 %v655
        %939 = vmatpush.msra.mxu0 %v654
        %940 = vmatpush.msra.mxu0 %v653
        %941 = vmatpush.msra.mxu0 %v652
        %942 = vmatpush.msra.mxu0 %v651
        %943 = vmatpush.msra.mxu0 %v650
        %944 = vmatpush.msra.mxu0 %v649
        %945 = vmatpush.msra.mxu0 %v648
        %946 = vmatpush.msra.mxu0 %v647
        %947 = vmatpush.msra.mxu0 %v646
        %948 = vmatpush.msra.mxu0 %v645
        %949 = vmatpush.msra.mxu0 %v644
        %950 = vmatpush.msra.mxu0 %v643
        %951 = vmatmul.f32.gmra.mxu0 %v556
        %v952 = vpop.f32.mrf.mxu0
        %v953 = vadd.f32 %v888, %v952
        %954 = vmatmul.f32.gmra.mxu0 %v557
        %v955 = vpop.f32.mrf.mxu0
        %v956 = vadd.f32 %v891, %v955
        %957 = vmatmul.f32.gmra.mxu0 %v558
        %v958 = vpop.f32.mrf.mxu0
        %v959 = vadd.f32 %v894, %v958
        %960 = vmatmul.f32.gmra.mxu0 %v559
        %v961 = vpop.f32.mrf.mxu0
        %v962 = vadd.f32 %v897, %v961
        %963 = vmatmul.f32.gmra.mxu0 %v560
        %v964 = vpop.f32.mrf.mxu0
        %v965 = vadd.f32 %v900, %v964
        %966 = vmatmul.f32.gmra.mxu0 %v561
        %v967 = vpop.f32.mrf.mxu0
        %v968 = vadd.f32 %v903, %v967
        %969 = vmatmul.f32.gmra.mxu0 %v562
        %v970 = vpop.f32.mrf.mxu0
        %v971 = vadd.f32 %v906, %v970
        %972 = vmatmul.f32.gmra.mxu0 %v563
        %v973 = vpop.f32.mrf.mxu0
        %v974 = vadd.f32 %v909, %v973
        %975 = vmatmul.f32.gmra.mxu0 %v564
        %v976 = vpop.f32.mrf.mxu0
        %v977 = vadd.f32 %v912, %v976
        %978 = vmatmul.f32.gmra.mxu0 %v565
        %v979 = vpop.f32.mrf.mxu0
        %v980 = vadd.f32 %v915, %v979
        %981 = vmatmul.f32.gmra.mxu0 %v566
        %v982 = vpop.f32.mrf.mxu0
        %v983 = vadd.f32 %v918, %v982
        %984 = vmatmul.f32.gmra.mxu0 %v567
        %v985 = vpop.f32.mrf.mxu0
        %v986 = vadd.f32 %v921, %v985
        %987 = vmatmul.f32.gmra.mxu0 %v568
        %v988 = vpop.f32.mrf.mxu0
        %v989 = vadd.f32 %v924, %v988
        %990 = vmatmul.f32.gmra.mxu0 %v569
        %v991 = vpop.f32.mrf.mxu0
        %v992 = vadd.f32 %v927, %v991
        %993 = vmatmul.f32.gmra.mxu0 %v570
        %v994 = vpop.f32.mrf.mxu0
        %v995 = vadd.f32 %v930, %v994
        %996 = vmatmul.f32.gmra.mxu0 %v571
        %v997 = vpop.f32.mrf.mxu0
        %v998 = vadd.f32 %v933, %v997
        %999 = vdwg.mxu0
        %1000 = vmatpush.msra.mxu0 %v674
        %1001 = vmatpush.msra.mxu0 %v673
        %1002 = vmatpush.msra.mxu0 %v672
        %1003 = vmatpush.msra.mxu0 %v671
        %1004 = vmatpush.msra.mxu0 %v670
        %1005 = vmatpush.msra.mxu0 %v669
        %1006 = vmatpush.msra.mxu0 %v668
        %1007 = vmatpush.msra.mxu0 %v667
        %1008 = vmatpush.msra.mxu0 %v666
        %1009 = vmatpush.msra.mxu0 %v665
        %1010 = vmatpush.msra.mxu0 %v664
        %1011 = vmatpush.msra.mxu0 %v663
        %1012 = vmatpush.msra.mxu0 %v662
        %1013 = vmatpush.msra.mxu0 %v661
        %1014 = vmatpush.msra.mxu0 %v660
        %1015 = vmatpush.msra.mxu0 %v659
        %1016 = vmatmul.f32.gmra.mxu0 %v489
        %v1017 = vpop.f32.mrf.mxu0
        %v1018 = vadd.f32 %v953, %v1017
        %1019 = vmatmul.f32.gmra.mxu0 %v490
        %v1020 = vpop.f32.mrf.mxu0
        %v1021 = vadd.f32 %v956, %v1020
        %1022 = vmatmul.f32.gmra.mxu0 %v491
        %v1023 = vpop.f32.mrf.mxu0
        %v1024 = vadd.f32 %v959, %v1023
        %1025 = vmatmul.f32.gmra.mxu0 %v492
        %v1026 = vpop.f32.mrf.mxu0
        %v1027 = vadd.f32 %v962, %v1026
        %1028 = vmatmul.f32.gmra.mxu0 %v493
        %v1029 = vpop.f32.mrf.mxu0
        %v1030 = vadd.f32 %v965, %v1029
        %1031 = vmatmul.f32.gmra.mxu0 %v494
        %v1032 = vpop.f32.mrf.mxu0
        %v1033 = vadd.f32 %v968, %v1032
        %1034 = vmatmul.f32.gmra.mxu0 %v495
        %v1035 = vpop.f32.mrf.mxu0
        %v1036 = vadd.f32 %v971, %v1035
        %1037 = vmatmul.f32.gmra.mxu0 %v496
        %v1038 = vpop.f32.mrf.mxu0
        %v1039 = vadd.f32 %v974, %v1038
        %1040 = vmatmul.f32.gmra.mxu0 %v497
        %v1041 = vpop.f32.mrf.mxu0
        %v1042 = vadd.f32 %v977, %v1041
        %1043 = vmatmul.f32.gmra.mxu0 %v498
        %v1044 = vpop.f32.mrf.mxu0
        %v1045 = vadd.f32 %v980, %v1044
        %1046 = vmatmul.f32.gmra.mxu0 %v499
        %v1047 = vpop.f32.mrf.mxu0
        %v1048 = vadd.f32 %v983, %v1047
        %1049 = vmatmul.f32.gmra.mxu0 %v500
        %v1050 = vpop.f32.mrf.mxu0
        %v1051 = vadd.f32 %v986, %v1050
        %1052 = vmatmul.f32.gmra.mxu0 %v501
        %v1053 = vpop.f32.mrf.mxu0
        %v1054 = vadd.f32 %v989, %v1053
        %1055 = vmatmul.f32.gmra.mxu0 %v502
        %v1056 = vpop.f32.mrf.mxu0
        %v1057 = vadd.f32 %v992, %v1056
        %1058 = vmatmul.f32.gmra.mxu0 %v503
        %v1059 = vpop.f32.mrf.mxu0
        %v1060 = vadd.f32 %v995, %v1059
        %1061 = vmatmul.f32.gmra.mxu0 %v504
        %v1062 = vpop.f32.mrf.mxu0
        %v1063 = vadd.f32 %v998, %v1062
        %1064 = vdwg.mxu0
        %1065 = vmatpush.msra.mxu0 %v690
        %1066 = vmatpush.msra.mxu0 %v689
        %1067 = vmatpush.msra.mxu0 %v688
        %1068 = vmatpush.msra.mxu0 %v687
        %1069 = vmatpush.msra.mxu0 %v686
        %1070 = vmatpush.msra.mxu0 %v685
        %1071 = vmatpush.msra.mxu0 %v684
        %1072 = vmatpush.msra.mxu0 %v683
        %1073 = vmatpush.msra.mxu0 %v682
        %1074 = vmatpush.msra.mxu0 %v681
        %1075 = vmatpush.msra.mxu0 %v680
        %1076 = vmatpush.msra.mxu0 %v679
        %1077 = vmatpush.msra.mxu0 %v678
        %1078 = vmatpush.msra.mxu0 %v677
        %1079 = vmatpush.msra.mxu0 %v676
        %1080 = vmatpush.msra.mxu0 %v675
        %1081 = vmatmul.f32.gmra.mxu0 %v623
        %v1082 = vpop.f32.mrf.mxu0
        %v1083 = vadd.f32 %v1018, %v1082
        %1084 = vmatmul.f32.gmra.mxu0 %v624
        %v1085 = vpop.f32.mrf.mxu0
        %v1086 = vadd.f32 %v1021, %v1085
        %1087 = vmatmul.f32.gmra.mxu0 %v625
        %v1088 = vpop.f32.mrf.mxu0
        %v1089 = vadd.f32 %v1024, %v1088
        %1090 = vmatmul.f32.gmra.mxu0 %v626
        %v1091 = vpop.f32.mrf.mxu0
        %v1092 = vadd.f32 %v1027, %v1091
        %1093 = vmatmul.f32.gmra.mxu0 %v627
        %v1094 = vpop.f32.mrf.mxu0
        %v1095 = vadd.f32 %v1030, %v1094
        %1096 = vmatmul.f32.gmra.mxu0 %v628
        %v1097 = vpop.f32.mrf.mxu0
        %v1098 = vadd.f32 %v1033, %v1097
        %1099 = vmatmul.f32.gmra.mxu0 %v629
        %v1100 = vpop.f32.mrf.mxu0
        %v1101 = vadd.f32 %v1036, %v1100
        %1102 = vmatmul.f32.gmra.mxu0 %v630
        %v1103 = vpop.f32.mrf.mxu0
        %v1104 = vadd.f32 %v1039, %v1103
        %1105 = vmatmul.f32.gmra.mxu0 %v631
        %v1106 = vpop.f32.mrf.mxu0
        %v1107 = vadd.f32 %v1042, %v1106
        %1108 = vmatmul.f32.gmra.mxu0 %v632
        %v1109 = vpop.f32.mrf.mxu0
        %v1110 = vadd.f32 %v1045, %v1109
        %1111 = vmatmul.f32.gmra.mxu0 %v633
        %v1112 = vpop.f32.mrf.mxu0
        %v1113 = vadd.f32 %v1048, %v1112
        %1114 = vmatmul.f32.gmra.mxu0 %v634
        %v1115 = vpop.f32.mrf.mxu0
        %v1116 = vadd.f32 %v1051, %v1115
        %1117 = vmatmul.f32.gmra.mxu0 %v635
        %v1118 = vpop.f32.mrf.mxu0
        %v1119 = vadd.f32 %v1054, %v1118
        %1120 = vmatmul.f32.gmra.mxu0 %v636
        %v1121 = vpop.f32.mrf.mxu0
        %v1122 = vadd.f32 %v1057, %v1121
        %1123 = vmatmul.f32.gmra.mxu0 %v637
        %v1124 = vpop.f32.mrf.mxu0
        %v1125 = vadd.f32 %v1060, %v1124
        %1126 = vmatmul.f32.gmra.mxu0 %v638
        %v1127 = vpop.f32.mrf.mxu0
        %v1128 = vadd.f32 %v1063, %v1127
        %1129 = vdwg.mxu0
        %s1130 = scalar_lea.vmem [#allocation7], 768
        %v1131 = vld [vmem:[%s1130] sm:$0xff]
        %v1132 = vld [vmem:[%s1130 + $0x8] sm:$0xff]
        %v1133 = vld [vmem:[%s1130 + $0x10] sm:$0xff]
        %v1134 = vld [vmem:[%s1130 + $0x18] sm:$0xff]
        %v1135 = vld [vmem:[%s1130 + $0x20] sm:$0xff]
        %v1136 = vld [vmem:[%s1130 + $0x28] sm:$0xff]
        %v1137 = vld [vmem:[%s1130 + $0x30] sm:$0xff]
        %v1138 = vld [vmem:[%s1130 + $0x38] sm:$0xff]
        %v1139 = vld [vmem:[%s1130 + $0x40] sm:$0xff]
        %v1140 = vld [vmem:[%s1130 + $0x48] sm:$0xff]
        %v1141 = vld [vmem:[%s1130 + $0x50] sm:$0xff]
        %v1142 = vld [vmem:[%s1130 + $0x58] sm:$0xff]
        %v1143 = vld [vmem:[%s1130 + $0x60] sm:$0xff]
        %v1144 = vld [vmem:[%s1130 + $0x68] sm:$0xff]
        %v1145 = vld [vmem:[%s1130 + $0x70] sm:$0xff]
        %v1146 = vld [vmem:[%s1130 + $0x78] sm:$0xff]
        %v1147 = vld [vmem:[%s1130 + $0x80] sm:$0xff]
        %v1148 = vld [vmem:[%s1130 + $0x88] sm:$0xff]
        %v1149 = vld [vmem:[%s1130 + $0x90] sm:$0xff]
        %v1150 = vld [vmem:[%s1130 + $0x98] sm:$0xff]
        %v1151 = vld [vmem:[%s1130 + $0xa0] sm:$0xff]
        %v1152 = vld [vmem:[%s1130 + $0xa8] sm:$0xff]
        %v1153 = vld [vmem:[%s1130 + $0xb0] sm:$0xff]
        %v1154 = vld [vmem:[%s1130 + $0xb8] sm:$0xff]
        %v1155 = vld [vmem:[%s1130 + $0xc0] sm:$0xff]
        %v1156 = vld [vmem:[%s1130 + $0xc8] sm:$0xff]
        %v1157 = vld [vmem:[%s1130 + $0xd0] sm:$0xff]
        %v1158 = vld [vmem:[%s1130 + $0xd8] sm:$0xff]
        %v1159 = vld [vmem:[%s1130 + $0xe0] sm:$0xff]
        %v1160 = vld [vmem:[%s1130 + $0xe8] sm:$0xff]
        %v1161 = vld [vmem:[%s1130 + $0xf0] sm:$0xff]
        %v1162 = vld [vmem:[%s1130 + $0xf8] sm:$0xff]
        %v1163 = vld [vmem:[%s1130 + $0x100] sm:$0xff]
        %v1164 = vld [vmem:[%s1130 + $0x108] sm:$0xff]
        %v1165 = vld [vmem:[%s1130 + $0x110] sm:$0xff]
        %v1166 = vld [vmem:[%s1130 + $0x118] sm:$0xff]
        %v1167 = vld [vmem:[%s1130 + $0x120] sm:$0xff]
        %v1168 = vld [vmem:[%s1130 + $0x128] sm:$0xff]
        %v1169 = vld [vmem:[%s1130 + $0x130] sm:$0xff]
        %v1170 = vld [vmem:[%s1130 + $0x138] sm:$0xff]
        %v1171 = vld [vmem:[%s1130 + $0x140] sm:$0xff]
        %v1172 = vld [vmem:[%s1130 + $0x148] sm:$0xff]
        %v1173 = vld [vmem:[%s1130 + $0x150] sm:$0xff]
        %v1174 = vld [vmem:[%s1130 + $0x158] sm:$0xff]
        %v1175 = vld [vmem:[%s1130 + $0x160] sm:$0xff]
        %v1176 = vld [vmem:[%s1130 + $0x168] sm:$0xff]
        %v1177 = vld [vmem:[%s1130 + $0x170] sm:$0xff]
        %v1178 = vld [vmem:[%s1130 + $0x178] sm:$0xff]
        %1179 = vmatpush.msra.mxu0 %v1146
        %1180 = vmatpush.msra.mxu0 %v1145
        %1181 = vmatpush.msra.mxu0 %v1144
        %1182 = vmatpush.msra.mxu0 %v1143
        %1183 = vmatpush.msra.mxu0 %v1142
        %1184 = vmatpush.msra.mxu0 %v1141
        %1185 = vmatpush.msra.mxu0 %v1140
        %1186 = vmatpush.msra.mxu0 %v1139
        %1187 = vmatpush.msra.mxu0 %v1138
        %1188 = vmatpush.msra.mxu0 %v1137
        %1189 = vmatpush.msra.mxu0 %v1136
        %1190 = vmatpush.msra.mxu0 %v1135
        %1191 = vmatpush.msra.mxu0 %v1134
        %1192 = vmatpush.msra.mxu0 %v1133
        %1193 = vmatpush.msra.mxu0 %v1132
        %1194 = vmatpush.msra.mxu0 %v1131
        %1195 = vmatmul.f32.gmra.mxu0 %v560
        %v1196 = vpop.f32.mrf.mxu0
        %v1197 = vadd.f32 0.0, %v1196
        %1198 = vmatmul.f32.gmra.mxu0 %v561
        %v1199 = vpop.f32.mrf.mxu0
        %v1200 = vadd.f32 0.0, %v1199
        %1201 = vmatmul.f32.gmra.mxu0 %v562
        %v1202 = vpop.f32.mrf.mxu0
        %v1203 = vadd.f32 0.0, %v1202
        %1204 = vmatmul.f32.gmra.mxu0 %v563
        %v1205 = vpop.f32.mrf.mxu0
        %v1206 = vadd.f32 0.0, %v1205
        %1207 = vmatmul.f32.gmra.mxu0 %v564
        %v1208 = vpop.f32.mrf.mxu0
        %v1209 = vadd.f32 0.0, %v1208
        %1210 = vmatmul.f32.gmra.mxu0 %v565
        %v1211 = vpop.f32.mrf.mxu0
        %v1212 = vadd.f32 0.0, %v1211
        %1213 = vmatmul.f32.gmra.mxu0 %v566
        %v1214 = vpop.f32.mrf.mxu0
        %v1215 = vadd.f32 0.0, %v1214
        %1216 = vmatmul.f32.gmra.mxu0 %v567
        %v1217 = vpop.f32.mrf.mxu0
        %v1218 = vadd.f32 0.0, %v1217
        %1219 = vmatmul.f32.gmra.mxu0 %v568
        %v1220 = vpop.f32.mrf.mxu0
        %v1221 = vadd.f32 0.0, %v1220
        %1222 = vmatmul.f32.gmra.mxu0 %v569
        %v1223 = vpop.f32.mrf.mxu0
        %v1224 = vadd.f32 0.0, %v1223
        %1225 = vmatmul.f32.gmra.mxu0 %v570
        %v1226 = vpop.f32.mrf.mxu0
        %v1227 = vadd.f32 0.0, %v1226
        %1228 = vmatmul.f32.gmra.mxu0 %v571
        %v1229 = vpop.f32.mrf.mxu0
        %v1230 = vadd.f32 0.0, %v1229
        %1231 = vmatmul.f32.gmra.mxu0 %v572
        %v1232 = vpop.f32.mrf.mxu0
        %v1233 = vadd.f32 0.0, %v1232
        %1234 = vmatmul.f32.gmra.mxu0 %v573
        %v1235 = vpop.f32.mrf.mxu0
        %v1236 = vadd.f32 0.0, %v1235
        %1237 = vmatmul.f32.gmra.mxu0 %v574
        %v1238 = vpop.f32.mrf.mxu0
        %v1239 = vadd.f32 0.0, %v1238
        %1240 = vmatmul.f32.gmra.mxu0 %v575
        %v1241 = vpop.f32.mrf.mxu0
        %v1242 = vadd.f32 0.0, %v1241
        %1243 = vdwg.mxu0
        %1244 = vmatpush.msra.mxu0 %v1162
        %1245 = vmatpush.msra.mxu0 %v1161
        %1246 = vmatpush.msra.mxu0 %v1160
        %1247 = vmatpush.msra.mxu0 %v1159
        %1248 = vmatpush.msra.mxu0 %v1158
        %1249 = vmatpush.msra.mxu0 %v1157
        %1250 = vmatpush.msra.mxu0 %v1156
        %1251 = vmatpush.msra.mxu0 %v1155
        %1252 = vmatpush.msra.mxu0 %v1154
        %1253 = vmatpush.msra.mxu0 %v1153
        %1254 = vmatpush.msra.mxu0 %v1152
        %1255 = vmatpush.msra.mxu0 %v1151
        %1256 = vmatpush.msra.mxu0 %v1150
        %1257 = vmatpush.msra.mxu0 %v1149
        %1258 = vmatpush.msra.mxu0 %v1148
        %1259 = vmatpush.msra.mxu0 %v1147
        %1260 = vmatmul.f32.gmra.mxu0 %v493
        %v1261 = vpop.f32.mrf.mxu0
        %v1262 = vadd.f32 %v1197, %v1261
        %1263 = vmatmul.f32.gmra.mxu0 %v494
        %v1264 = vpop.f32.mrf.mxu0
        %v1265 = vadd.f32 %v1200, %v1264
        %1266 = vmatmul.f32.gmra.mxu0 %v495
        %v1267 = vpop.f32.mrf.mxu0
        %v1268 = vadd.f32 %v1203, %v1267
        %1269 = vmatmul.f32.gmra.mxu0 %v496
        %v1270 = vpop.f32.mrf.mxu0
        %v1271 = vadd.f32 %v1206, %v1270
        %1272 = vmatmul.f32.gmra.mxu0 %v497
        %v1273 = vpop.f32.mrf.mxu0
        %v1274 = vadd.f32 %v1209, %v1273
        %1275 = vmatmul.f32.gmra.mxu0 %v498
        %v1276 = vpop.f32.mrf.mxu0
        %v1277 = vadd.f32 %v1212, %v1276
        %1278 = vmatmul.f32.gmra.mxu0 %v499
        %v1279 = vpop.f32.mrf.mxu0
        %v1280 = vadd.f32 %v1215, %v1279
        %1281 = vmatmul.f32.gmra.mxu0 %v500
        %v1282 = vpop.f32.mrf.mxu0
        %v1283 = vadd.f32 %v1218, %v1282
        %1284 = vmatmul.f32.gmra.mxu0 %v501
        %v1285 = vpop.f32.mrf.mxu0
        %v1286 = vadd.f32 %v1221, %v1285
        %1287 = vmatmul.f32.gmra.mxu0 %v502
        %v1288 = vpop.f32.mrf.mxu0
        %v1289 = vadd.f32 %v1224, %v1288
        %1290 = vmatmul.f32.gmra.mxu0 %v503
        %v1291 = vpop.f32.mrf.mxu0
        %v1292 = vadd.f32 %v1227, %v1291
        %1293 = vmatmul.f32.gmra.mxu0 %v504
        %v1294 = vpop.f32.mrf.mxu0
        %v1295 = vadd.f32 %v1230, %v1294
        %1296 = vmatmul.f32.gmra.mxu0 %v505
        %v1297 = vpop.f32.mrf.mxu0
        %v1298 = vadd.f32 %v1233, %v1297
        %1299 = vmatmul.f32.gmra.mxu0 %v506
        %v1300 = vpop.f32.mrf.mxu0
        %v1301 = vadd.f32 %v1236, %v1300
        %1302 = vmatmul.f32.gmra.mxu0 %v507
        %v1303 = vpop.f32.mrf.mxu0
        %v1304 = vadd.f32 %v1239, %v1303
        %1305 = vmatmul.f32.gmra.mxu0 %v508
        %v1306 = vpop.f32.mrf.mxu0
        %v1307 = vadd.f32 %v1242, %v1306
        %1308 = vdwg.mxu0
        %1309 = vmatpush.msra.mxu0 %v1178
        %1310 = vmatpush.msra.mxu0 %v1177
        %1311 = vmatpush.msra.mxu0 %v1176
        %1312 = vmatpush.msra.mxu0 %v1175
        %1313 = vmatpush.msra.mxu0 %v1174
        %1314 = vmatpush.msra.mxu0 %v1173
        %1315 = vmatpush.msra.mxu0 %v1172
        %1316 = vmatpush.msra.mxu0 %v1171
        %1317 = vmatpush.msra.mxu0 %v1170
        %1318 = vmatpush.msra.mxu0 %v1169
        %1319 = vmatpush.msra.mxu0 %v1168
        %1320 = vmatpush.msra.mxu0 %v1167
        %1321 = vmatpush.msra.mxu0 %v1166
        %1322 = vmatpush.msra.mxu0 %v1165
        %1323 = vmatpush.msra.mxu0 %v1164
        %1324 = vmatpush.msra.mxu0 %v1163
        %1325 = vmatmul.f32.gmra.mxu0 %v627
        %v1326 = vpop.f32.mrf.mxu0
        %v1327 = vadd.f32 %v1262, %v1326
        %1328 = vmatmul.f32.gmra.mxu0 %v628
        %v1329 = vpop.f32.mrf.mxu0
        %v1330 = vadd.f32 %v1265, %v1329
        %1331 = vmatmul.f32.gmra.mxu0 %v629
        %v1332 = vpop.f32.mrf.mxu0
        %v1333 = vadd.f32 %v1268, %v1332
        %1334 = vmatmul.f32.gmra.mxu0 %v630
        %v1335 = vpop.f32.mrf.mxu0
        %v1336 = vadd.f32 %v1271, %v1335
        %1337 = vmatmul.f32.gmra.mxu0 %v631
        %v1338 = vpop.f32.mrf.mxu0
        %v1339 = vadd.f32 %v1274, %v1338
        %1340 = vmatmul.f32.gmra.mxu0 %v632
        %v1341 = vpop.f32.mrf.mxu0
        %v1342 = vadd.f32 %v1277, %v1341
        %1343 = vmatmul.f32.gmra.mxu0 %v633
        %v1344 = vpop.f32.mrf.mxu0
        %v1345 = vadd.f32 %v1280, %v1344
        %1346 = vmatmul.f32.gmra.mxu0 %v634
        %v1347 = vpop.f32.mrf.mxu0
        %v1348 = vadd.f32 %v1283, %v1347
        %1349 = vmatmul.f32.gmra.mxu0 %v635
        %v1350 = vpop.f32.mrf.mxu0
        %v1351 = vadd.f32 %v1286, %v1350
        %1352 = vmatmul.f32.gmra.mxu0 %v636
        %v1353 = vpop.f32.mrf.mxu0
        %v1354 = vadd.f32 %v1289, %v1353
        %1355 = vmatmul.f32.gmra.mxu0 %v637
        %v1356 = vpop.f32.mrf.mxu0
        %v1357 = vadd.f32 %v1292, %v1356
        %1358 = vmatmul.f32.gmra.mxu0 %v638
        %v1359 = vpop.f32.mrf.mxu0
        %v1360 = vadd.f32 %v1295, %v1359
        %1361 = vmatmul.f32.gmra.mxu0 %v639
        %v1362 = vpop.f32.mrf.mxu0
        %v1363 = vadd.f32 %v1298, %v1362
        %1364 = vmatmul.f32.gmra.mxu0 %v640
        %v1365 = vpop.f32.mrf.mxu0
        %v1366 = vadd.f32 %v1301, %v1365
        %1367 = vmatmul.f32.gmra.mxu0 %v641
        %v1368 = vpop.f32.mrf.mxu0
        %v1369 = vadd.f32 %v1304, %v1368
        %1370 = vmatmul.f32.gmra.mxu0 %v642
        %v1371 = vpop.f32.mrf.mxu0
        %v1372 = vadd.f32 %v1307, %v1371
        %1373 = vdwg.mxu0
        %v1374 = vadd.f32 %v1083, %v1327
        %v1375 = vadd.f32 %v1086, %v1330
        %v1376 = vadd.f32 %v1089, %v1333
        %v1377 = vadd.f32 %v1092, %v1336
        %v1378 = vadd.f32 %v1095, %v1339
        %v1379 = vadd.f32 %v1098, %v1342
        %v1380 = vadd.f32 %v1101, %v1345
        %v1381 = vadd.f32 %v1104, %v1348
        %v1382 = vadd.f32 %v1107, %v1351
        %v1383 = vadd.f32 %v1110, %v1354
        %v1384 = vadd.f32 %v1113, %v1357
        %v1385 = vadd.f32 %v1116, %v1360
        %v1386 = vadd.f32 %v1119, %v1363
        %v1387 = vadd.f32 %v1122, %v1366
        %v1388 = vadd.f32 %v1125, %v1369
        %v1389 = vadd.f32 %v1128, %v1372
        %v1390 = vld [vmem:[%s4] sm:$0x1]
        %v1392 = vperm.slane %v1390, 0
        %v1394 = vadd.f32 %v1374, %v1392
        %v1395 = vadd.f32 %v1375, %v1392
        %v1396 = vadd.f32 %v1376, %v1392
        %v1397 = vadd.f32 %v1377, %v1392
        %v1398 = vadd.f32 %v1378, %v1392
        %v1399 = vadd.f32 %v1379, %v1392
        %v1400 = vadd.f32 %v1380, %v1392
        %v1401 = vadd.f32 %v1381, %v1392
        %v1402 = vadd.f32 %v1382, %v1392
        %v1403 = vadd.f32 %v1383, %v1392
        %v1404 = vadd.f32 %v1384, %v1392
        %v1405 = vadd.f32 %v1385, %v1392
        %v1406 = vadd.f32 %v1386, %v1392
        %v1407 = vadd.f32 %v1387, %v1392
        %v1408 = vadd.f32 %v1388, %v1392
        %v1409 = vadd.f32 %v1389, %v1392
        %vm1410 = vcmp.gt.f32.partialorder %v1394, 0.0
        %vm1411 = vcmp.gt.f32.partialorder %v1395, 0.0
        %vm1412 = vcmp.gt.f32.partialorder %v1396, 0.0
        %vm1413 = vcmp.gt.f32.partialorder %v1397, 0.0
        %vm1414 = vcmp.gt.f32.partialorder %v1398, 0.0
        %vm1415 = vcmp.gt.f32.partialorder %v1399, 0.0
        %vm1416 = vcmp.gt.f32.partialorder %v1400, 0.0
        %vm1417 = vcmp.gt.f32.partialorder %v1401, 0.0
        %vm1418 = vcmp.gt.f32.partialorder %v1402, 0.0
        %vm1419 = vcmp.gt.f32.partialorder %v1403, 0.0
        %vm1420 = vcmp.gt.f32.partialorder %v1404, 0.0
        %vm1421 = vcmp.gt.f32.partialorder %v1405, 0.0
        %vm1422 = vcmp.gt.f32.partialorder %v1406, 0.0
        %vm1423 = vcmp.gt.f32.partialorder %v1407, 0.0
        %vm1424 = vcmp.gt.f32.partialorder %v1408, 0.0
        %vm1425 = vcmp.gt.f32.partialorder %v1409, 0.0
        %v1426 = vmul.f32 %v1394, 0.1
        %v1427 = vmul.f32 %v1395, 0.1
        %v1428 = vmul.f32 %v1396, 0.1
        %v1429 = vmul.f32 %v1397, 0.1
        %v1430 = vmul.f32 %v1398, 0.1
        %v1431 = vmul.f32 %v1399, 0.1
        %v1432 = vmul.f32 %v1400, 0.1
        %v1433 = vmul.f32 %v1401, 0.1
        %v1434 = vmul.f32 %v1402, 0.1
        %v1435 = vmul.f32 %v1403, 0.1
        %v1436 = vmul.f32 %v1404, 0.1
        %v1437 = vmul.f32 %v1405, 0.1
        %v1438 = vmul.f32 %v1406, 0.1
        %v1439 = vmul.f32 %v1407, 0.1
        %v1440 = vmul.f32 %v1408, 0.1
        %v1441 = vmul.f32 %v1409, 0.1
        %v1442 = vsel %vm1410, %v1394, %v1426
        %v1443 = vsel %vm1411, %v1395, %v1427
        %v1444 = vsel %vm1412, %v1396, %v1428
        %v1445 = vsel %vm1413, %v1397, %v1429
        %v1446 = vsel %vm1414, %v1398, %v1430
        %v1447 = vsel %vm1415, %v1399, %v1431
        %v1448 = vsel %vm1416, %v1400, %v1432
        %v1449 = vsel %vm1417, %v1401, %v1433
        %v1450 = vsel %vm1418, %v1402, %v1434
        %v1451 = vsel %vm1419, %v1403, %v1435
        %v1452 = vsel %vm1420, %v1404, %v1436
        %v1453 = vsel %vm1421, %v1405, %v1437
        %v1454 = vsel %vm1422, %v1406, %v1438
        %v1455 = vsel %vm1423, %v1407, %v1439
        %v1456 = vsel %vm1424, %v1408, %v1440
        %v1457 = vsel %vm1425, %v1409, %v1441
        %v1458 = vadd.f32 %v1442, %v250
        %v1459 = vadd.f32 %v1443, %v251
        %v1460 = vadd.f32 %v1444, %v252
        %v1461 = vadd.f32 %v1445, %v253
        %v1462 = vadd.f32 %v1446, %v254
        %v1463 = vadd.f32 %v1447, %v255
        %v1464 = vadd.f32 %v1448, %v256
        %v1465 = vadd.f32 %v1449, %v257
        %v1466 = vadd.f32 %v1450, %v258
        %v1467 = vadd.f32 %v1451, %v259
        %v1468 = vadd.f32 %v1452, %v260
        %v1469 = vadd.f32 %v1453, %v261
        %v1470 = vadd.f32 %v1454, %v262
        %v1471 = vadd.f32 %v1455, %v263
        %v1472 = vadd.f32 %v1456, %v264
        %v1473 = vadd.f32 %v1457, %v265
        %1474 = vst [vmem:[%s224] sm:$0xff] %v1458
        %1475 = vst [vmem:[%s224 + $0x8] sm:$0xff] %v1459
        %1476 = vst [vmem:[%s224 + $0x10] sm:$0xff] %v1460
        %1477 = vst [vmem:[%s224 + $0x18] sm:$0xff] %v1461
        %1478 = vst [vmem:[%s224 + $0x20] sm:$0xff] %v1462
        %1479 = vst [vmem:[%s224 + $0x28] sm:$0xff] %v1463
        %1480 = vst [vmem:[%s224 + $0x30] sm:$0xff] %v1464
        %1481 = vst [vmem:[%s224 + $0x38] sm:$0xff] %v1465
        %1482 = vst [vmem:[%s224 + $0x40] sm:$0xff] %v1466
        %1483 = vst [vmem:[%s224 + $0x48] sm:$0xff] %v1467
        %1484 = vst [vmem:[%s224 + $0x50] sm:$0xff] %v1468
        %1485 = vst [vmem:[%s224 + $0x58] sm:$0xff] %v1469
        %1486 = vst [vmem:[%s224 + $0x60] sm:$0xff] %v1470
        %1487 = vst [vmem:[%s224 + $0x68] sm:$0xff] %v1471
        %1488 = vst [vmem:[%s224 + $0x70] sm:$0xff] %v1472
        %1489 = vst [vmem:[%s224 + $0x78] sm:$0xff] %v1473
        %s1490 = sand.u32 %s127, 1
        %s1491 = scalar_lea.sflag [#allocation6], %s1490
        %s1492 = sand.u32 %s127, 1
        %s1493 = smul.addr %s1492, 128
        %s1494 = scalar_lea.vmem [#allocation9], %s1493
        // Predicated region
        $region49: #{tpu_custom_call.1} parent=35 // pred_check
          %p1495 = pneg %p137
        $region50: #{tpu_custom_call.1} parent=35 // pred_check_branch
          %1497 = sbr.rel (%p1495) target = $region52
        $region51: #{tpu_custom_call.1} parent=35 // pred_region
          %s1498 = smul.u32 8, %s26
          %1500 = vsyncadd %s1491, 0
          %s1501 = smul.addr %s1498, 2
          %s1502 = smul.addr %s25, 32
          %s1503 = sadd.s32 %s1501, %s1502
          %s1504 = smul.addr %s1503, 8
          %s1505 = scalar_lea.hbm %s5, %s1504
          %s1506 = sshll.u32 %s1494, 4
          %s1507 = int_to_ptr.vmem [resolvable:$true] %s1506
          %s1508 = sshll.u32 %s1505, 4
          %s1509 = int_to_ptr.hbm [resolvable:$true] %s1508
          %1514 = dma.vmem_to_hbm [thread:$0]  %s1507, 2048, %s1509, %s1491, 128, 128, 8
        $region52: #{tpu_custom_call.1} parent=35 // pred_fallthru
          _
      $region36: #{tpu_custom_call.1} parent=5 // pred_fallthru
        _
      %p1515 = scmp.le.s32.totalorder 2, %s16
      // Predicated region
      $region53: #{tpu_custom_call.1} parent=5 // pred_check
        %p1516 = pneg %p1515
      $region54: #{tpu_custom_call.1} parent=5 // pred_check_branch
        %1518 = sbr.rel (%p1516) target = $region56
      $region55: #{tpu_custom_call.1} parent=5 // pred_region
        %s1519 = ssub.s32 %s16, 2
        // Predicated region
        $region57: #{tpu_custom_call.1} parent=55 // pred_check
          %p1520 = pneg %p143
        $region58: #{tpu_custom_call.1} parent=55 // pred_check_branch
          %1522 = sbr.rel (%p1520) target = $region60
        $region59: #{tpu_custom_call.1} parent=55 // pred_region
          %s1523 = sand.u32 %s128, 1
          %s1524 = scalar_lea.sflag [#allocation6], %s1523
          %s1525 = sand.u32 %s128, 1
          %s1526 = smul.addr %s1525, 128
          %s1527 = scalar_lea.vmem [#allocation9], %s1526
          %1529 = dma.done %s1524, 2048
        $region60: #{tpu_custom_call.1} parent=55 // pred_fallthru
          _
      $region56: #{tpu_custom_call.1} parent=5 // pred_fallthru
        _
    $region6: #{tpu_custom_call.1} parent=1 // loop_footer
      %s20 = sadd.s32 1, %s16
    $region7: #{tpu_custom_call.1} parent=1 // loop_footer_branch
      %15 = sbr.rel target = $region3
    $region8: #{tpu_custom_call.1} parent=1 // loop_exit
      _
    %1530 = vsyncpa [#allocation5], 1
    %s1531 = scalar_lea.sflag [#allocation5], 1
    %1532 = vsyncpa %s1531, 1
    %1533 = vsyncpa [#allocation8], 1
    %1534 = vsyncpa [#allocation6], 1
    %s1535 = scalar_lea.sflag [#allocation6], 1
    %1536 = vsyncpa %s1535, 1
  %1537 = vsyncmov [#allocation3]
  %s1538 = vpop.sfrf %1537
  %p1539 = scmp.eq.s32.totalorder %s1538, 0
  %p1540 = pneg %p1539
  %1542 = shalt.err (%p1540)

</llo_original>
